<compile_context>
chip_gen: v6e
topology: v6e:2x2x1
jax: 0.10.0
libtpu: 0.0.40
codegen_flags: <defaults>
</compile_context>

<pallas_src>
import functools
import math

import jax
import jax.numpy as jnp
import numpy as np
from jax import lax
from jax.experimental import pallas as pl
from jax.experimental.pallas import tpu as pltpu

_LANE = 128
_SUBLANE = 8
_SQRT2_INV = 1.0 / math.sqrt(2.0)


def _vmem_limit_bytes():
    try:
        kind = jax.devices()[0].device_kind.lower()
    except Exception:
        return 32 * 1024 * 1024
    if "v5" in kind or "v6" in kind:
        return 64 * 1024 * 1024   # 128 MiB physical VMEM: room for 512-wide tiles
    return 48 * 1024 * 1024       # v7x (64 MiB physical) and anything unknown


_VMEM_LIMIT = _vmem_limit_bytes()


def _pick_tile(dim, pref, align):
    """Largest multiple of `align` dividing `dim` that is <= pref, else full dim."""
    if dim <= pref:
        return dim
    t = (pref // align) * align
    while t >= align:
        if dim % t == 0:
            return t
        t -= align
    return dim


# ----------------------------- Pallas kernels -------------------------------

def _matmul_k1_kernel(*refs, has_bias, has_residual):
    # Single-K-step matmul: write jnp.dot straight to the output tile.
    x_ref, wt_ref = refs[0], refs[1]
    i = 2
    b_ref = refs[i] if has_bias else None
    i += int(has_bias)
    r_ref = refs[i] if has_residual else None
    i += int(has_residual)
    o_ref = refs[i]

    out = jnp.dot(x_ref[...].astype(jnp.bfloat16), wt_ref[...],
                  preferred_element_type=jnp.float32)
    if has_bias:
        out = out + b_ref[...]
    if has_residual:
        out = out + r_ref[...]
    o_ref[...] = out.astype(o_ref.dtype)


def _matmul_kacc_kernel(*refs, has_bias, has_residual):
    # K-tiled matmul with f32 VMEM accumulator (used only when K > tk).
    x_ref, wt_ref = refs[0], refs[1]
    i = 2
    b_ref = refs[i] if has_bias else None
    i += int(has_bias)
    r_ref = refs[i] if has_residual else None
    i += int(has_residual)
    o_ref, acc_ref = refs[i], refs[i + 1]

    k = pl.program_id(2)

    @pl.when(k == 0)
    def _():
        acc_ref[...] = jnp.zeros_like(acc_ref)

    acc_ref[...] += jnp.dot(x_ref[...].astype(jnp.bfloat16), wt_ref[...],
                            preferred_element_type=jnp.float32)

    @pl.when(k == pl.num_programs(2) - 1)
    def _():
        out = acc_ref[...]
        if has_bias:
            out = out + b_ref[...]
        if has_residual:
            out = out + r_ref[...]
        o_ref[...] = out.astype(o_ref.dtype)


def _ln_matmul_kernel(x_ref, g_ref, b_ref, wt_ref, *rest, has_bias, act, eps):
    # Fused LayerNorm (computed once per row tile into bf16 scratch) -> matmul
    # (bf16 MXU, f32 accumulation) -> bias -> optional exact-erf GELU epilogue.
    if has_bias:
        bias_ref, o_ref, y_scratch = rest
    else:
        o_ref, y_scratch = rest

    @pl.when(pl.program_id(1) == 0)          # x block resident across all j tiles
    def _():
        x = x_ref[...].astype(jnp.float32)   # (tm, K)
        mean = jnp.mean(x, axis=-1, keepdims=True)
        var = jnp.mean((x - mean) ** 2, axis=-1, keepdims=True)
        y = (x - mean) * lax.rsqrt(var + eps) * g_ref[...] + b_ref[...]
        y_scratch[...] = y.astype(jnp.bfloat16)

    out = jnp.dot(y_scratch[...], wt_ref[...], preferred_element_type=jnp.float32)
    if has_bias:
        out = out + bias_ref[...]
    if act == "gelu":                        # exact (erf) GELU == nn.GELU() default
        out = 0.5 * out * (1.0 + lax.erf(out * _SQRT2_INV))
    o_ref[...] = out.astype(o_ref.dtype)


def _one_head_sdpa(q, k, v, causal):
    # q (Tq, Dh), k/v (Tk, Dh) bf16 (1/sqrt(Dh) already folded into q weights).
    s = lax.dot_general(q, k, (((1,), (1,)), ((), ())),
                        preferred_element_type=jnp.float32)      # (Tq, Tk) f32
    if causal:
        row = lax.broadcasted_iota(jnp.int32, s.shape, 0)
        col = lax.broadcasted_iota(jnp.int32, s.shape, 1)
        s = jnp.where(col <= row, s, -jnp.inf)
    s = s - jnp.max(s, axis=-1, keepdims=True)
    p = jnp.exp(s)
    o = jnp.dot(p.astype(v.dtype), v, preferred_element_type=jnp.float32)
    # Normalize AFTER PV: (Tq, Dh) multiplies instead of (Tq, Tk).
    return o * pl.reciprocal(jnp.sum(p, axis=-1, keepdims=True), approx=True)


def _self_attn_kernel(qkv_ref, o_ref, *, n_head, causal):
    # One batch element per grid step; all heads processed here so the output
    # block is lane-dense (T, D).
    d = o_ref.shape[-1]
    dh = d // n_head
    qkv = qkv_ref[...]                       # (T, 3D) bf16
    for h in range(n_head):
        q = qkv[:, h * dh:(h + 1) * dh]
        k = qkv[:, d + h * dh:d + (h + 1) * dh]
        v = qkv[:, 2 * d + h * dh:2 * d + (h + 1) * dh]
        o = _one_head_sdpa(q, k, v, causal)
        o_ref[:, h * dh:(h + 1) * dh] = o.astype(o_ref.dtype)


def _cross_attn_kernel(q_ref, kv_ref, o_ref, *, n_head):
    d = o_ref.shape[-1]
    dh = d // n_head
    q_all = q_ref[...]                       # (Tq, D)  bf16
    kv = kv_ref[...]                         # (Ta, 2D) bf16
    for h in range(n_head):
        q = q_all[:, h * dh:(h + 1) * dh]
        k = kv[:, h * dh:(h + 1) * dh]
        v = kv[:, d + h * dh:d + (h + 1) * dh]
        o = _one_head_sdpa(q, k, v, causal=False)
        o_ref[:, h * dh:(h + 1) * dh] = o.astype(o_ref.dtype)


# ------------------------------ kernel wrappers ------------------------------

def matmul(x2d, wt, bias=None, residual=None, *, out_dtype=jnp.float32,
           tm=256, tn=256, tk=512):
    """out = x2d @ wt (+ bias) (+ residual); x2d (M,K), wt (K,N) bf16."""
    m, kdim = x2d.shape
    n = wt.shape[1]
    tm = _pick_tile(m, tm, _SUBLANE)
    tn = _pick_tile(n, tn, _LANE)
    tk = _pick_tile(kdim, tk, _LANE)

    bias2d = None if bias is None else bias.reshape(1, n)

    if kdim <= tk:
        # Single K step: no accumulator scratch, no pl.when machinery.
        in_specs = [pl.BlockSpec((tm, kdim), lambda i, j: (i, 0)),
                    pl.BlockSpec((kdim, tn), lambda i, j: (0, j))]
        args = [x2d, wt]
        if bias is not None:
            in_specs.append(pl.BlockSpec((1, tn), lambda i, j: (0, j)))
            args.append(bias2d)
        if residual is not None:
            in_specs.append(pl.BlockSpec((tm, tn), lambda i, j: (i, j)))
            args.append(residual)
        kernel = functools.partial(_matmul_k1_kernel, has_bias=bias is not None,
                                   has_residual=residual is not None)
        return pl.pallas_call(
            kernel,
            out_shape=jax.ShapeDtypeStruct((m, n), out_dtype),
            grid=(m // tm, n // tn),
            in_specs=in_specs,
            out_specs=pl.BlockSpec((tm, tn), lambda i, j: (i, j)),
            compiler_params=pltpu.CompilerParams(
                dimension_semantics=("parallel", "parallel"),
                vmem_limit_bytes=_VMEM_LIMIT),
        )(*args)

    in_specs = [pl.BlockSpec((tm, tk), lambda i, j, k: (i, k)),
                pl.BlockSpec((tk, tn), lambda i, j, k: (k, j))]
    args = [x2d, wt]
    if bias is not None:
        in_specs.append(pl.BlockSpec((1, tn), lambda i, j, k: (0, j)))
        args.append(bias2d)
    if residual is not None:
        in_specs.append(pl.BlockSpec((tm, tn), lambda i, j, k: (i, j)))
        args.append(residual)
    kernel = functools.partial(_matmul_kacc_kernel, has_bias=bias is not None,
                               has_residual=residual is not None)
    return pl.pallas_call(
        kernel,
        out_shape=jax.ShapeDtypeStruct((m, n), out_dtype),
        grid=(m // tm, n // tn, kdim // tk),
        in_specs=in_specs,
        out_specs=pl.BlockSpec((tm, tn), lambda i, j, k: (i, j)),
        scratch_shapes=[pltpu.VMEM((tm, tn), jnp.float32)],
        compiler_params=pltpu.CompilerParams(
            dimension_semantics=("parallel", "parallel", "arbitrary"),
            vmem_limit_bytes=_VMEM_LIMIT),
    )(*args)


def ln_matmul(x2d, gamma, beta, wt, bias=None, act=None, eps=1e-5,
              *, out_dtype=jnp.float32, tm=256, tn=512):
    """out = (LayerNorm(x2d) @ wt (+ bias)) with optional GELU epilogue.
    K is kept whole per row tile (LN needs the full row); N is tiled; the
    normalized row tile is cached in bf16 scratch and reused across N tiles."""
    m, kdim = x2d.shape
    n = wt.shape[1]
    tm = _pick_tile(m, tm, _SUBLANE)
    tn = _pick_tile(n, tn, _LANE)

    in_specs = [pl.BlockSpec((tm, kdim), lambda i, j: (i, 0)),
                pl.BlockSpec((1, kdim), lambda i, j: (0, 0)),
                pl.BlockSpec((1, kdim), lambda i, j: (0, 0)),
                pl.BlockSpec((kdim, tn), lambda i, j: (0, j))]
    args = [x2d, gamma.reshape(1, kdim), beta.reshape(1, kdim), wt]
    if bias is not None:
        in_specs.append(pl.BlockSpec((1, tn), lambda i, j: (0, j)))
        args.append(bias.reshape(1, n))

    kernel = functools.partial(_ln_matmul_kernel, has_bias=bias is not None,
                               act=act, eps=eps)
    return pl.pallas_call(
        kernel,
        out_shape=jax.ShapeDtypeStruct((m, n), out_dtype),
        grid=(m // tm, n // tn),
        in_specs=in_specs,
        out_specs=pl.BlockSpec((tm, tn), lambda i, j: (i, j)),
        scratch_shapes=[pltpu.VMEM((tm, kdim), jnp.bfloat16)],
        compiler_params=pltpu.CompilerParams(
            # j (N tiles) must stay sequential per row tile: the LN scratch is
            # filled at j == 0 and reused for j > 0.
            dimension_semantics=("parallel", "arbitrary"),
            vmem_limit_bytes=_VMEM_LIMIT),
    )(*args)


def self_attention(qkv2d, b, t, n_head, causal):
    """qkv2d (B*T, 3D) bf16 -> attention output (B*T, D) bf16; grid over batch."""
    d = qkv2d.shape[-1] // 3
    return pl.pallas_call(
        functools.partial(_self_attn_kernel, n_head=n_head, causal=causal),
        out_shape=jax.ShapeDtypeStruct((b * t, d), jnp.bfloat16),
        grid=(b,),
        in_specs=[pl.BlockSpec((t, 3 * d), lambda i: (i, 0))],
        out_specs=pl.BlockSpec((t, d), lambda i: (i, 0)),
        compiler_params=pltpu.CompilerParams(
            dimension_semantics=("parallel",),
            vmem_limit_bytes=_VMEM_LIMIT),
    )(qkv2d)


def cross_attention(q2d, kv2d, b, tq, tkv, n_head):
    """q2d (B*Tq, D), kv2d (B*Ta, 2D) bf16 -> (B*Tq, D) bf16; grid over batch."""
    d = q2d.shape[-1]
    return pl.pallas_call(
        functools.partial(_cross_attn_kernel, n_head=n_head),
        out_shape=jax.ShapeDtypeStruct((b * tq, d), jnp.bfloat16),
        grid=(b,),
        in_specs=[pl.BlockSpec((tq, d), lambda i: (i, 0)),
                  pl.BlockSpec((tkv, 2 * d), lambda i: (i, 0))],
        out_specs=pl.BlockSpec((tq, d), lambda i: (i, 0)),
        compiler_params=pltpu.CompilerParams(
            dimension_semantics=("parallel",),
            vmem_limit_bytes=_VMEM_LIMIT),
    )(q2d, kv2d)


# ------------------------------- model glue ---------------------------------

def residual_block(x2d, b, t, xa2d, bxa, txa, p, n_head):
    # Self-attention: fused LN + QKV (bf16 out); lane-dense SDPA; WO+bias+residual.
    qkv = ln_matmul(x2d, p["attn_ln_g"], p["attn_ln_b"],
                    p["attn"]["wqkv_t"], p["attn"]["bqkv"],
                    out_dtype=jnp.bfloat16)
    a = self_attention(qkv, b, t, n_head, causal=(t > 1))
    x2d = matmul(a, p["attn"]["wo_t"], p["attn"]["bo"], residual=x2d)

    # Cross-attention: fused LN + Q; fused K|V from xa; SDPA; WO+bias+residual.
    q = ln_matmul(x2d, p["cross_ln_g"], p["cross_ln_b"],
                  p["cross"]["wq_t"], p["cross"]["bq"], out_dtype=jnp.bfloat16)
    kv = matmul(xa2d, p["cross"]["wkv_t"], p["cross"]["bkv"],
                out_dtype=jnp.bfloat16)
    a = cross_attention(q, kv, b, t, txa, n_head)
    x2d = matmul(a, p["cross"]["wo_t"], p["cross"]["bo"], residual=x2d)

    # MLP: fused LN + W1 + bias + GELU (bf16 hidden), then W2 + bias + residual.
    h = ln_matmul(x2d, p["mlp_ln_g"], p["mlp_ln_b"], p["w1_t"], p["b1"],
                  act="gelu", out_dtype=jnp.bfloat16)
    return matmul(h, p["w2_t"], p["b2"], residual=x2d)


def text_decoder_forward(tokens, xa, params, n_head, n_vocab):
    emb = params["token_embedding"]                      # (V, D) f32 (gather)
    b, t = tokens.shape
    d = emb.shape[1]
    bxa, txa, _ = xa.shape
    # Token-embedding gather + positional add kept in plain JAX (glue).
    x = emb[tokens] + params["positional_embedding"][:t]  # offset = 0 (no kv_cache)
    x = x.astype(xa.dtype)
    x2d = x.reshape(b * t, d)
    xa2d = xa.reshape(bxa * txa, d)
    for p in params["blocks"]:
        x2d = residual_block(x2d, b, t, xa2d, bxa, txa, p, n_head)
    # Final LayerNorm fused into the vocab-tiled logit projection (no bias);
    # emb_t is lane-padded, pad columns sliced off here.
    logits = ln_matmul(x2d, params["ln_g"], params["ln_b"], params["emb_t"], None)
    logits = logits[:, :n_vocab]
    return logits.reshape(b, t, n_vocab).astype(jnp.float32)


# ------------------------------- parameters ---------------------------------

def init_params(key, n_vocab, n_ctx, n_state, n_head, n_layer):
    keys = iter(jax.random.split(key, 16 + n_layer * 32))

    def nrm(shape, std=0.02):
        return (std * jax.random.normal(next(keys), shape)).astype(jnp.float32)

    def attn_params():
        return {
            "wq": nrm((n_state, n_state)), "bq": nrm((n_state,)),
            "wk": nrm((n_state, n_state)),
            "wv": nrm((n_state, n_state)), "bv": nrm((n_state,)),
            "wo": nrm((n_state, n_state)), "bo": nrm((n_state,)),
        }

    n_mlp = 4 * n_state
    params = {
        "token_embedding": nrm((n_vocab, n_state)),
        "positional_embedding": nrm((n_ctx, n_state)),
        "ln_g": jnp.ones((n_state,), jnp.float32),
        "ln_b": jnp.zeros((n_state,), jnp.float32),
        "blocks": [],
    }
    for _ in range(n_layer):
        params["blocks"].append({
            "attn_ln_g": jnp.ones((n_state,), jnp.float32),
            "attn_ln_b": jnp.zeros((n_state,), jnp.float32),
            "attn": attn_params(),
            "cross_ln_g": jnp.ones((n_state,), jnp.float32),
            "cross_ln_b": jnp.zeros((n_state,), jnp.float32),
            "mlp_ln_g": jnp.ones((n_state,), jnp.float32),
            "mlp_ln_b": jnp.zeros((n_state,), jnp.float32),
            "cross": attn_params(),
            "w1": nrm((n_mlp, n_state)), "b1": nrm((n_mlp,)),
            "w2": nrm((n_state, n_mlp)), "b2": nrm((n_state,)),
        })
    return params


def prepare_params(params, n_head):
    """One-time prep for the Pallas path: fuse QKV / KV weights, fold the
    1/sqrt(Dh) attention scale into the Q projection, pre-transpose all matmul
    weights to (K, N) bf16, and lane-pad the vocab projection."""
    n_state = params["token_embedding"].shape[1]
    dh = n_state // n_head
    scale = 1.0 / math.sqrt(dh)

    def t_bf16(w):                     # (out, in) -> (in, out) bf16
        return jnp.asarray(w.T, dtype=jnp.bfloat16)

    def prep_attn(a, fuse_qkv):
        wq = a["wq"] * scale           # fold 1/sqrt(Dh) into the Q projection
        bq = a["bq"] * scale
        out = {"wo_t": t_bf16(a["wo"]), "bo": a["bo"]}
        if fuse_qkv:
            wqkv = jnp.concatenate([wq, a["wk"], a["wv"]], axis=0)
            bqkv = jnp.concatenate([bq, jnp.zeros_like(bq), a["bv"]])
            out.update(wqkv_t=t_bf16(wqkv), bqkv=bqkv)
        else:
            wkv = jnp.concatenate([a["wk"], a["wv"]], axis=0)
            bkv = jnp.concatenate([jnp.zeros_like(a["bv"]), a["bv"]])
            out.update(wq_t=t_bf16(wq), bq=bq,
                       wkv_t=t_bf16(wkv), bkv=bkv)
        return out

    blocks = []
    for bp in params["blocks"]:
        blocks.append({
            "attn_ln_g": bp["attn_ln_g"], "attn_ln_b": bp["attn_ln_b"],
            "attn": prep_attn(bp["attn"], True),
            "cross_ln_g": bp["cross_ln_g"], "cross_ln_b": bp["cross_ln_b"],
            "cross": prep_attn(bp["cross"], False),
            "mlp_ln_g": bp["mlp_ln_g"], "mlp_ln_b": bp["mlp_ln_b"],
            "w1_t": t_bf16(bp["w1"]), "b1": bp["b1"],
            "w2_t": t_bf16(bp["w2"]), "b2": bp["b2"],
        })

    # Vocab projection (D, V) padded with zero columns to a multiple of 128 so
    # the logit kernel always gets lane-aligned N tiles (never the full vocab).
    n_vocab = params["token_embedding"].shape[0]
    v_pad = ((n_vocab + _LANE - 1) // _LANE) * _LANE
    emb_t = params["token_embedding"].T
    if v_pad != n_vocab:
        emb_t = jnp.pad(emb_t, ((0, 0), (0, v_pad - n_vocab)))

    return {
        "token_embedding": params["token_embedding"],
        "positional_embedding": params["positional_embedding"],
        "ln_g": params["ln_g"], "ln_b": params["ln_b"],
        "emb_t": jnp.asarray(emb_t, dtype=jnp.bfloat16),
        "blocks": blocks,
    }


# --------------------------- pure-JAX reference ------------------------------

def _ref_forward(tokens, xa, params, n_head):
    def ln(x, g, b, eps=1e-5):
        m = x.mean(-1, keepdims=True)
        v = ((x - m) ** 2).mean(-1, keepdims=True)
        return (x - m) / jnp.sqrt(v + eps) * g + b

    def lin(x, w, b=None):
        y = x @ w.T
        return y + b if b is not None else y

    def sdpa(q, k, v, causal):
        scale = 1.0 / math.sqrt(q.shape[-1])
        s = jnp.einsum("bhqd,bhkd->bhqk", q, k) * scale
        if causal:
            tq, tk = s.shape[-2:]
            s = jnp.where(jnp.tril(jnp.ones((tq, tk), bool)), s, -jnp.inf)
        return jnp.einsum("bhqk,bhkd->bhqd", jax.nn.softmax(s, axis=-1), v)

    def mha_ref(x, p, src, causal):
        b, t, d = x.shape
        q, k, v = lin(x, p["wq"], p["bq"]), lin(src, p["wk"]), lin(src, p["wv"], p["bv"])

        def sp(z):
            return z.reshape(z.shape[0], z.shape[1], n_head, -1).transpose(0, 2, 1, 3)

        a = sdpa(sp(q), sp(k), sp(v), causal).transpose(0, 2, 1, 3).reshape(b, t, d)
        return lin(a, p["wo"], p["bo"])

    emb = params["token_embedding"]
    b, t = tokens.shape
    x = (emb[tokens] + params["positional_embedding"][:t]).astype(xa.dtype)
    for p in params["blocks"]:
        y = ln(x, p["attn_ln_g"], p["attn_ln_b"])
        x = x + mha_ref(y, p["attn"], y, t > 1)
        y = ln(x, p["cross_ln_g"], p["cross_ln_b"])
        x = x + mha_ref(y, p["cross"], xa, False)
        y = ln(x, p["mlp_ln_g"], p["mlp_ln_b"])
        h = jax.nn.gelu(lin(y, p["w1"], p["b1"]), approximate=False)
        x = x + lin(h, p["w2"], p["b2"])
    x = ln(x, params["ln_g"], params["ln_b"])
    return (x @ emb.T).astype(jnp.float32)


# ----------------------------------- main ------------------------------------

if __name__ == "__main__":
    n_vocab, n_ctx, n_state, n_head, n_layer = 64, 16, 32, 4, 2
    B, T, T_audio = 2, 8, 16

    key = jax.random.PRNGKey(0)
    kp, kt, ka = jax.random.split(key, 3)
    params = init_params(kp, n_vocab, n_ctx, n_state, n_head, n_layer)
    prep = prepare_params(params, n_head)
    tokens = jax.random.randint(kt, (B, T), 0, n_vocab, dtype=jnp.int32)
    xa = jax.random.normal(ka, (B, T_audio, n_state), dtype=jnp.float32)

    fwd = jax.jit(functools.partial(text_decoder_forward,
                                    n_head=n_head, n_vocab=n_vocab))
    logits = jax.block_until_ready(fwd(tokens, xa, prep))

    assert logits.shape == (B, T, n_vocab) and logits.dtype == jnp.float32
    ref = _ref_forward(tokens, xa, params, n_head)
    # bf16 MXU inputs + bf16 intermediates (f32 accumulation / residual stream)
    # -> loosened tolerance vs the f32 reference.
    np.testing.assert_allclose(np.asarray(logits), np.asarray(ref),
                               rtol=2e-2, atol=2e-2)
    print("KERNEL_OK")
</pallas_src>

<mosaic_0001>
module attributes {stable_mosaic.version = 11 : i64} {
  func.func @_matmul_k1_kernel(%arg0: i32, %arg1: i32, %arg2: memref<16x32xbf16, #tpu.memory_space<vmem>>, %arg3: memref<32x32xbf16, #tpu.memory_space<vmem>>, %arg4: memref<1x32xf32, #tpu.memory_space<vmem>>, %arg5: memref<16x32xf32, #tpu.memory_space<vmem>>, %arg6: memref<16x32xf32, #tpu.memory_space<vmem>>) attributes {dimension_semantics = [#tpu.dimension_semantics<parallel>, #tpu.dimension_semantics<parallel>], iteration_bounds = array<i64: 1, 1>, scalar_prefetch = 0 : i64, scratch_operands = 0 : i64, tpu.core_type = #tpu.core_type<tc>, window_params = [{transform_indices = @transform_0, window_bounds = array<i64: 16, 32>}, {transform_indices = @transform_1, window_bounds = array<i64: 32, 32>}, {transform_indices = @transform_2, window_bounds = array<i64: 1, 32>}, {transform_indices = @transform_3, window_bounds = array<i64: 16, 32>}, {transform_indices = @transform_4, window_bounds = array<i64: 16, 32>}]} {
    %c0 = arith.constant 0 : index
    %c0_0 = arith.constant 0 : index
    %0 = vector.load %arg2[%c0, %c0_0] : memref<16x32xbf16, #tpu.memory_space<vmem>>, vector<16x32xbf16>
    %c0_1 = arith.constant 0 : index
    %c0_2 = arith.constant 0 : index
    %1 = vector.load %arg3[%c0_1, %c0_2] : memref<32x32xbf16, #tpu.memory_space<vmem>>, vector<32x32xbf16>
    %cst = arith.constant dense<0.000000e+00> : vector<16x32xf32>
    %2 = tpu.matmul %0, %1, %cst {dimension_numbers = #tpu.dot_dimension_numbers<[1], [0], [0], [1], [0, 0, 1, 1], [], []>} : vector<16x32xbf16>, vector<32x32xbf16>, vector<16x32xf32> -> vector<16x32xf32>
    %c0_3 = arith.constant 0 : index
    %c0_4 = arith.constant 0 : index
    %3 = vector.load %arg4[%c0_3, %c0_4] : memref<1x32xf32, #tpu.memory_space<vmem>>, vector<1x32xf32>
    %4 = vector.broadcast %3 : vector<1x32xf32> to vector<16x32xf32>
    %5 = arith.addf %2, %4 : vector<16x32xf32>
    %c0_5 = arith.constant 0 : index
    %c0_6 = arith.constant 0 : index
    %6 = vector.load %arg5[%c0_5, %c0_6] : memref<16x32xf32, #tpu.memory_space<vmem>>, vector<16x32xf32>
    %7 = arith.addf %5, %6 : vector<16x32xf32>
    %c0_7 = arith.constant 0 : index
    %c0_8 = arith.constant 0 : index
    %8 = vector.load %arg6[%c0_7, %c0_8] : memref<16x32xf32, #tpu.memory_space<vmem>>, vector<16x32xf32>
    tpu.vector_store %arg6[%c0_7, %c0_8], %7 {strides = array<i32>} : memref<16x32xf32, #tpu.memory_space<vmem>>, vector<16x32xf32>,
    return
  }
  func.func @transform_0(%arg0: i32, %arg1: i32) -> (i32, i32) {
    %c0_i32 = arith.constant 0 : i32
    %c0_i32_0 = arith.constant 0 : i32
    return %arg0, %c0_i32 : i32, i32
  }
  func.func @transform_1(%arg0: i32, %arg1: i32) -> (i32, i32) {
    %c0_i32 = arith.constant 0 : i32
    %c0_i32_0 = arith.constant 0 : i32
    return %c0_i32, %arg1 : i32, i32
  }
  func.func @transform_2(%arg0: i32, %arg1: i32) -> (i32, i32) {
    %c0_i32 = arith.constant 0 : i32
    %c0_i32_0 = arith.constant 0 : i32
    return %c0_i32, %arg1 : i32, i32
  }
  func.func @transform_3(%arg0: i32, %arg1: i32) -> (i32, i32) {
    %c0_i32 = arith.constant 0 : i32
    return %arg0, %arg1 : i32, i32
  }
  func.func @transform_4(%arg0: i32, %arg1: i32) -> (i32, i32) {
    %c0_i32 = arith.constant 0 : i32
    return %arg0, %arg1 : i32, i32
  }
}

module attributes {stable_mosaic.version = 11 : i64} {
  func.func @_ln_matmul_kernel(%arg0: i32, %arg1: i32, %arg2: memref<16x32xf32, #tpu.memory_space<vmem>>, %arg3: memref<1x32xf32, #tpu.memory_space<vmem>>, %arg4: memref<1x32xf32, #tpu.memory_space<vmem>>, %arg5: memref<32x96xbf16, #tpu.memory_space<vmem>>, %arg6: memref<1x96xf32, #tpu.memory_space<vmem>>, %arg7: memref<16x96xbf16, #tpu.memory_space<vmem>>, %arg8: memref<16x32xbf16, #tpu.memory_space<vmem>>) attributes {dimension_semantics = [#tpu.dimension_semantics<parallel>, #tpu.dimension_semantics<arbitrary>], iteration_bounds = array<i64: 1, 1>, scalar_prefetch = 0 : i64, scratch_operands = 1 : i64, tpu.core_type = #tpu.core_type<tc>, window_params = [{transform_indices = @transform_0, window_bounds = array<i64: 16, 32>}, {pipeline_mode = #tpu.pipeline_mode<synchronous>, transform_indices = @transform_1, window_bounds = array<i64: 1, 32>}, {pipeline_mode = #tpu.pipeline_mode<synchronous>, transform_indices = @transform_2, window_bounds = array<i64: 1, 32>}, {transform_indices = @transform_3, window_bounds = array<i64: 32, 96>}, {transform_indices = @transform_4, window_bounds = array<i64: 1, 96>}, {transform_indices = @transform_5, window_bounds = array<i64: 16, 96>}]} {
    %c0_i32 = arith.constant 0 : i32
    %0 = arith.cmpi eq, %arg1, %c0_i32 : i32
    %1 = arith.extui %0 : i1 to i32
    %c0_i32_0 = arith.constant 0 : i32
    %2 = arith.cmpi ne, %1, %c0_i32_0 : i32
    scf.if %2 {
      %c0_8 = arith.constant 0 : index
      %c0_9 = arith.constant 0 : index
      %11 = vector.load %arg2[%c0_8, %c0_9] : memref<16x32xf32, #tpu.memory_space<vmem>>, vector<16x32xf32>
      %cst_10 = arith.constant dense<0.000000e+00> : vector<16xf32>
      %12 = vector.multi_reduction <add>, %11, %cst_10 [1] : vector<16x32xf32> to vector<16xf32>
      %13 = vector.shape_cast %12 : vector<16xf32> to vector<16x1xf32>
      %cst_11 = arith.constant 3.200000e+01 : f32
      %14 = vector.broadcast %cst_11 : f32 to vector<16x1xf32>
      %15 = arith.divf %13, %14 : vector<16x1xf32>
      %16 = vector.broadcast %15 : vector<16x1xf32> to vector<16x32xf32>
      %17 = arith.subf %11, %16 : vector<16x32xf32>
      %18 = arith.mulf %17, %17 : vector<16x32xf32>
      %cst_12 = arith.constant dense<0.000000e+00> : vector<16xf32>
      %19 = vector.multi_reduction <add>, %18, %cst_12 [1] : vector<16x32xf32> to vector<16xf32>
      %20 = vector.shape_cast %19 : vector<16xf32> to vector<16x1xf32>
      %cst_13 = arith.constant 3.200000e+01 : f32
      %21 = vector.broadcast %cst_13 : f32 to vector<16x1xf32>
      %22 = arith.divf %20, %21 : vector<16x1xf32>
      %23 = vector.broadcast %15 : vector<16x1xf32> to vector<16x32xf32>
      %24 = arith.subf %11, %23 : vector<16x32xf32>
      %cst_14 = arith.constant 9.99999974E-6 : f32
      %25 = vector.broadcast %cst_14 : f32 to vector<16x1xf32>
      %26 = arith.addf %22, %25 : vector<16x1xf32>
      %27 = math.rsqrt %26 : vector<16x1xf32>
      %28 = vector.broadcast %27 : vector<16x1xf32> to vector<16x32xf32>
      %29 = arith.mulf %24, %28 : vector<16x32xf32>
      %c0_15 = arith.constant 0 : index
      %c0_16 = arith.constant 0 : index
      %30 = vector.load %arg3[%c0_15, %c0_16] : memref<1x32xf32, #tpu.memory_space<vmem>>, vector<1x32xf32>
      %31 = vector.broadcast %30 : vector<1x32xf32> to vector<16x32xf32>
      %32 = arith.mulf %29, %31 : vector<16x32xf32>
      %c0_17 = arith.constant 0 : index
      %c0_18 = arith.constant 0 : index
      %33 = vector.load %arg4[%c0_17, %c0_18] : memref<1x32xf32, #tpu.memory_space<vmem>>, vector<1x32xf32>
      %34 = vector.broadcast %33 : vector<1x32xf32> to vector<16x32xf32>
      %35 = arith.addf %32, %34 : vector<16x32xf32>
      %36 = arith.truncf %35 : vector<16x32xf32> to vector<16x32xbf16>
      %c0_19 = arith.constant 0 : index
      %c0_20 = arith.constant 0 : index
      %37 = vector.load %arg8[%c0_19, %c0_20] : memref<16x32xbf16, #tpu.memory_space<vmem>>, vector<16x32xbf16>
      tpu.vector_store %arg8[%c0_19, %c0_20], %36 {strides = array<i32>} : memref<16x32xbf16, #tpu.memory_space<vmem>>, vector<16x32xbf16>,
    } else {
    }
    %c0 = arith.constant 0 : index
    %c0_1 = arith.constant 0 : index
    %3 = vector.load %arg8[%c0, %c0_1] : memref<16x32xbf16, #tpu.memory_space<vmem>>, vector<16x32xbf16>
    %c0_2 = arith.constant 0 : index
    %c0_3 = arith.constant 0 : index
    %4 = vector.load %arg5[%c0_2, %c0_3] : memref<32x96xbf16, #tpu.memory_space<vmem>>, vector<32x96xbf16>
    %cst = arith.constant dense<0.000000e+00> : vector<16x96xf32>
    %5 = tpu.matmul %3, %4, %cst {dimension_numbers = #tpu.dot_dimension_numbers<[1], [0], [0], [1], [0, 0, 1, 1], [], []>} : vector<16x32xbf16>, vector<32x96xbf16>, vector<16x96xf32> -> vector<16x96xf32>
    %c0_4 = arith.constant 0 : index
    %c0_5 = arith.constant 0 : index
    %6 = vector.load %arg6[%c0_4, %c0_5] : memref<1x96xf32, #tpu.memory_space<vmem>>, vector<1x96xf32>
    %7 = vector.broadcast %6 : vector<1x96xf32> to vector<16x96xf32>
    %8 = arith.addf %5, %7 : vector<16x96xf32>
    %9 = arith.truncf %8 : vector<16x96xf32> to vector<16x96xbf16>
    %c0_6 = arith.constant 0 : index
    %c0_7 = arith.constant 0 : index
    %10 = vector.load %arg7[%c0_6, %c0_7] : memref<16x96xbf16, #tpu.memory_space<vmem>>, vector<16x96xbf16>
    tpu.vector_store %arg7[%c0_6, %c0_7], %9 {strides = array<i32>} : memref<16x96xbf16, #tpu.memory_space<vmem>>, vector<16x96xbf16>,
    return
  }
  func.func @transform_0(%arg0: i32, %arg1: i32) -> (i32, i32) {
    %c0_i32 = arith.constant 0 : i32
    %c0_i32_0 = arith.constant 0 : i32
    return %arg0, %c0_i32 : i32, i32
  }
  func.func @transform_1(%arg0: i32, %arg1: i32) -> (i32, i32) {
    %c0_i32 = arith.constant 0 : i32
    %c0_i32_0 = arith.constant 0 : i32
    %c0_i32_1 = arith.constant 0 : i32
    return %c0_i32, %c0_i32_0 : i32, i32
  }
  func.func @transform_2(%arg0: i32, %arg1: i32) -> (i32, i32) {
    %c0_i32 = arith.constant 0 : i32
    %c0_i32_0 = arith.constant 0 : i32
    %c0_i32_1 = arith.constant 0 : i32
    return %c0_i32, %c0_i32_0 : i32, i32
  }
  func.func @transform_3(%arg0: i32, %arg1: i32) -> (i32, i32) {
    %c0_i32 = arith.constant 0 : i32
    %c0_i32_0 = arith.constant 0 : i32
    return %c0_i32, %arg1 : i32, i32
  }
  func.func @transform_4(%arg0: i32, %arg1: i32) -> (i32, i32) {
    %c0_i32 = arith.constant 0 : i32
    %c0_i32_0 = arith.constant 0 : i32
    return %c0_i32, %arg1 : i32, i32
  }
  func.func @transform_5(%arg0: i32, %arg1: i32) -> (i32, i32) {
    %c0_i32 = arith.constant 0 : i32
    return %arg0, %arg1 : i32, i32
  }
}

module attributes {stable_mosaic.version = 11 : i64} {
  func.func @_self_attn_kernel(%arg0: i32, %arg1: memref<8x96xbf16, #tpu.memory_space<vmem>>, %arg2: memref<8x32xbf16, #tpu.memory_space<vmem>>) attributes {dimension_semantics = [#tpu.dimension_semantics<parallel>], iteration_bounds = array<i64: 2>, scalar_prefetch = 0 : i64, scratch_operands = 0 : i64, tpu.core_type = #tpu.core_type<tc>, window_params = [{transform_indices = @transform_0, window_bounds = array<i64: 8, 96>}, {transform_indices = @transform_1, window_bounds = array<i64: 8, 32>}]} {
    %c0 = arith.constant 0 : index
    %c0_0 = arith.constant 0 : index
    %0 = vector.load %arg1[%c0, %c0_0] : memref<8x96xbf16, #tpu.memory_space<vmem>>, vector<8x96xbf16>
    %1 = vector.extract_strided_slice %0 {offsets = [0, 0], sizes = [8, 8], strides = [1, 1]} : vector<8x96xbf16> to vector<8x8xbf16>
    %2 = vector.extract_strided_slice %0 {offsets = [0, 32], sizes = [8, 8], strides = [1, 1]} : vector<8x96xbf16> to vector<8x8xbf16>
    %3 = vector.extract_strided_slice %0 {offsets = [0, 64], sizes = [8, 8], strides = [1, 1]} : vector<8x96xbf16> to vector<8x8xbf16>
    %cst = arith.constant dense<0.000000e+00> : vector<8x8xf32>
    %4 = tpu.matmul %1, %2, %cst {dimension_numbers = #tpu.dot_dimension_numbers<[1], [1], [0], [0], [0, 0, 1, 0], [], []>} : vector<8x8xbf16>, vector<8x8xbf16>, vector<8x8xf32> -> vector<8x8xf32>
    %5 = tpu.iota {dimensions = array<i32: 0>} : vector<8x8xi32>
    %6 = tpu.iota {dimensions = array<i32: 1>} : vector<8x8xi32>
    %7 = arith.cmpi sle, %6, %5 : vector<8x8xi32>
    %cst_1 = arith.constant 0xFF800000 : f32
    %8 = vector.broadcast %cst_1 : f32 to vector<8x8xf32>
    %9 = arith.select %7, %4, %8 : vector<8x8xi1>, vector<8x8xf32>
    %cst_2 = arith.constant dense<0xFF800000> : vector<8xf32>
    %10 = vector.multi_reduction <maximumf>, %9, %cst_2 [1] : vector<8x8xf32> to vector<8xf32>
    %11 = vector.shape_cast %10 : vector<8xf32> to vector<8x1xf32>
    %12 = vector.broadcast %11 : vector<8x1xf32> to vector<8x8xf32>
    %13 = arith.subf %9, %12 : vector<8x8xf32>
    %14 = math.exp %13 : vector<8x8xf32>
    %15 = arith.truncf %14 : vector<8x8xf32> to vector<8x8xbf16>
    %cst_3 = arith.constant dense<0.000000e+00> : vector<8x8xf32>
    %16 = tpu.matmul %15, %3, %cst_3 {dimension_numbers = #tpu.dot_dimension_numbers<[1], [0], [0], [1], [0, 0, 1, 1], [], []>} : vector<8x8xbf16>, vector<8x8xbf16>, vector<8x8xf32> -> vector<8x8xf32>
    %cst_4 = arith.constant dense<0.000000e+00> : vector<8xf32>
    %17 = vector.multi_reduction <add>, %14, %cst_4 [1] : vector<8x8xf32> to vector<8xf32>
    %18 = vector.shape_cast %17 : vector<8xf32> to vector<8x1xf32>
    %19 = tpu.reciprocal %18 {approx = true} : vector<8x1xf32> -> vector<8x1xf32>
    %20 = vector.broadcast %19 : vector<8x1xf32> to vector<8x8xf32>
    %21 = arith.mulf %16, %20 : vector<8x8xf32>
    %22 = arith.truncf %21 : vector<8x8xf32> to vector<8x8xbf16>
    %c0_5 = arith.constant 0 : index
    %c0_6 = arith.constant 0 : index
    %23 = vector.load %arg2[%c0_5, %c0_6] : memref<8x32xbf16, #tpu.memory_space<vmem>>, vector<8x8xbf16>
    tpu.vector_store %arg2[%c0_5, %c0_6], %22 {strides = array<i32>} : memref<8x32xbf16, #tpu.memory_space<vmem>>, vector<8x8xbf16>,
    %24 = vector.extract_strided_slice %0 {offsets = [0, 8], sizes = [8, 8], strides = [1, 1]} : vector<8x96xbf16> to vector<8x8xbf16>
    %25 = vector.extract_strided_slice %0 {offsets = [0, 40], sizes = [8, 8], strides = [1, 1]} : vector<8x96xbf16> to vector<8x8xbf16>
    %26 = vector.extract_strided_slice %0 {offsets = [0, 72], sizes = [8, 8], strides = [1, 1]} : vector<8x96xbf16> to vector<8x8xbf16>
    %cst_7 = arith.constant dense<0.000000e+00> : vector<8x8xf32>
    %27 = tpu.matmul %24, %25, %cst_7 {dimension_numbers = #tpu.dot_dimension_numbers<[1], [1], [0], [0], [0, 0, 1, 0], [], []>} : vector<8x8xbf16>, vector<8x8xbf16>, vector<8x8xf32> -> vector<8x8xf32>
    %28 = tpu.iota {dimensions = array<i32: 0>} : vector<8x8xi32>
    %29 = tpu.iota {dimensions = array<i32: 1>} : vector<8x8xi32>
    %30 = arith.cmpi sle, %29, %28 : vector<8x8xi32>
    %cst_8 = arith.constant 0xFF800000 : f32
    %31 = vector.broadcast %cst_8 : f32 to vector<8x8xf32>
    %32 = arith.select %30, %27, %31 : vector<8x8xi1>, vector<8x8xf32>
    %cst_9 = arith.constant dense<0xFF800000> : vector<8xf32>
    %33 = vector.multi_reduction <maximumf>, %32, %cst_9 [1] : vector<8x8xf32> to vector<8xf32>
    %34 = vector.shape_cast %33 : vector<8xf32> to vector<8x1xf32>
    %35 = vector.broadcast %34 : vector<8x1xf32> to vector<8x8xf32>
    %36 = arith.subf %32, %35 : vector<8x8xf32>
    %37 = math.exp %36 : vector<8x8xf32>
    %38 = arith.truncf %37 : vector<8x8xf32> to vector<8x8xbf16>
    %cst_10 = arith.constant dense<0.000000e+00> : vector<8x8xf32>
    %39 = tpu.matmul %38, %26, %cst_10 {dimension_numbers = #tpu.dot_dimension_numbers<[1], [0], [0], [1], [0, 0, 1, 1], [], []>} : vector<8x8xbf16>, vector<8x8xbf16>, vector<8x8xf32> -> vector<8x8xf32>
    %cst_11 = arith.constant dense<0.000000e+00> : vector<8xf32>
    %40 = vector.multi_reduction <add>, %37, %cst_11 [1] : vector<8x8xf32> to vector<8xf32>
    %41 = vector.shape_cast %40 : vector<8xf32> to vector<8x1xf32>
    %42 = tpu.reciprocal %41 {approx = true} : vector<8x1xf32> -> vector<8x1xf32>
    %43 = vector.broadcast %42 : vector<8x1xf32> to vector<8x8xf32>
    %44 = arith.mulf %39, %43 : vector<8x8xf32>
    %45 = arith.truncf %44 : vector<8x8xf32> to vector<8x8xbf16>
    %c0_12 = arith.constant 0 : index
    %c8 = arith.constant 8 : index
    %46 = vector.load %arg2[%c0_12, %c8] : memref<8x32xbf16, #tpu.memory_space<vmem>>, vector<8x8xbf16>
    tpu.vector_store %arg2[%c0_12, %c8], %45 {strides = array<i32>} : memref<8x32xbf16, #tpu.memory_space<vmem>>, vector<8x8xbf16>,
    %47 = vector.extract_strided_slice %0 {offsets = [0, 16], sizes = [8, 8], strides = [1, 1]} : vector<8x96xbf16> to vector<8x8xbf16>
    %48 = vector.extract_strided_slice %0 {offsets = [0, 48], sizes = [8, 8], strides = [1, 1]} : vector<8x96xbf16> to vector<8x8xbf16>
    %49 = vector.extract_strided_slice %0 {offsets = [0, 80], sizes = [8, 8], strides = [1, 1]} : vector<8x96xbf16> to vector<8x8xbf16>
    %cst_13 = arith.constant dense<0.000000e+00> : vector<8x8xf32>
    %50 = tpu.matmul %47, %48, %cst_13 {dimension_numbers = #tpu.dot_dimension_numbers<[1], [1], [0], [0], [0, 0, 1, 0], [], []>} : vector<8x8xbf16>, vector<8x8xbf16>, vector<8x8xf32> -> vector<8x8xf32>
    %51 = tpu.iota {dimensions = array<i32: 0>} : vector<8x8xi32>
    %52 = tpu.iota {dimensions = array<i32: 1>} : vector<8x8xi32>
    %53 = arith.cmpi sle, %52, %51 : vector<8x8xi32>
    %cst_14 = arith.constant 0xFF800000 : f32
    %54 = vector.broadcast %cst_14 : f32 to vector<8x8xf32>
    %55 = arith.select %53, %50, %54 : vector<8x8xi1>, vector<8x8xf32>
    %cst_15 = arith.constant dense<0xFF800000> : vector<8xf32>
    %56 = vector.multi_reduction <maximumf>, %55, %cst_15 [1] : vector<8x8xf32> to vector<8xf32>
    %57 = vector.shape_cast %56 : vector<8xf32> to vector<8x1xf32>
    %58 = vector.broadcast %57 : vector<8x1xf32> to vector<8x8xf32>
    %59 = arith.subf %55, %58 : vector<8x8xf32>
    %60 = math.exp %59 : vector<8x8xf32>
    %61 = arith.truncf %60 : vector<8x8xf32> to vector<8x8xbf16>
    %cst_16 = arith.constant dense<0.000000e+00> : vector<8x8xf32>
    %62 = tpu.matmul %61, %49, %cst_16 {dimension_numbers = #tpu.dot_dimension_numbers<[1], [0], [0], [1], [0, 0, 1, 1], [], []>} : vector<8x8xbf16>, vector<8x8xbf16>, vector<8x8xf32> -> vector<8x8xf32>
    %cst_17 = arith.constant dense<0.000000e+00> : vector<8xf32>
    %63 = vector.multi_reduction <add>, %60, %cst_17 [1] : vector<8x8xf32> to vector<8xf32>
    %64 = vector.shape_cast %63 : vector<8xf32> to vector<8x1xf32>
    %65 = tpu.reciprocal %64 {approx = true} : vector<8x1xf32> -> vector<8x1xf32>
    %66 = vector.broadcast %65 : vector<8x1xf32> to vector<8x8xf32>
    %67 = arith.mulf %62, %66 : vector<8x8xf32>
    %68 = arith.truncf %67 : vector<8x8xf32> to vector<8x8xbf16>
    %c0_18 = arith.constant 0 : index
    %c16 = arith.constant 16 : index
    %69 = vector.load %arg2[%c0_18, %c16] : memref<8x32xbf16, #tpu.memory_space<vmem>>, vector<8x8xbf16>
    tpu.vector_store %arg2[%c0_18, %c16], %68 {strides = array<i32>} : memref<8x32xbf16, #tpu.memory_space<vmem>>, vector<8x8xbf16>,
    %70 = vector.extract_strided_slice %0 {offsets = [0, 24], sizes = [8, 8], strides = [1, 1]} : vector<8x96xbf16> to vector<8x8xbf16>
    %71 = vector.extract_strided_slice %0 {offsets = [0, 56], sizes = [8, 8], strides = [1, 1]} : vector<8x96xbf16> to vector<8x8xbf16>
    %72 = vector.extract_strided_slice %0 {offsets = [0, 88], sizes = [8, 8], strides = [1, 1]} : vector<8x96xbf16> to vector<8x8xbf16>
    %cst_19 = arith.constant dense<0.000000e+00> : vector<8x8xf32>
    %73 = tpu.matmul %70, %71, %cst_19 {dimension_numbers = #tpu.dot_dimension_numbers<[1], [1], [0], [0], [0, 0, 1, 0], [], []>} : vector<8x8xbf16>, vector<8x8xbf16>, vector<8x8xf32> -> vector<8x8xf32>
    %74 = tpu.iota {dimensions = array<i32: 0>} : vector<8x8xi32>
    %75 = tpu.iota {dimensions = array<i32: 1>} : vector<8x8xi32>
    %76 = arith.cmpi sle, %75, %74 : vector<8x8xi32>
    %cst_20 = arith.constant 0xFF800000 : f32
    %77 = vector.broadcast %cst_20 : f32 to vector<8x8xf32>
    %78 = arith.select %76, %73, %77 : vector<8x8xi1>, vector<8x8xf32>
    %cst_21 = arith.constant dense<0xFF800000> : vector<8xf32>
    %79 = vector.multi_reduction <maximumf>, %78, %cst_21 [1] : vector<8x8xf32> to vector<8xf32>
    %80 = vector.shape_cast %79 : vector<8xf32> to vector<8x1xf32>
    %81 = vector.broadcast %80 : vector<8x1xf32> to vector<8x8xf32>
    %82 = arith.subf %78, %81 : vector<8x8xf32>
    %83 = math.exp %82 : vector<8x8xf32>
    %84 = arith.truncf %83 : vector<8x8xf32> to vector<8x8xbf16>
    %cst_22 = arith.constant dense<0.000000e+00> : vector<8x8xf32>
    %85 = tpu.matmul %84, %72, %cst_22 {dimension_numbers = #tpu.dot_dimension_numbers<[1], [0], [0], [1], [0, 0, 1, 1], [], []>} : vector<8x8xbf16>, vector<8x8xbf16>, vector<8x8xf32> -> vector<8x8xf32>
    %cst_23 = arith.constant dense<0.000000e+00> : vector<8xf32>
    %86 = vector.multi_reduction <add>, %83, %cst_23 [1] : vector<8x8xf32> to vector<8xf32>
    %87 = vector.shape_cast %86 : vector<8xf32> to vector<8x1xf32>
    %88 = tpu.reciprocal %87 {approx = true} : vector<8x1xf32> -> vector<8x1xf32>
    %89 = vector.broadcast %88 : vector<8x1xf32> to vector<8x8xf32>
    %90 = arith.mulf %85, %89 : vector<8x8xf32>
    %91 = arith.truncf %90 : vector<8x8xf32> to vector<8x8xbf16>
    %c0_24 = arith.constant 0 : index
    %c24 = arith.constant 24 : index
    %92 = vector.load %arg2[%c0_24, %c24] : memref<8x32xbf16, #tpu.memory_space<vmem>>, vector<8x8xbf16>
    tpu.vector_store %arg2[%c0_24, %c24], %91 {strides = array<i32>} : memref<8x32xbf16, #tpu.memory_space<vmem>>, vector<8x8xbf16>,
    return
  }
  func.func @transform_0(%arg0: i32) -> (i32, i32) {
    %c0_i32 = arith.constant 0 : i32
    %c0_i32_0 = arith.constant 0 : i32
    return %arg0, %c0_i32 : i32, i32
  }
  func.func @transform_1(%arg0: i32) -> (i32, i32) {
    %c0_i32 = arith.constant 0 : i32
    %c0_i32_0 = arith.constant 0 : i32
    return %arg0, %c0_i32 : i32, i32
  }
}

module attributes {stable_mosaic.version = 11 : i64} {
  func.func @_ln_matmul_kernel(%arg0: i32, %arg1: i32, %arg2: memref<16x32xf32, #tpu.memory_space<vmem>>, %arg3: memref<1x32xf32, #tpu.memory_space<vmem>>, %arg4: memref<1x32xf32, #tpu.memory_space<vmem>>, %arg5: memref<32x32xbf16, #tpu.memory_space<vmem>>, %arg6: memref<1x32xf32, #tpu.memory_space<vmem>>, %arg7: memref<16x32xbf16, #tpu.memory_space<vmem>>, %arg8: memref<16x32xbf16, #tpu.memory_space<vmem>>) attributes {dimension_semantics = [#tpu.dimension_semantics<parallel>, #tpu.dimension_semantics<arbitrary>], iteration_bounds = array<i64: 1, 1>, scalar_prefetch = 0 : i64, scratch_operands = 1 : i64, tpu.core_type = #tpu.core_type<tc>, window_params = [{transform_indices = @transform_0, window_bounds = array<i64: 16, 32>}, {pipeline_mode = #tpu.pipeline_mode<synchronous>, transform_indices = @transform_1, window_bounds = array<i64: 1, 32>}, {pipeline_mode = #tpu.pipeline_mode<synchronous>, transform_indices = @transform_2, window_bounds = array<i64: 1, 32>}, {transform_indices = @transform_3, window_bounds = array<i64: 32, 32>}, {transform_indices = @transform_4, window_bounds = array<i64: 1, 32>}, {transform_indices = @transform_5, window_bounds = array<i64: 16, 32>}]} {
    %c0_i32 = arith.constant 0 : i32
    %0 = arith.cmpi eq, %arg1, %c0_i32 : i32
    %1 = arith.extui %0 : i1 to i32
    %c0_i32_0 = arith.constant 0 : i32
    %2 = arith.cmpi ne, %1, %c0_i32_0 : i32
    scf.if %2 {
      %c0_8 = arith.constant 0 : index
      %c0_9 = arith.constant 0 : index
      %11 = vector.load %arg2[%c0_8, %c0_9] : memref<16x32xf32, #tpu.memory_space<vmem>>, vector<16x32xf32>
      %cst_10 = arith.constant dense<0.000000e+00> : vector<16xf32>
      %12 = vector.multi_reduction <add>, %11, %cst_10 [1] : vector<16x32xf32> to vector<16xf32>
      %13 = vector.shape_cast %12 : vector<16xf32> to vector<16x1xf32>
      %cst_11 = arith.constant 3.200000e+01 : f32
      %14 = vector.broadcast %cst_11 : f32 to vector<16x1xf32>
      %15 = arith.divf %13, %14 : vector<16x1xf32>
      %16 = vector.broadcast %15 : vector<16x1xf32> to vector<16x32xf32>
      %17 = arith.subf %11, %16 : vector<16x32xf32>
      %18 = arith.mulf %17, %17 : vector<16x32xf32>
      %cst_12 = arith.constant dense<0.000000e+00> : vector<16xf32>
      %19 = vector.multi_reduction <add>, %18, %cst_12 [1] : vector<16x32xf32> to vector<16xf32>
      %20 = vector.shape_cast %19 : vector<16xf32> to vector<16x1xf32>
      %cst_13 = arith.constant 3.200000e+01 : f32
      %21 = vector.broadcast %cst_13 : f32 to vector<16x1xf32>
      %22 = arith.divf %20, %21 : vector<16x1xf32>
      %23 = vector.broadcast %15 : vector<16x1xf32> to vector<16x32xf32>
      %24 = arith.subf %11, %23 : vector<16x32xf32>
      %cst_14 = arith.constant 9.99999974E-6 : f32
      %25 = vector.broadcast %cst_14 : f32 to vector<16x1xf32>
      %26 = arith.addf %22, %25 : vector<16x1xf32>
      %27 = math.rsqrt %26 : vector<16x1xf32>
      %28 = vector.broadcast %27 : vector<16x1xf32> to vector<16x32xf32>
      %29 = arith.mulf %24, %28 : vector<16x32xf32>
      %c0_15 = arith.constant 0 : index
      %c0_16 = arith.constant 0 : index
      %30 = vector.load %arg3[%c0_15, %c0_16] : memref<1x32xf32, #tpu.memory_space<vmem>>, vector<1x32xf32>
      %31 = vector.broadcast %30 : vector<1x32xf32> to vector<16x32xf32>
      %32 = arith.mulf %29, %31 : vector<16x32xf32>
      %c0_17 = arith.constant 0 : index
      %c0_18 = arith.constant 0 : index
      %33 = vector.load %arg4[%c0_17, %c0_18] : memref<1x32xf32, #tpu.memory_space<vmem>>, vector<1x32xf32>
      %34 = vector.broadcast %33 : vector<1x32xf32> to vector<16x32xf32>
      %35 = arith.addf %32, %34 : vector<16x32xf32>
      %36 = arith.truncf %35 : vector<16x32xf32> to vector<16x32xbf16>
      %c0_19 = arith.constant 0 : index
      %c0_20 = arith.constant 0 : index
      %37 = vector.load %arg8[%c0_19, %c0_20] : memref<16x32xbf16, #tpu.memory_space<vmem>>, vector<16x32xbf16>
      tpu.vector_store %arg8[%c0_19, %c0_20], %36 {strides = array<i32>} : memref<16x32xbf16, #tpu.memory_space<vmem>>, vector<16x32xbf16>,
    } else {
    }
    %c0 = arith.constant 0 : index
    %c0_1 = arith.constant 0 : index
    %3 = vector.load %arg8[%c0, %c0_1] : memref<16x32xbf16, #tpu.memory_space<vmem>>, vector<16x32xbf16>
    %c0_2 = arith.constant 0 : index
    %c0_3 = arith.constant 0 : index
    %4 = vector.load %arg5[%c0_2, %c0_3] : memref<32x32xbf16, #tpu.memory_space<vmem>>, vector<32x32xbf16>
    %cst = arith.constant dense<0.000000e+00> : vector<16x32xf32>
    %5 = tpu.matmul %3, %4, %cst {dimension_numbers = #tpu.dot_dimension_numbers<[1], [0], [0], [1], [0, 0, 1, 1], [], []>} : vector<16x32xbf16>, vector<32x32xbf16>, vector<16x32xf32> -> vector<16x32xf32>
    %c0_4 = arith.constant 0 : index
    %c0_5 = arith.constant 0 : index
    %6 = vector.load %arg6[%c0_4, %c0_5] : memref<1x32xf32, #tpu.memory_space<vmem>>, vector<1x32xf32>
    %7 = vector.broadcast %6 : vector<1x32xf32> to vector<16x32xf32>
    %8 = arith.addf %5, %7 : vector<16x32xf32>
    %9 = arith.truncf %8 : vector<16x32xf32> to vector<16x32xbf16>
    %c0_6 = arith.constant 0 : index
    %c0_7 = arith.constant 0 : index
    %10 = vector.load %arg7[%c0_6, %c0_7] : memref<16x32xbf16, #tpu.memory_space<vmem>>, vector<16x32xbf16>
    tpu.vector_store %arg7[%c0_6, %c0_7], %9 {strides = array<i32>} : memref<16x32xbf16, #tpu.memory_space<vmem>>, vector<16x32xbf16>,
    return
  }
  func.func @transform_0(%arg0: i32, %arg1: i32) -> (i32, i32) {
    %c0_i32 = arith.constant 0 : i32
    %c0_i32_0 = arith.constant 0 : i32
    return %arg0, %c0_i32 : i32, i32
  }
  func.func @transform_1(%arg0: i32, %arg1: i32) -> (i32, i32) {
    %c0_i32 = arith.constant 0 : i32
    %c0_i32_0 = arith.constant 0 : i32
    %c0_i32_1 = arith.constant 0 : i32
    return %c0_i32, %c0_i32_0 : i32, i32
  }
  func.func @transform_2(%arg0: i32, %arg1: i32) -> (i32, i32) {
    %c0_i32 = arith.constant 0 : i32
    %c0_i32_0 = arith.constant 0 : i32
    %c0_i32_1 = arith.constant 0 : i32
    return %c0_i32, %c0_i32_0 : i32, i32
  }
  func.func @transform_3(%arg0: i32, %arg1: i32) -> (i32, i32) {
    %c0_i32 = arith.constant 0 : i32
    %c0_i32_0 = arith.constant 0 : i32
    return %c0_i32, %arg1 : i32, i32
  }
  func.func @transform_4(%arg0: i32, %arg1: i32) -> (i32, i32) {
    %c0_i32 = arith.constant 0 : i32
    %c0_i32_0 = arith.constant 0 : i32
    return %c0_i32, %arg1 : i32, i32
  }
  func.func @transform_5(%arg0: i32, %arg1: i32) -> (i32, i32) {
    %c0_i32 = arith.constant 0 : i32
    return %arg0, %arg1 : i32, i32
  }
}

module attributes {stable_mosaic.version = 11 : i64} {
  func.func @_matmul_k1_kernel(%arg0: i32, %arg1: i32, %arg2: memref<32x32xf32, #tpu.memory_space<vmem>>, %arg3: memref<32x64xbf16, #tpu.memory_space<vmem>>, %arg4: memref<1x64xf32, #tpu.memory_space<vmem>>, %arg5: memref<32x64xbf16, #tpu.memory_space<vmem>>) attributes {dimension_semantics = [#tpu.dimension_semantics<parallel>, #tpu.dimension_semantics<parallel>], iteration_bounds = array<i64: 1, 1>, scalar_prefetch = 0 : i64, scratch_operands = 0 : i64, tpu.core_type = #tpu.core_type<tc>, window_params = [{transform_indices = @transform_0, window_bounds = array<i64: 32, 32>}, {transform_indices = @transform_1, window_bounds = array<i64: 32, 64>}, {transform_indices = @transform_2, window_bounds = array<i64: 1, 64>}, {transform_indices = @transform_3, window_bounds = array<i64: 32, 64>}]} {
    %c0 = arith.constant 0 : index
    %c0_0 = arith.constant 0 : index
    %0 = vector.load %arg2[%c0, %c0_0] : memref<32x32xf32, #tpu.memory_space<vmem>>, vector<32x32xf32>
    %1 = arith.truncf %0 : vector<32x32xf32> to vector<32x32xbf16>
    %c0_1 = arith.constant 0 : index
    %c0_2 = arith.constant 0 : index
    %2 = vector.load %arg3[%c0_1, %c0_2] : memref<32x64xbf16, #tpu.memory_space<vmem>>, vector<32x64xbf16>
    %cst = arith.constant dense<0.000000e+00> : vector<32x64xf32>
    %3 = tpu.matmul %1, %2, %cst {dimension_numbers = #tpu.dot_dimension_numbers<[1], [0], [0], [1], [0, 0, 1, 1], [], []>} : vector<32x32xbf16>, vector<32x64xbf16>, vector<32x64xf32> -> vector<32x64xf32>
    %c0_3 = arith.constant 0 : index
    %c0_4 = arith.constant 0 : index
    %4 = vector.load %arg4[%c0_3, %c0_4] : memref<1x64xf32, #tpu.memory_space<vmem>>, vector<1x64xf32>
    %5 = vector.broadcast %4 : vector<1x64xf32> to vector<32x64xf32>
    %6 = arith.addf %3, %5 : vector<32x64xf32>
    %7 = arith.truncf %6 : vector<32x64xf32> to vector<32x64xbf16>
    %c0_5 = arith.constant 0 : index
    %c0_6 = arith.constant 0 : index
    %8 = vector.load %arg5[%c0_5, %c0_6] : memref<32x64xbf16, #tpu.memory_space<vmem>>, vector<32x64xbf16>
    tpu.vector_store %arg5[%c0_5, %c0_6], %7 {strides = array<i32>} : memref<32x64xbf16, #tpu.memory_space<vmem>>, vector<32x64xbf16>,
    return
  }
  func.func @transform_0(%arg0: i32, %arg1: i32) -> (i32, i32) {
    %c0_i32 = arith.constant 0 : i32
    %c0_i32_0 = arith.constant 0 : i32
    return %arg0, %c0_i32 : i32, i32
  }
  func.func @transform_1(%arg0: i32, %arg1: i32) -> (i32, i32) {
    %c0_i32 = arith.constant 0 : i32
    %c0_i32_0 = arith.constant 0 : i32
    return %c0_i32, %arg1 : i32, i32
  }
  func.func @transform_2(%arg0: i32, %arg1: i32) -> (i32, i32) {
    %c0_i32 = arith.constant 0 : i32
    %c0_i32_0 = arith.constant 0 : i32
    return %c0_i32, %arg1 : i32, i32
  }
  func.func @transform_3(%arg0: i32, %arg1: i32) -> (i32, i32) {
    %c0_i32 = arith.constant 0 : i32
    return %arg0, %arg1 : i32, i32
  }
}

module attributes {stable_mosaic.version = 11 : i64} {
  func.func @_cross_attn_kernel(%arg0: i32, %arg1: memref<8x32xbf16, #tpu.memory_space<vmem>>, %arg2: memref<16x64xbf16, #tpu.memory_space<vmem>>, %arg3: memref<8x32xbf16, #tpu.memory_space<vmem>>) attributes {dimension_semantics = [#tpu.dimension_semantics<parallel>], iteration_bounds = array<i64: 2>, scalar_prefetch = 0 : i64, scratch_operands = 0 : i64, tpu.core_type = #tpu.core_type<tc>, window_params = [{transform_indices = @transform_0, window_bounds = array<i64: 8, 32>}, {transform_indices = @transform_1, window_bounds = array<i64: 16, 64>}, {transform_indices = @transform_2, window_bounds = array<i64: 8, 32>}]} {
    %c0 = arith.constant 0 : index
    %c0_0 = arith.constant 0 : index
    %0 = vector.load %arg1[%c0, %c0_0] : memref<8x32xbf16, #tpu.memory_space<vmem>>, vector<8x32xbf16>
    %c0_1 = arith.constant 0 : index
    %c0_2 = arith.constant 0 : index
    %1 = vector.load %arg2[%c0_1, %c0_2] : memref<16x64xbf16, #tpu.memory_space<vmem>>, vector<16x64xbf16>
    %2 = vector.extract_strided_slice %0 {offsets = [0, 0], sizes = [8, 8], strides = [1, 1]} : vector<8x32xbf16> to vector<8x8xbf16>
    %3 = vector.extract_strided_slice %1 {offsets = [0, 0], sizes = [16, 8], strides = [1, 1]} : vector<16x64xbf16> to vector<16x8xbf16>
    %4 = vector.extract_strided_slice %1 {offsets = [0, 32], sizes = [16, 8], strides = [1, 1]} : vector<16x64xbf16> to vector<16x8xbf16>
    %cst = arith.constant dense<0.000000e+00> : vector<8x16xf32>
    %5 = tpu.matmul %2, %3, %cst {dimension_numbers = #tpu.dot_dimension_numbers<[1], [1], [0], [0], [0, 0, 1, 0], [], []>} : vector<8x8xbf16>, vector<16x8xbf16>, vector<8x16xf32> -> vector<8x16xf32>
    %cst_3 = arith.constant dense<0xFF800000> : vector<8xf32>
    %6 = vector.multi_reduction <maximumf>, %5, %cst_3 [1] : vector<8x16xf32> to vector<8xf32>
    %7 = vector.shape_cast %6 : vector<8xf32> to vector<8x1xf32>
    %8 = vector.broadcast %7 : vector<8x1xf32> to vector<8x16xf32>
    %9 = arith.subf %5, %8 : vector<8x16xf32>
    %10 = math.exp %9 : vector<8x16xf32>
    %11 = arith.truncf %10 : vector<8x16xf32> to vector<8x16xbf16>
    %cst_4 = arith.constant dense<0.000000e+00> : vector<8x8xf32>
    %12 = tpu.matmul %11, %4, %cst_4 {dimension_numbers = #tpu.dot_dimension_numbers<[1], [0], [0], [1], [0, 0, 1, 1], [], []>} : vector<8x16xbf16>, vector<16x8xbf16>, vector<8x8xf32> -> vector<8x8xf32>
    %cst_5 = arith.constant dense<0.000000e+00> : vector<8xf32>
    %13 = vector.multi_reduction <add>, %10, %cst_5 [1] : vector<8x16xf32> to vector<8xf32>
    %14 = vector.shape_cast %13 : vector<8xf32> to vector<8x1xf32>
    %15 = tpu.reciprocal %14 {approx = true} : vector<8x1xf32> -> vector<8x1xf32>
    %16 = vector.broadcast %15 : vector<8x1xf32> to vector<8x8xf32>
    %17 = arith.mulf %12, %16 : vector<8x8xf32>
    %18 = arith.truncf %17 : vector<8x8xf32> to vector<8x8xbf16>
    %c0_6 = arith.constant 0 : index
    %c0_7 = arith.constant 0 : index
    %19 = vector.load %arg3[%c0_6, %c0_7] : memref<8x32xbf16, #tpu.memory_space<vmem>>, vector<8x8xbf16>
    tpu.vector_store %arg3[%c0_6, %c0_7], %18 {strides = array<i32>} : memref<8x32xbf16, #tpu.memory_space<vmem>>, vector<8x8xbf16>,
    %20 = vector.extract_strided_slice %0 {offsets = [0, 8], sizes = [8, 8], strides = [1, 1]} : vector<8x32xbf16> to vector<8x8xbf16>
    %21 = vector.extract_strided_slice %1 {offsets = [0, 8], sizes = [16, 8], strides = [1, 1]} : vector<16x64xbf16> to vector<16x8xbf16>
    %22 = vector.extract_strided_slice %1 {offsets = [0, 40], sizes = [16, 8], strides = [1, 1]} : vector<16x64xbf16> to vector<16x8xbf16>
    %cst_8 = arith.constant dense<0.000000e+00> : vector<8x16xf32>
    %23 = tpu.matmul %20, %21, %cst_8 {dimension_numbers = #tpu.dot_dimension_numbers<[1], [1], [0], [0], [0, 0, 1, 0], [], []>} : vector<8x8xbf16>, vector<16x8xbf16>, vector<8x16xf32> -> vector<8x16xf32>
    %cst_9 = arith.constant dense<0xFF800000> : vector<8xf32>
    %24 = vector.multi_reduction <maximumf>, %23, %cst_9 [1] : vector<8x16xf32> to vector<8xf32>
    %25 = vector.shape_cast %24 : vector<8xf32> to vector<8x1xf32>
    %26 = vector.broadcast %25 : vector<8x1xf32> to vector<8x16xf32>
    %27 = arith.subf %23, %26 : vector<8x16xf32>
    %28 = math.exp %27 : vector<8x16xf32>
    %29 = arith.truncf %28 : vector<8x16xf32> to vector<8x16xbf16>
    %cst_10 = arith.constant dense<0.000000e+00> : vector<8x8xf32>
    %30 = tpu.matmul %29, %22, %cst_10 {dimension_numbers = #tpu.dot_dimension_numbers<[1], [0], [0], [1], [0, 0, 1, 1], [], []>} : vector<8x16xbf16>, vector<16x8xbf16>, vector<8x8xf32> -> vector<8x8xf32>
    %cst_11 = arith.constant dense<0.000000e+00> : vector<8xf32>
    %31 = vector.multi_reduction <add>, %28, %cst_11 [1] : vector<8x16xf32> to vector<8xf32>
    %32 = vector.shape_cast %31 : vector<8xf32> to vector<8x1xf32>
    %33 = tpu.reciprocal %32 {approx = true} : vector<8x1xf32> -> vector<8x1xf32>
    %34 = vector.broadcast %33 : vector<8x1xf32> to vector<8x8xf32>
    %35 = arith.mulf %30, %34 : vector<8x8xf32>
    %36 = arith.truncf %35 : vector<8x8xf32> to vector<8x8xbf16>
    %c0_12 = arith.constant 0 : index
    %c8 = arith.constant 8 : index
    %37 = vector.load %arg3[%c0_12, %c8] : memref<8x32xbf16, #tpu.memory_space<vmem>>, vector<8x8xbf16>
    tpu.vector_store %arg3[%c0_12, %c8], %36 {strides = array<i32>} : memref<8x32xbf16, #tpu.memory_space<vmem>>, vector<8x8xbf16>,
    %38 = vector.extract_strided_slice %0 {offsets = [0, 16], sizes = [8, 8], strides = [1, 1]} : vector<8x32xbf16> to vector<8x8xbf16>
    %39 = vector.extract_strided_slice %1 {offsets = [0, 16], sizes = [16, 8], strides = [1, 1]} : vector<16x64xbf16> to vector<16x8xbf16>
    %40 = vector.extract_strided_slice %1 {offsets = [0, 48], sizes = [16, 8], strides = [1, 1]} : vector<16x64xbf16> to vector<16x8xbf16>
    %cst_13 = arith.constant dense<0.000000e+00> : vector<8x16xf32>
    %41 = tpu.matmul %38, %39, %cst_13 {dimension_numbers = #tpu.dot_dimension_numbers<[1], [1], [0], [0], [0, 0, 1, 0], [], []>} : vector<8x8xbf16>, vector<16x8xbf16>, vector<8x16xf32> -> vector<8x16xf32>
    %cst_14 = arith.constant dense<0xFF800000> : vector<8xf32>
    %42 = vector.multi_reduction <maximumf>, %41, %cst_14 [1] : vector<8x16xf32> to vector<8xf32>
    %43 = vector.shape_cast %42 : vector<8xf32> to vector<8x1xf32>
    %44 = vector.broadcast %43 : vector<8x1xf32> to vector<8x16xf32>
    %45 = arith.subf %41, %44 : vector<8x16xf32>
    %46 = math.exp %45 : vector<8x16xf32>
    %47 = arith.truncf %46 : vector<8x16xf32> to vector<8x16xbf16>
    %cst_15 = arith.constant dense<0.000000e+00> : vector<8x8xf32>
    %48 = tpu.matmul %47, %40, %cst_15 {dimension_numbers = #tpu.dot_dimension_numbers<[1], [0], [0], [1], [0, 0, 1, 1], [], []>} : vector<8x16xbf16>, vector<16x8xbf16>, vector<8x8xf32> -> vector<8x8xf32>
    %cst_16 = arith.constant dense<0.000000e+00> : vector<8xf32>
    %49 = vector.multi_reduction <add>, %46, %cst_16 [1] : vector<8x16xf32> to vector<8xf32>
    %50 = vector.shape_cast %49 : vector<8xf32> to vector<8x1xf32>
    %51 = tpu.reciprocal %50 {approx = true} : vector<8x1xf32> -> vector<8x1xf32>
    %52 = vector.broadcast %51 : vector<8x1xf32> to vector<8x8xf32>
    %53 = arith.mulf %48, %52 : vector<8x8xf32>
    %54 = arith.truncf %53 : vector<8x8xf32> to vector<8x8xbf16>
    %c0_17 = arith.constant 0 : index
    %c16 = arith.constant 16 : index
    %55 = vector.load %arg3[%c0_17, %c16] : memref<8x32xbf16, #tpu.memory_space<vmem>>, vector<8x8xbf16>
    tpu.vector_store %arg3[%c0_17, %c16], %54 {strides = array<i32>} : memref<8x32xbf16, #tpu.memory_space<vmem>>, vector<8x8xbf16>,
    %56 = vector.extract_strided_slice %0 {offsets = [0, 24], sizes = [8, 8], strides = [1, 1]} : vector<8x32xbf16> to vector<8x8xbf16>
    %57 = vector.extract_strided_slice %1 {offsets = [0, 24], sizes = [16, 8], strides = [1, 1]} : vector<16x64xbf16> to vector<16x8xbf16>
    %58 = vector.extract_strided_slice %1 {offsets = [0, 56], sizes = [16, 8], strides = [1, 1]} : vector<16x64xbf16> to vector<16x8xbf16>
    %cst_18 = arith.constant dense<0.000000e+00> : vector<8x16xf32>
    %59 = tpu.matmul %56, %57, %cst_18 {dimension_numbers = #tpu.dot_dimension_numbers<[1], [1], [0], [0], [0, 0, 1, 0], [], []>} : vector<8x8xbf16>, vector<16x8xbf16>, vector<8x16xf32> -> vector<8x16xf32>
    %cst_19 = arith.constant dense<0xFF800000> : vector<8xf32>
    %60 = vector.multi_reduction <maximumf>, %59, %cst_19 [1] : vector<8x16xf32> to vector<8xf32>
    %61 = vector.shape_cast %60 : vector<8xf32> to vector<8x1xf32>
    %62 = vector.broadcast %61 : vector<8x1xf32> to vector<8x16xf32>
    %63 = arith.subf %59, %62 : vector<8x16xf32>
    %64 = math.exp %63 : vector<8x16xf32>
    %65 = arith.truncf %64 : vector<8x16xf32> to vector<8x16xbf16>
    %cst_20 = arith.constant dense<0.000000e+00> : vector<8x8xf32>
    %66 = tpu.matmul %65, %58, %cst_20 {dimension_numbers = #tpu.dot_dimension_numbers<[1], [0], [0], [1], [0, 0, 1, 1], [], []>} : vector<8x16xbf16>, vector<16x8xbf16>, vector<8x8xf32> -> vector<8x8xf32>
    %cst_21 = arith.constant dense<0.000000e+00> : vector<8xf32>
    %67 = vector.multi_reduction <add>, %64, %cst_21 [1] : vector<8x16xf32> to vector<8xf32>
    %68 = vector.shape_cast %67 : vector<8xf32> to vector<8x1xf32>
    %69 = tpu.reciprocal %68 {approx = true} : vector<8x1xf32> -> vector<8x1xf32>
    %70 = vector.broadcast %69 : vector<8x1xf32> to vector<8x8xf32>
    %71 = arith.mulf %66, %70 : vector<8x8xf32>
    %72 = arith.truncf %71 : vector<8x8xf32> to vector<8x8xbf16>
    %c0_22 = arith.constant 0 : index
    %c24 = arith.constant 24 : index
    %73 = vector.load %arg3[%c0_22, %c24] : memref<8x32xbf16, #tpu.memory_space<vmem>>, vector<8x8xbf16>
    tpu.vector_store %arg3[%c0_22, %c24], %72 {strides = array<i32>} : memref<8x32xbf16, #tpu.memory_space<vmem>>, vector<8x8xbf16>,
    return
  }
  func.func @transform_0(%arg0: i32) -> (i32, i32) {
    %c0_i32 = arith.constant 0 : i32
    %c0_i32_0 = arith.constant 0 : i32
    return %arg0, %c0_i32 : i32, i32
  }
  func.func @transform_1(%arg0: i32) -> (i32, i32) {
    %c0_i32 = arith.constant 0 : i32
    %c0_i32_0 = arith.constant 0 : i32
    return %arg0, %c0_i32 : i32, i32
  }
  func.func @transform_2(%arg0: i32) -> (i32, i32) {
    %c0_i32 = arith.constant 0 : i32
    %c0_i32_0 = arith.constant 0 : i32
    return %arg0, %c0_i32 : i32, i32
  }
}

module attributes {stable_mosaic.version = 11 : i64} {
  func.func @_ln_matmul_kernel(%arg0: i32, %arg1: i32, %arg2: memref<16x32xf32, #tpu.memory_space<vmem>>, %arg3: memref<1x32xf32, #tpu.memory_space<vmem>>, %arg4: memref<1x32xf32, #tpu.memory_space<vmem>>, %arg5: memref<32x128xbf16, #tpu.memory_space<vmem>>, %arg6: memref<1x128xf32, #tpu.memory_space<vmem>>, %arg7: memref<16x128xbf16, #tpu.memory_space<vmem>>, %arg8: memref<16x32xbf16, #tpu.memory_space<vmem>>) attributes {dimension_semantics = [#tpu.dimension_semantics<parallel>, #tpu.dimension_semantics<arbitrary>], iteration_bounds = array<i64: 1, 1>, scalar_prefetch = 0 : i64, scratch_operands = 1 : i64, tpu.core_type = #tpu.core_type<tc>, window_params = [{transform_indices = @transform_0, window_bounds = array<i64: 16, 32>}, {pipeline_mode = #tpu.pipeline_mode<synchronous>, transform_indices = @transform_1, window_bounds = array<i64: 1, 32>}, {pipeline_mode = #tpu.pipeline_mode<synchronous>, transform_indices = @transform_2, window_bounds = array<i64: 1, 32>}, {transform_indices = @transform_3, window_bounds = array<i64: 32, 128>}, {transform_indices = @transform_4, window_bounds = array<i64: 1, 128>}, {transform_indices = @transform_5, window_bounds = array<i64: 16, 128>}]} {
    %c0_i32 = arith.constant 0 : i32
    %0 = arith.cmpi eq, %arg1, %c0_i32 : i32
    %1 = arith.extui %0 : i1 to i32
    %c0_i32_0 = arith.constant 0 : i32
    %2 = arith.cmpi ne, %1, %c0_i32_0 : i32
    scf.if %2 {
      %c0_11 = arith.constant 0 : index
      %c0_12 = arith.constant 0 : index
      %19 = vector.load %arg2[%c0_11, %c0_12] : memref<16x32xf32, #tpu.memory_space<vmem>>, vector<16x32xf32>
      %cst_13 = arith.constant dense<0.000000e+00> : vector<16xf32>
      %20 = vector.multi_reduction <add>, %19, %cst_13 [1] : vector<16x32xf32> to vector<16xf32>
      %21 = vector.shape_cast %20 : vector<16xf32> to vector<16x1xf32>
      %cst_14 = arith.constant 3.200000e+01 : f32
      %22 = vector.broadcast %cst_14 : f32 to vector<16x1xf32>
      %23 = arith.divf %21, %22 : vector<16x1xf32>
      %24 = vector.broadcast %23 : vector<16x1xf32> to vector<16x32xf32>
      %25 = arith.subf %19, %24 : vector<16x32xf32>
      %26 = arith.mulf %25, %25 : vector<16x32xf32>
      %cst_15 = arith.constant dense<0.000000e+00> : vector<16xf32>
      %27 = vector.multi_reduction <add>, %26, %cst_15 [1] : vector<16x32xf32> to vector<16xf32>
      %28 = vector.shape_cast %27 : vector<16xf32> to vector<16x1xf32>
      %cst_16 = arith.constant 3.200000e+01 : f32
      %29 = vector.broadcast %cst_16 : f32 to vector<16x1xf32>
      %30 = arith.divf %28, %29 : vector<16x1xf32>
      %31 = vector.broadcast %23 : vector<16x1xf32> to vector<16x32xf32>
      %32 = arith.subf %19, %31 : vector<16x32xf32>
      %cst_17 = arith.constant 9.99999974E-6 : f32
      %33 = vector.broadcast %cst_17 : f32 to vector<16x1xf32>
      %34 = arith.addf %30, %33 : vector<16x1xf32>
      %35 = math.rsqrt %34 : vector<16x1xf32>
      %36 = vector.broadcast %35 : vector<16x1xf32> to vector<16x32xf32>
      %37 = arith.mulf %32, %36 : vector<16x32xf32>
      %c0_18 = arith.constant 0 : index
      %c0_19 = arith.constant 0 : index
      %38 = vector.load %arg3[%c0_18, %c0_19] : memref<1x32xf32, #tpu.memory_space<vmem>>, vector<1x32xf32>
      %39 = vector.broadcast %38 : vector<1x32xf32> to vector<16x32xf32>
      %40 = arith.mulf %37, %39 : vector<16x32xf32>
      %c0_20 = arith.constant 0 : index
      %c0_21 = arith.constant 0 : index
      %41 = vector.load %arg4[%c0_20, %c0_21] : memref<1x32xf32, #tpu.memory_space<vmem>>, vector<1x32xf32>
      %42 = vector.broadcast %41 : vector<1x32xf32> to vector<16x32xf32>
      %43 = arith.addf %40, %42 : vector<16x32xf32>
      %44 = arith.truncf %43 : vector<16x32xf32> to vector<16x32xbf16>
      %c0_22 = arith.constant 0 : index
      %c0_23 = arith.constant 0 : index
      %45 = vector.load %arg8[%c0_22, %c0_23] : memref<16x32xbf16, #tpu.memory_space<vmem>>, vector<16x32xbf16>
      tpu.vector_store %arg8[%c0_22, %c0_23], %44 {strides = array<i32>} : memref<16x32xbf16, #tpu.memory_space<vmem>>, vector<16x32xbf16>,
    } else {
    }
    %c0 = arith.constant 0 : index
    %c0_1 = arith.constant 0 : index
    %3 = vector.load %arg8[%c0, %c0_1] : memref<16x32xbf16, #tpu.memory_space<vmem>>, vector<16x32xbf16>
    %c0_2 = arith.constant 0 : index
    %c0_3 = arith.constant 0 : index
    %4 = vector.load %arg5[%c0_2, %c0_3] : memref<32x128xbf16, #tpu.memory_space<vmem>>, vector<32x128xbf16>
    %cst = arith.constant dense<0.000000e+00> : vector<16x128xf32>
    %5 = tpu.matmul %3, %4, %cst {dimension_numbers = #tpu.dot_dimension_numbers<[1], [0], [0], [1], [0, 0, 1, 1], [], []>} : vector<16x32xbf16>, vector<32x128xbf16>, vector<16x128xf32> -> vector<16x128xf32>
    %c0_4 = arith.constant 0 : index
    %c0_5 = arith.constant 0 : index
    %6 = vector.load %arg6[%c0_4, %c0_5] : memref<1x128xf32, #tpu.memory_space<vmem>>, vector<1x128xf32>
    %7 = vector.broadcast %6 : vector<1x128xf32> to vector<16x128xf32>
    %8 = arith.addf %5, %7 : vector<16x128xf32>
    %cst_6 = arith.constant 5.000000e-01 : f32
    %9 = vector.broadcast %cst_6 : f32 to vector<16x128xf32>
    %10 = arith.mulf %9, %8 : vector<16x128xf32>
    %cst_7 = arith.constant 0.707106769 : f32
    %11 = vector.broadcast %cst_7 : f32 to vector<16x128xf32>
    %12 = arith.mulf %8, %11 : vector<16x128xf32>
    %13 = math.erf %12 : vector<16x128xf32>
    %cst_8 = arith.constant 1.000000e+00 : f32
    %14 = vector.broadcast %cst_8 : f32 to vector<16x128xf32>
    %15 = arith.addf %14, %13 : vector<16x128xf32>
    %16 = arith.mulf %10, %15 : vector<16x128xf32>
    %17 = arith.truncf %16 : vector<16x128xf32> to vector<16x128xbf16>
    %c0_9 = arith.constant 0 : index
    %c0_10 = arith.constant 0 : index
    %18 = vector.load %arg7[%c0_9, %c0_10] : memref<16x128xbf16, #tpu.memory_space<vmem>>, vector<16x128xbf16>
    tpu.vector_store %arg7[%c0_9, %c0_10], %17 {strides = array<i32>} : memref<16x128xbf16, #tpu.memory_space<vmem>>, vector<16x128xbf16>,
    return
  }
  func.func @transform_0(%arg0: i32, %arg1: i32) -> (i32, i32) {
    %c0_i32 = arith.constant 0 : i32
    %c0_i32_0 = arith.constant 0 : i32
    return %arg0, %c0_i32 : i32, i32
  }
  func.func @transform_1(%arg0: i32, %arg1: i32) -> (i32, i32) {
    %c0_i32 = arith.constant 0 : i32
    %c0_i32_0 = arith.constant 0 : i32
    %c0_i32_1 = arith.constant 0 : i32
    return %c0_i32, %c0_i32_0 : i32, i32
  }
  func.func @transform_2(%arg0: i32, %arg1: i32) -> (i32, i32) {
    %c0_i32 = arith.constant 0 : i32
    %c0_i32_0 = arith.constant 0 : i32
    %c0_i32_1 = arith.constant 0 : i32
    return %c0_i32, %c0_i32_0 : i32, i32
  }
  func.func @transform_3(%arg0: i32, %arg1: i32) -> (i32, i32) {
    %c0_i32 = arith.constant 0 : i32
    %c0_i32_0 = arith.constant 0 : i32
    return %c0_i32, %arg1 : i32, i32
  }
  func.func @transform_4(%arg0: i32, %arg1: i32) -> (i32, i32) {
    %c0_i32 = arith.constant 0 : i32
    %c0_i32_0 = arith.constant 0 : i32
    return %c0_i32, %arg1 : i32, i32
  }
  func.func @transform_5(%arg0: i32, %arg1: i32) -> (i32, i32) {
    %c0_i32 = arith.constant 0 : i32
    return %arg0, %arg1 : i32, i32
  }
}

module attributes {stable_mosaic.version = 11 : i64} {
  func.func @_matmul_k1_kernel(%arg0: i32, %arg1: i32, %arg2: memref<16x128xbf16, #tpu.memory_space<vmem>>, %arg3: memref<128x32xbf16, #tpu.memory_space<vmem>>, %arg4: memref<1x32xf32, #tpu.memory_space<vmem>>, %arg5: memref<16x32xf32, #tpu.memory_space<vmem>>, %arg6: memref<16x32xf32, #tpu.memory_space<vmem>>) attributes {dimension_semantics = [#tpu.dimension_semantics<parallel>, #tpu.dimension_semantics<parallel>], iteration_bounds = array<i64: 1, 1>, scalar_prefetch = 0 : i64, scratch_operands = 0 : i64, tpu.core_type = #tpu.core_type<tc>, window_params = [{transform_indices = @transform_0, window_bounds = array<i64: 16, 128>}, {transform_indices = @transform_1, window_bounds = array<i64: 128, 32>}, {transform_indices = @transform_2, window_bounds = array<i64: 1, 32>}, {transform_indices = @transform_3, window_bounds = array<i64: 16, 32>}, {transform_indices = @transform_4, window_bounds = array<i64: 16, 32>}]} {
    %c0 = arith.constant 0 : index
    %c0_0 = arith.constant 0 : index
    %0 = vector.load %arg2[%c0, %c0_0] : memref<16x128xbf16, #tpu.memory_space<vmem>>, vector<16x128xbf16>
    %c0_1 = arith.constant 0 : index
    %c0_2 = arith.constant 0 : index
    %1 = vector.load %arg3[%c0_1, %c0_2] : memref<128x32xbf16, #tpu.memory_space<vmem>>, vector<128x32xbf16>
    %cst = arith.constant dense<0.000000e+00> : vector<16x32xf32>
    %2 = tpu.matmul %0, %1, %cst {dimension_numbers = #tpu.dot_dimension_numbers<[1], [0], [0], [1], [0, 0, 1, 1], [], []>} : vector<16x128xbf16>, vector<128x32xbf16>, vector<16x32xf32> -> vector<16x32xf32>
    %c0_3 = arith.constant 0 : index
    %c0_4 = arith.constant 0 : index
    %3 = vector.load %arg4[%c0_3, %c0_4] : memref<1x32xf32, #tpu.memory_space<vmem>>, vector<1x32xf32>
    %4 = vector.broadcast %3 : vector<1x32xf32> to vector<16x32xf32>
    %5 = arith.addf %2, %4 : vector<16x32xf32>
    %c0_5 = arith.constant 0 : index
    %c0_6 = arith.constant 0 : index
    %6 = vector.load %arg5[%c0_5, %c0_6] : memref<16x32xf32, #tpu.memory_space<vmem>>, vector<16x32xf32>
    %7 = arith.addf %5, %6 : vector<16x32xf32>
    %c0_7 = arith.constant 0 : index
    %c0_8 = arith.constant 0 : index
    %8 = vector.load %arg6[%c0_7, %c0_8] : memref<16x32xf32, #tpu.memory_space<vmem>>, vector<16x32xf32>
    tpu.vector_store %arg6[%c0_7, %c0_8], %7 {strides = array<i32>} : memref<16x32xf32, #tpu.memory_space<vmem>>, vector<16x32xf32>,
    return
  }
  func.func @transform_0(%arg0: i32, %arg1: i32) -> (i32, i32) {
    %c0_i32 = arith.constant 0 : i32
    %c0_i32_0 = arith.constant 0 : i32
    return %arg0, %c0_i32 : i32, i32
  }
  func.func @transform_1(%arg0: i32, %arg1: i32) -> (i32, i32) {
    %c0_i32 = arith.constant 0 : i32
    %c0_i32_0 = arith.constant 0 : i32
    return %c0_i32, %arg1 : i32, i32
  }
  func.func @transform_2(%arg0: i32, %arg1: i32) -> (i32, i32) {
    %c0_i32 = arith.constant 0 : i32
    %c0_i32_0 = arith.constant 0 : i32
    return %c0_i32, %arg1 : i32, i32
  }
  func.func @transform_3(%arg0: i32, %arg1: i32) -> (i32, i32) {
    %c0_i32 = arith.constant 0 : i32
    return %arg0, %arg1 : i32, i32
  }
  func.func @transform_4(%arg0: i32, %arg1: i32) -> (i32, i32) {
    %c0_i32 = arith.constant 0 : i32
    return %arg0, %arg1 : i32, i32
  }
}

module attributes {stable_mosaic.version = 11 : i64} {
  func.func @_ln_matmul_kernel(%arg0: i32, %arg1: i32, %arg2: memref<16x32xf32, #tpu.memory_space<vmem>>, %arg3: memref<1x32xf32, #tpu.memory_space<vmem>>, %arg4: memref<1x32xf32, #tpu.memory_space<vmem>>, %arg5: memref<32x128xbf16, #tpu.memory_space<vmem>>, %arg6: memref<16x128xf32, #tpu.memory_space<vmem>>, %arg7: memref<16x32xbf16, #tpu.memory_space<vmem>>) attributes {dimension_semantics = [#tpu.dimension_semantics<parallel>, #tpu.dimension_semantics<arbitrary>], iteration_bounds = array<i64: 1, 1>, scalar_prefetch = 0 : i64, scratch_operands = 1 : i64, tpu.core_type = #tpu.core_type<tc>, window_params = [{transform_indices = @transform_0, window_bounds = array<i64: 16, 32>}, {pipeline_mode = #tpu.pipeline_mode<synchronous>, transform_indices = @transform_1, window_bounds = array<i64: 1, 32>}, {pipeline_mode = #tpu.pipeline_mode<synchronous>, transform_indices = @transform_2, window_bounds = array<i64: 1, 32>}, {transform_indices = @transform_3, window_bounds = array<i64: 32, 128>}, {transform_indices = @transform_4, window_bounds = array<i64: 16, 128>}]} {
    %c0_i32 = arith.constant 0 : i32
    %0 = arith.cmpi eq, %arg1, %c0_i32 : i32
    %1 = arith.extui %0 : i1 to i32
    %c0_i32_0 = arith.constant 0 : i32
    %2 = arith.cmpi ne, %1, %c0_i32_0 : i32
    scf.if %2 {
      %c0_6 = arith.constant 0 : index
      %c0_7 = arith.constant 0 : index
      %7 = vector.load %arg2[%c0_6, %c0_7] : memref<16x32xf32, #tpu.memory_space<vmem>>, vector<16x32xf32>
      %cst_8 = arith.constant dense<0.000000e+00> : vector<16xf32>
      %8 = vector.multi_reduction <add>, %7, %cst_8 [1] : vector<16x32xf32> to vector<16xf32>
      %9 = vector.shape_cast %8 : vector<16xf32> to vector<16x1xf32>
      %cst_9 = arith.constant 3.200000e+01 : f32
      %10 = vector.broadcast %cst_9 : f32 to vector<16x1xf32>
      %11 = arith.divf %9, %10 : vector<16x1xf32>
      %12 = vector.broadcast %11 : vector<16x1xf32> to vector<16x32xf32>
      %13 = arith.subf %7, %12 : vector<16x32xf32>
      %14 = arith.mulf %13, %13 : vector<16x32xf32>
      %cst_10 = arith.constant dense<0.000000e+00> : vector<16xf32>
      %15 = vector.multi_reduction <add>, %14, %cst_10 [1] : vector<16x32xf32> to vector<16xf32>
      %16 = vector.shape_cast %15 : vector<16xf32> to vector<16x1xf32>
      %cst_11 = arith.constant 3.200000e+01 : f32
      %17 = vector.broadcast %cst_11 : f32 to vector<16x1xf32>
      %18 = arith.divf %16, %17 : vector<16x1xf32>
      %19 = vector.broadcast %11 : vector<16x1xf32> to vector<16x32xf32>
      %20 = arith.subf %7, %19 : vector<16x32xf32>
      %cst_12 = arith.constant 9.99999974E-6 : f32
      %21 = vector.broadcast %cst_12 : f32 to vector<16x1xf32>
      %22 = arith.addf %18, %21 : vector<16x1xf32>
      %23 = math.rsqrt %22 : vector<16x1xf32>
      %24 = vector.broadcast %23 : vector<16x1xf32> to vector<16x32xf32>
      %25 = arith.mulf %20, %24 : vector<16x32xf32>
      %c0_13 = arith.constant 0 : index
      %c0_14 = arith.constant 0 : index
      %26 = vector.load %arg3[%c0_13, %c0_14] : memref<1x32xf32, #tpu.memory_space<vmem>>, vector<1x32xf32>
      %27 = vector.broadcast %26 : vector<1x32xf32> to vector<16x32xf32>
      %28 = arith.mulf %25, %27 : vector<16x32xf32>
      %c0_15 = arith.constant 0 : index
      %c0_16 = arith.constant 0 : index
      %29 = vector.load %arg4[%c0_15, %c0_16] : memref<1x32xf32, #tpu.memory_space<vmem>>, vector<1x32xf32>
      %30 = vector.broadcast %29 : vector<1x32xf32> to vector<16x32xf32>
      %31 = arith.addf %28, %30 : vector<16x32xf32>
      %32 = arith.truncf %31 : vector<16x32xf32> to vector<16x32xbf16>
      %c0_17 = arith.constant 0 : index
      %c0_18 = arith.constant 0 : index
      %33 = vector.load %arg7[%c0_17, %c0_18] : memref<16x32xbf16, #tpu.memory_space<vmem>>, vector<16x32xbf16>
      tpu.vector_store %arg7[%c0_17, %c0_18], %32 {strides = array<i32>} : memref<16x32xbf16, #tpu.memory_space<vmem>>, vector<16x32xbf16>,
    } else {
    }
    %c0 = arith.constant 0 : index
    %c0_1 = arith.constant 0 : index
    %3 = vector.load %arg7[%c0, %c0_1] : memref<16x32xbf16, #tpu.memory_space<vmem>>, vector<16x32xbf16>
    %c0_2 = arith.constant 0 : index
    %c0_3 = arith.constant 0 : index
    %4 = vector.load %arg5[%c0_2, %c0_3] : memref<32x128xbf16, #tpu.memory_space<vmem>>, vector<32x128xbf16>
    %cst = arith.constant dense<0.000000e+00> : vector<16x128xf32>
    %5 = tpu.matmul %3, %4, %cst {dimension_numbers = #tpu.dot_dimension_numbers<[1], [0], [0], [1], [0, 0, 1, 1], [], []>} : vector<16x32xbf16>, vector<32x128xbf16>, vector<16x128xf32> -> vector<16x128xf32>
    %c0_4 = arith.constant 0 : index
    %c0_5 = arith.constant 0 : index
    %6 = vector.load %arg6[%c0_4, %c0_5] : memref<16x128xf32, #tpu.memory_space<vmem>>, vector<16x128xf32>
    tpu.vector_store %arg6[%c0_4, %c0_5], %5 {strides = array<i32>} : memref<16x128xf32, #tpu.memory_space<vmem>>, vector<16x128xf32>,
    return
  }
  func.func @transform_0(%arg0: i32, %arg1: i32) -> (i32, i32) {
    %c0_i32 = arith.constant 0 : i32
    %c0_i32_0 = arith.constant 0 : i32
    return %arg0, %c0_i32 : i32, i32
  }
  func.func @transform_1(%arg0: i32, %arg1: i32) -> (i32, i32) {
    %c0_i32 = arith.constant 0 : i32
    %c0_i32_0 = arith.constant 0 : i32
    %c0_i32_1 = arith.constant 0 : i32
    return %c0_i32, %c0_i32_0 : i32, i32
  }
  func.func @transform_2(%arg0: i32, %arg1: i32) -> (i32, i32) {
    %c0_i32 = arith.constant 0 : i32
    %c0_i32_0 = arith.constant 0 : i32
    %c0_i32_1 = arith.constant 0 : i32
    return %c0_i32, %c0_i32_0 : i32, i32
  }
  func.func @transform_3(%arg0: i32, %arg1: i32) -> (i32, i32) {
    %c0_i32 = arith.constant 0 : i32
    %c0_i32_0 = arith.constant 0 : i32
    return %c0_i32, %arg1 : i32, i32
  }
  func.func @transform_4(%arg0: i32, %arg1: i32) -> (i32, i32) {
    %c0_i32 = arith.constant 0 : i32
    return %arg0, %arg1 : i32, i32
  }
}

</mosaic_0001>

<llo_original>
// kernel: text_decoder_forward.21
$region0: #{text_decoder_forward.21}
  #allocation0 [shape = 'u32[]', space=smem, size = 0x4, offset = 0x4, fixed_abs, tag = 'smem constant byte address 0x4 - core index']
  #allocation1 [shape = 'u32[144,128]{1,0:T(1,128)}', space=vmem, size = 0x12000, scoped, tag = 'internal scratch']
  %s0 = inlined_call_operand.vmem [shape: bf16[16,32], index: 0, kind: input, shape index: {}]
  %s1 = inlined_call_operand.vmem [shape: bf16[32,32], index: 1, kind: input, shape index: {}]
  %s2 = inlined_call_operand.vmem [shape: f32[1,32], index: 2, kind: input, shape index: {}]
  %s3 = inlined_call_operand.vmem [shape: f32[16,32], index: 3, kind: input, shape index: {}]
  %s4 = inlined_call_operand.vmem [shape: f32[16,32], index: 4, kind: output, shape index: {}]
  %s5 = sld [smem:[#allocation0]]
  $region26: #{text_decoder_forward.21} parent=0
    _
  %s7 = ssub.s32 1, %s5
  %s8 = scalar_select 0, %s7, %s5
  // Predicated region
  $region2: #{text_decoder_forward.21} parent=0 // pred_check
    _
  $region3: #{text_decoder_forward.21} parent=0 // pred_check_branch
    %10 = sbr.rel (0) target = $region5
  $region4: #{text_decoder_forward.21} parent=0 // pred_region
    _
  $region5: #{text_decoder_forward.21} parent=0 // pred_fallthru
    _
  // Predicated region
  $region6: #{text_decoder_forward.21} parent=0 // pred_check
    _
  $region7: #{text_decoder_forward.21} parent=0 // pred_check_branch
    %12 = sbr.rel (0) target = $region9
  $region8: #{text_decoder_forward.21} parent=0 // pred_region
    _
  $region9: #{text_decoder_forward.21} parent=0 // pred_fallthru
    _
  // Predicated region
  $region10: #{text_decoder_forward.21} parent=0 // pred_check
    _
  $region11: #{text_decoder_forward.21} parent=0 // pred_check_branch
    %14 = sbr.rel (0) target = $region13
  $region12: #{text_decoder_forward.21} parent=0 // pred_region
    _
  $region13: #{text_decoder_forward.21} parent=0 // pred_fallthru
    _
  // Predicated region
  $region14: #{text_decoder_forward.21} parent=0 // pred_check
    _
  $region15: #{text_decoder_forward.21} parent=0 // pred_check_branch
    %16 = sbr.rel (0) target = $region17
  $region16: #{text_decoder_forward.21} parent=0 // pred_region
    _
  $region17: #{text_decoder_forward.21} parent=0 // pred_fallthru
    _
  %v18 = vld [vmem:[%s0] sm:$0xf]
  %v19 = vld [vmem:[%s0 + $0x4] sm:$0xf]
  %v20 = vld [vmem:[%s1] sm:$0xf]
  %v21 = vld [vmem:[%s1 + $0x4] sm:$0xf]
  %v22 = vld [vmem:[%s1 + $0x8] sm:$0xf]
  %v23 = vld [vmem:[%s1 + $0xc] sm:$0xf]
  %v24 = vld [vmem:[%s2] sm:$0x1]
  %v26 = vlaneseq
  %v27 = vshrl.u32 %v26, 7
  %v28 = vsub.s32 0, %v27
  %v29 = vrot.slane %v24, %v28
  %v33 = vunpack.c.l.b16 %v18
  %v34 = vunpack.c.l.b16 %v19
  %v35 = vpack.c.b16 %v34, %v33
  %v40 = vunpack.c.l.b16 %v20
  %v41 = vunpack.c.l.b16 %v21
  %v42 = vunpack.c.l.b16 %v22
  %v43 = vunpack.c.l.b16 %v23
  %v44 = vpack.c.b16 %v41, %v40
  %v45 = vpack.c.b16 %v43, %v42
  %vm48 = vcmask 261120
  %v50 = vsel %vm48, %v35, 0
  %52 = vmatprep.subr.bf16.mxu0 0
  %53 = vmatpush1.bf16.msra.mxu0 0
  %54 = vmatprep.subr.bf16.mxu0 0
  %55 = vmatpush1.bf16.msra.mxu0 0
  %56 = vmatprep.subr.bf16.mxu0 0
  %57 = vmatpush1.bf16.msra.mxu0 0
  %58 = vmatprep.subr.bf16.mxu0 0
  %59 = vmatpush1.bf16.msra.mxu0 0
  %60 = vmatprep.subr.bf16.mxu0 0
  %61 = vmatpush1.bf16.msra.mxu0 0
  %62 = vmatprep.subr.bf16.mxu0 0
  %63 = vmatpush1.bf16.msra.mxu0 0
  %64 = vmatprep.subr.bf16.mxu0 0
  %65 = vmatpush1.bf16.msra.mxu0 %v45
  %66 = vmatprep.subr.bf16.mxu0 0
  %67 = vmatpush1.bf16.msra.mxu0 %v44
  %68 = vmatprep.subr.bf16.mxu0 0
  %69 = vmatpush2.bf16.msra.mxu0 0
  %70 = vmatprep.subr.bf16.mxu0 0
  %71 = vmatpush2.bf16.msra.mxu0 0
  %72 = vmatprep.subr.bf16.mxu0 0
  %73 = vmatpush2.bf16.msra.mxu0 0
  %74 = vmatprep.subr.bf16.mxu0 0
  %75 = vmatpush2.bf16.msra.mxu0 0
  %76 = vmatprep.subr.bf16.mxu0 0
  %77 = vmatpush2.bf16.msra.mxu0 0
  %78 = vmatprep.subr.bf16.mxu0 0
  %79 = vmatpush2.bf16.msra.mxu0 0
  %80 = vmatprep.subr.bf16.mxu0 0
  %81 = vmatpush2.bf16.msra.mxu0 0
  %82 = vmatprep.subr.bf16.mxu0 0
  %83 = vmatpush2.bf16.msra.mxu0 0
  %84 = vmatprep.mubr.bf16.mxu0 0
  %85 = vmatmul.mubr.bf16.gmra.mxu0 %v50
  %v86 = vpop.f32.mrf.mxu0
  %v87 = vadd.f32 %v29, %v86
  %v88 = vpop.f32.mrf.mxu0
  %v89 = vpop.f32.mrf.mxu0
  %v90 = vadd.f32 %v29, %v89
  %v91 = vpop.f32.mrf.mxu0
  %92 = vdwg.mxu0
  %v93 = vld [vmem:[%s3] sm:$0xff]
  %v94 = vld [vmem:[%s3 + $0x8] sm:$0xff]
  %v95 = vadd.f32 %v87, %v93
  %v96 = vadd.f32 %v90, %v94
  %97 = vst.msk [vmem:[%s4] sm:$0xff] %vm48, %v95
  %98 = vst.msk [vmem:[%s4 + $0x8] sm:$0xff] %vm48, %v96
  // Predicated region
  $region18: #{text_decoder_forward.21} parent=0 // pred_check
    _
  $region19: #{text_decoder_forward.21} parent=0 // pred_check_branch
    %100 = sbr.rel (0) target = $region21
  $region20: #{text_decoder_forward.21} parent=0 // pred_region
    _
  $region21: #{text_decoder_forward.21} parent=0 // pred_fallthru
    _
  // Predicated region
  $region22: #{text_decoder_forward.21} parent=0 // pred_check
    _
  $region23: #{text_decoder_forward.21} parent=0 // pred_check_branch
    %102 = sbr.rel (0) target = $region25
  $region24: #{text_decoder_forward.21} parent=0 // pred_region
    _
  $region25: #{text_decoder_forward.21} parent=0 // pred_fallthru
    _

// kernel: text_decoder_forward.19
$region0: #{text_decoder_forward.19}
  #allocation0 [shape = 'u32[]', space=smem, size = 0x4, offset = 0x4, fixed_abs, tag = 'smem constant byte address 0x4 - core index']
  #allocation1 [shape = 'u32[144,128]{1,0:T(1,128)}', space=vmem, size = 0x12000, scoped, tag = 'internal scratch']
  #allocation2 [shape = 'bf16[16,32]{1,0:T(8,128)(2,1)}', space=vmem, size = 0x1000, scoped, tag = 'scratch operand']
  %s0 = inlined_call_operand.vmem [shape: f32[16,32], index: 0, kind: input, shape index: {}]
  %s1 = inlined_call_operand.vmem [shape: f32[1,32], index: 1, kind: input, shape index: {}]
  %s2 = inlined_call_operand.vmem [shape: f32[1,32], index: 2, kind: input, shape index: {}]
  %s3 = inlined_call_operand.vmem [shape: bf16[32,96], index: 3, kind: input, shape index: {}]
  %s4 = inlined_call_operand.vmem [shape: f32[1,96], index: 4, kind: input, shape index: {}]
  %s5 = inlined_call_operand.vmem [shape: bf16[16,96], index: 5, kind: output, shape index: {}]
  %s6 = sld [smem:[#allocation0]]
  $region34: #{text_decoder_forward.19} parent=0
    _
  %s8 = ssub.s32 1, %s6
  %s9 = scalar_select 0, %s8, %s6
  // Predicated region
  $region2: #{text_decoder_forward.19} parent=0 // pred_check
    _
  $region3: #{text_decoder_forward.19} parent=0 // pred_check_branch
    %11 = sbr.rel (0) target = $region5
  $region4: #{text_decoder_forward.19} parent=0 // pred_region
    _
  $region5: #{text_decoder_forward.19} parent=0 // pred_fallthru
    _
  // Predicated region
  $region6: #{text_decoder_forward.19} parent=0 // pred_check
    _
  $region7: #{text_decoder_forward.19} parent=0 // pred_check_branch
    %13 = sbr.rel (0) target = $region9
  $region8: #{text_decoder_forward.19} parent=0 // pred_region
    _
  $region9: #{text_decoder_forward.19} parent=0 // pred_fallthru
    _
  // Predicated region
  $region10: #{text_decoder_forward.19} parent=0 // pred_check
    _
  $region11: #{text_decoder_forward.19} parent=0 // pred_check_branch
    %15 = sbr.rel (0) target = $region13
  $region12: #{text_decoder_forward.19} parent=0 // pred_region
    _
  $region13: #{text_decoder_forward.19} parent=0 // pred_fallthru
    _
  // Predicated region
  $region14: #{text_decoder_forward.19} parent=0 // pred_check
    _
  $region15: #{text_decoder_forward.19} parent=0 // pred_check_branch
    %17 = sbr.rel (0) target = $region17
  $region16: #{text_decoder_forward.19} parent=0 // pred_region
    _
  $region17: #{text_decoder_forward.19} parent=0 // pred_fallthru
    _
  // Predicated region
  $region18: #{text_decoder_forward.19} parent=0 // pred_check
    _
  $region19: #{text_decoder_forward.19} parent=0 // pred_check_branch
    %19 = sbr.rel (0) target = $region21
  $region20: #{text_decoder_forward.19} parent=0 // pred_region
    _
  $region21: #{text_decoder_forward.19} parent=0 // pred_fallthru
    _
  %p21 = scmp.eq.s32.totalorder 0, 0
  // Predicated region
  $region22: #{text_decoder_forward.19} parent=0 // pred_check
    %p22 = pneg %p21
  $region23: #{text_decoder_forward.19} parent=0 // pred_check_branch
    %24 = sbr.rel (%p22) target = $region25
  $region24: #{text_decoder_forward.19} parent=0 // pred_region
    %v25 = vld [vmem:[%s0] sm:$0xff]
    %v26 = vld [vmem:[%s0 + $0x8] sm:$0xff]
    %vm27 = vcmask 261120
    %v28 = vsel %vm27, %v25, 0.0
    %29 = vadd.xlane.f32.xlu0 %v28
    %v30 = vpop.xlane.xlu0 %29
    %v31 = vsel %vm27, %v26, 0.0
    %32 = vadd.xlane.f32.xlu0 %v31
    %v33 = vpop.xlane.xlu0 %32
    %v34 = vrcp.pop 32.0
    %v35 = vmul.f32 %v30, %v34
    %v36 = vmul.f32 %v33, %v34
    %v37 = vsub.f32 %v25, %v35
    %v38 = vsub.f32 %v26, %v36
    %v39 = vmul.f32 %v37, %v37
    %v40 = vmul.f32 %v38, %v38
    %v41 = vsel %vm27, %v39, 0.0
    %42 = vadd.xlane.f32.xlu0 %v41
    %v43 = vpop.xlane.xlu0 %42
    %v44 = vsel %vm27, %v40, 0.0
    %45 = vadd.xlane.f32.xlu0 %v44
    %v46 = vpop.xlane.xlu0 %45
    %v47 = vmul.f32 %v43, %v34
    %v48 = vmul.f32 %v46, %v34
    %v49 = vadd.f32 %v47, 1e-05
    %v50 = vadd.f32 %v48, 1e-05
    %v51 = vrsqrt.pop %v49
    %v52 = vrsqrt.pop %v50
    %v53 = vmul.f32 %v37, %v51
    %v54 = vmul.f32 %v38, %v52
    %v55 = vld [vmem:[%s1] sm:$0x1]
    %v57 = vlaneseq
    %v58 = vshrl.u32 %v57, 7
    %v59 = vsub.s32 0, %v58
    %v60 = vrot.slane %v55, %v59
    %v62 = vmul.f32 %v53, %v60
    %v63 = vmul.f32 %v54, %v60
    %v64 = vld [vmem:[%s2] sm:$0x1]
    %v66 = vlaneseq
    %v67 = vshrl.u32 %v66, 7
    %v68 = vsub.s32 0, %v67
    %v69 = vrot.slane %v64, %v68
    %v71 = vadd.f32 %v62, %v69
    %v72 = vadd.f32 %v63, %v69
    %v73 = vpack.c.bf16 %v72, %v71
    %v75 = vunpack.c.l.b16 %v73
    %v76 = vunpack.c.h.b16 %v73
    %v77 = vpack.c.b16 %v75, %v75
    %v78 = vpack.c.b16 %v76, %v76
    %vm81 = vcmask 257024
    %82 = vst.msk [vmem:[#allocation2] sm:$0xf] %vm81, %v77
    %83 = vst.msk [vmem:[#allocation2 + $0x4] sm:$0xf] %vm81, %v78
  $region25: #{text_decoder_forward.19} parent=0 // pred_fallthru
    _
  %v84 = vld [vmem:[#allocation2] sm:$0xf]
  %v85 = vld [vmem:[#allocation2 + $0x4] sm:$0xf]
  %v86 = vld [vmem:[%s3] sm:$0xf]
  %v87 = vld [vmem:[%s3 + $0x4] sm:$0xf]
  %v88 = vld [vmem:[%s3 + $0x8] sm:$0xf]
  %v89 = vld [vmem:[%s3 + $0xc] sm:$0xf]
  %v90 = vld [vmem:[%s4] sm:$0x1]
  %v92 = vlaneseq
  %v93 = vshrl.u32 %v92, 7
  %v94 = vsub.s32 0, %v93
  %v95 = vrot.slane %v90, %v94
  %v99 = vunpack.c.l.b16 %v84
  %v100 = vunpack.c.l.b16 %v85
  %v101 = vpack.c.b16 %v100, %v99
  %v106 = vunpack.c.l.b16 %v86
  %v107 = vunpack.c.l.b16 %v87
  %v108 = vunpack.c.l.b16 %v88
  %v109 = vunpack.c.l.b16 %v89
  %v110 = vpack.c.b16 %v107, %v106
  %v111 = vpack.c.b16 %v109, %v108
  %vm114 = vcmask 261120
  %v116 = vsel %vm114, %v101, 0
  %118 = vmatprep.subr.bf16.mxu0 0
  %119 = vmatpush1.bf16.msra.mxu0 0
  %120 = vmatprep.subr.bf16.mxu0 0
  %121 = vmatpush1.bf16.msra.mxu0 0
  %122 = vmatprep.subr.bf16.mxu0 0
  %123 = vmatpush1.bf16.msra.mxu0 0
  %124 = vmatprep.subr.bf16.mxu0 0
  %125 = vmatpush1.bf16.msra.mxu0 0
  %126 = vmatprep.subr.bf16.mxu0 0
  %127 = vmatpush1.bf16.msra.mxu0 0
  %128 = vmatprep.subr.bf16.mxu0 0
  %129 = vmatpush1.bf16.msra.mxu0 0
  %130 = vmatprep.subr.bf16.mxu0 0
  %131 = vmatpush1.bf16.msra.mxu0 %v111
  %132 = vmatprep.subr.bf16.mxu0 0
  %133 = vmatpush1.bf16.msra.mxu0 %v110
  %134 = vmatprep.subr.bf16.mxu0 0
  %135 = vmatpush2.bf16.msra.mxu0 0
  %136 = vmatprep.subr.bf16.mxu0 0
  %137 = vmatpush2.bf16.msra.mxu0 0
  %138 = vmatprep.subr.bf16.mxu0 0
  %139 = vmatpush2.bf16.msra.mxu0 0
  %140 = vmatprep.subr.bf16.mxu0 0
  %141 = vmatpush2.bf16.msra.mxu0 0
  %142 = vmatprep.subr.bf16.mxu0 0
  %143 = vmatpush2.bf16.msra.mxu0 0
  %144 = vmatprep.subr.bf16.mxu0 0
  %145 = vmatpush2.bf16.msra.mxu0 0
  %146 = vmatprep.subr.bf16.mxu0 0
  %147 = vmatpush2.bf16.msra.mxu0 0
  %148 = vmatprep.subr.bf16.mxu0 0
  %149 = vmatpush2.bf16.msra.mxu0 0
  %150 = vmatprep.mubr.bf16.mxu0 0
  %151 = vmatmul.mubr.bf16.gmra.mxu0 %v116
  %v152 = vpop.f32.mrf.mxu0
  %v153 = vadd.f32 %v95, %v152
  %v154 = vpop.f32.mrf.mxu0
  %v155 = vpop.f32.mrf.mxu0
  %v156 = vadd.f32 %v95, %v155
  %v157 = vpop.f32.mrf.mxu0
  %158 = vdwg.mxu0
  %v159 = vpack.c.bf16 %v156, %v153
  %v161 = vunpack.c.l.b16 %v159
  %v162 = vunpack.c.h.b16 %v159
  %v163 = vpack.c.b16 %v161, %v161
  %v164 = vpack.c.b16 %v162, %v162
  %vm167 = vcmask 781312
  %168 = vst.msk [vmem:[%s5] sm:$0xf] %vm167, %v163
  %169 = vst.msk [vmem:[%s5 + $0x4] sm:$0xf] %vm167, %v164
  // Predicated region
  $region26: #{text_decoder_forward.19} parent=0 // pred_check
    _
  $region27: #{text_decoder_forward.19} parent=0 // pred_check_branch
    %171 = sbr.rel (0) target = $region29
  $region28: #{text_decoder_forward.19} parent=0 // pred_region
    _
  $region29: #{text_decoder_forward.19} parent=0 // pred_fallthru
    _
  // Predicated region
  $region30: #{text_decoder_forward.19} parent=0 // pred_check
    _
  $region31: #{text_decoder_forward.19} parent=0 // pred_check_branch
    %173 = sbr.rel (0) target = $region33
  $region32: #{text_decoder_forward.19} parent=0 // pred_region
    _
  $region33: #{text_decoder_forward.19} parent=0 // pred_fallthru
    _

// kernel: text_decoder_forward.22
$region0: #{text_decoder_forward.22}
  #allocation0 [shape = 'u32[]', space=smem, size = 0x4, offset = 0x4, fixed_abs, tag = 'smem constant byte address 0x4 - core index']
  #allocation1 [shape = 'u32[144,128]{1,0:T(1,128)}', space=vmem, size = 0x12000, scoped, tag = 'internal scratch']
  #allocation2 [shape = 'bf16[16,32]{1,0:T(8,128)(2,1)}', space=vmem, size = 0x1000, scoped, tag = 'scratch operand']
  %s0 = inlined_call_operand.vmem [shape: f32[16,32], index: 0, kind: input, shape index: {}]
  %s1 = inlined_call_operand.vmem [shape: f32[1,32], index: 1, kind: input, shape index: {}]
  %s2 = inlined_call_operand.vmem [shape: f32[1,32], index: 2, kind: input, shape index: {}]
  %s3 = inlined_call_operand.vmem [shape: bf16[32,32], index: 3, kind: input, shape index: {}]
  %s4 = inlined_call_operand.vmem [shape: f32[1,32], index: 4, kind: input, shape index: {}]
  %s5 = inlined_call_operand.vmem [shape: bf16[16,32], index: 5, kind: output, shape index: {}]
  %s6 = sld [smem:[#allocation0]]
  $region34: #{text_decoder_forward.22} parent=0
    _
  %s8 = ssub.s32 1, %s6
  %s9 = scalar_select 0, %s8, %s6
  // Predicated region
  $region2: #{text_decoder_forward.22} parent=0 // pred_check
    _
  $region3: #{text_decoder_forward.22} parent=0 // pred_check_branch
    %11 = sbr.rel (0) target = $region5
  $region4: #{text_decoder_forward.22} parent=0 // pred_region
    _
  $region5: #{text_decoder_forward.22} parent=0 // pred_fallthru
    _
  // Predicated region
  $region6: #{text_decoder_forward.22} parent=0 // pred_check
    _
  $region7: #{text_decoder_forward.22} parent=0 // pred_check_branch
    %13 = sbr.rel (0) target = $region9
  $region8: #{text_decoder_forward.22} parent=0 // pred_region
    _
  $region9: #{text_decoder_forward.22} parent=0 // pred_fallthru
    _
  // Predicated region
  $region10: #{text_decoder_forward.22} parent=0 // pred_check
    _
  $region11: #{text_decoder_forward.22} parent=0 // pred_check_branch
    %15 = sbr.rel (0) target = $region13
  $region12: #{text_decoder_forward.22} parent=0 // pred_region
    _
  $region13: #{text_decoder_forward.22} parent=0 // pred_fallthru
    _
  // Predicated region
  $region14: #{text_decoder_forward.22} parent=0 // pred_check
    _
  $region15: #{text_decoder_forward.22} parent=0 // pred_check_branch
    %17 = sbr.rel (0) target = $region17
  $region16: #{text_decoder_forward.22} parent=0 // pred_region
    _
  $region17: #{text_decoder_forward.22} parent=0 // pred_fallthru
    _
  // Predicated region
  $region18: #{text_decoder_forward.22} parent=0 // pred_check
    _
  $region19: #{text_decoder_forward.22} parent=0 // pred_check_branch
    %19 = sbr.rel (0) target = $region21
  $region20: #{text_decoder_forward.22} parent=0 // pred_region
    _
  $region21: #{text_decoder_forward.22} parent=0 // pred_fallthru
    _
  %p21 = scmp.eq.s32.totalorder 0, 0
  // Predicated region
  $region22: #{text_decoder_forward.22} parent=0 // pred_check
    %p22 = pneg %p21
  $region23: #{text_decoder_forward.22} parent=0 // pred_check_branch
    %24 = sbr.rel (%p22) target = $region25
  $region24: #{text_decoder_forward.22} parent=0 // pred_region
    %v25 = vld [vmem:[%s0] sm:$0xff]
    %v26 = vld [vmem:[%s0 + $0x8] sm:$0xff]
    %vm27 = vcmask 261120
    %v28 = vsel %vm27, %v25, 0.0
    %29 = vadd.xlane.f32.xlu0 %v28
    %v30 = vpop.xlane.xlu0 %29
    %v31 = vsel %vm27, %v26, 0.0
    %32 = vadd.xlane.f32.xlu0 %v31
    %v33 = vpop.xlane.xlu0 %32
    %v34 = vrcp.pop 32.0
    %v35 = vmul.f32 %v30, %v34
    %v36 = vmul.f32 %v33, %v34
    %v37 = vsub.f32 %v25, %v35
    %v38 = vsub.f32 %v26, %v36
    %v39 = vmul.f32 %v37, %v37
    %v40 = vmul.f32 %v38, %v38
    %v41 = vsel %vm27, %v39, 0.0
    %42 = vadd.xlane.f32.xlu0 %v41
    %v43 = vpop.xlane.xlu0 %42
    %v44 = vsel %vm27, %v40, 0.0
    %45 = vadd.xlane.f32.xlu0 %v44
    %v46 = vpop.xlane.xlu0 %45
    %v47 = vmul.f32 %v43, %v34
    %v48 = vmul.f32 %v46, %v34
    %v49 = vadd.f32 %v47, 1e-05
    %v50 = vadd.f32 %v48, 1e-05
    %v51 = vrsqrt.pop %v49
    %v52 = vrsqrt.pop %v50
    %v53 = vmul.f32 %v37, %v51
    %v54 = vmul.f32 %v38, %v52
    %v55 = vld [vmem:[%s1] sm:$0x1]
    %v57 = vlaneseq
    %v58 = vshrl.u32 %v57, 7
    %v59 = vsub.s32 0, %v58
    %v60 = vrot.slane %v55, %v59
    %v62 = vmul.f32 %v53, %v60
    %v63 = vmul.f32 %v54, %v60
    %v64 = vld [vmem:[%s2] sm:$0x1]
    %v66 = vlaneseq
    %v67 = vshrl.u32 %v66, 7
    %v68 = vsub.s32 0, %v67
    %v69 = vrot.slane %v64, %v68
    %v71 = vadd.f32 %v62, %v69
    %v72 = vadd.f32 %v63, %v69
    %v73 = vpack.c.bf16 %v72, %v71
    %v75 = vunpack.c.l.b16 %v73
    %v76 = vunpack.c.h.b16 %v73
    %v77 = vpack.c.b16 %v75, %v75
    %v78 = vpack.c.b16 %v76, %v76
    %vm81 = vcmask 257024
    %82 = vst.msk [vmem:[#allocation2] sm:$0xf] %vm81, %v77
    %83 = vst.msk [vmem:[#allocation2 + $0x4] sm:$0xf] %vm81, %v78
  $region25: #{text_decoder_forward.22} parent=0 // pred_fallthru
    _
  %v84 = vld [vmem:[#allocation2] sm:$0xf]
  %v85 = vld [vmem:[#allocation2 + $0x4] sm:$0xf]
  %v86 = vld [vmem:[%s3] sm:$0xf]
  %v87 = vld [vmem:[%s3 + $0x4] sm:$0xf]
  %v88 = vld [vmem:[%s3 + $0x8] sm:$0xf]
  %v89 = vld [vmem:[%s3 + $0xc] sm:$0xf]
  %v90 = vld [vmem:[%s4] sm:$0x1]
  %v92 = vlaneseq
  %v93 = vshrl.u32 %v92, 7
  %v94 = vsub.s32 0, %v93
  %v95 = vrot.slane %v90, %v94
  %v99 = vunpack.c.l.b16 %v84
  %v100 = vunpack.c.l.b16 %v85
  %v101 = vpack.c.b16 %v100, %v99
  %v106 = vunpack.c.l.b16 %v86
  %v107 = vunpack.c.l.b16 %v87
  %v108 = vunpack.c.l.b16 %v88
  %v109 = vunpack.c.l.b16 %v89
  %v110 = vpack.c.b16 %v107, %v106
  %v111 = vpack.c.b16 %v109, %v108
  %vm114 = vcmask 261120
  %v116 = vsel %vm114, %v101, 0
  %118 = vmatprep.subr.bf16.mxu0 0
  %119 = vmatpush1.bf16.msra.mxu0 0
  %120 = vmatprep.subr.bf16.mxu0 0
  %121 = vmatpush1.bf16.msra.mxu0 0
  %122 = vmatprep.subr.bf16.mxu0 0
  %123 = vmatpush1.bf16.msra.mxu0 0
  %124 = vmatprep.subr.bf16.mxu0 0
  %125 = vmatpush1.bf16.msra.mxu0 0
  %126 = vmatprep.subr.bf16.mxu0 0
  %127 = vmatpush1.bf16.msra.mxu0 0
  %128 = vmatprep.subr.bf16.mxu0 0
  %129 = vmatpush1.bf16.msra.mxu0 0
  %130 = vmatprep.subr.bf16.mxu0 0
  %131 = vmatpush1.bf16.msra.mxu0 %v111
  %132 = vmatprep.subr.bf16.mxu0 0
  %133 = vmatpush1.bf16.msra.mxu0 %v110
  %134 = vmatprep.subr.bf16.mxu0 0
  %135 = vmatpush2.bf16.msra.mxu0 0
  %136 = vmatprep.subr.bf16.mxu0 0
  %137 = vmatpush2.bf16.msra.mxu0 0
  %138 = vmatprep.subr.bf16.mxu0 0
  %139 = vmatpush2.bf16.msra.mxu0 0
  %140 = vmatprep.subr.bf16.mxu0 0
  %141 = vmatpush2.bf16.msra.mxu0 0
  %142 = vmatprep.subr.bf16.mxu0 0
  %143 = vmatpush2.bf16.msra.mxu0 0
  %144 = vmatprep.subr.bf16.mxu0 0
  %145 = vmatpush2.bf16.msra.mxu0 0
  %146 = vmatprep.subr.bf16.mxu0 0
  %147 = vmatpush2.bf16.msra.mxu0 0
  %148 = vmatprep.subr.bf16.mxu0 0
  %149 = vmatpush2.bf16.msra.mxu0 0
  %150 = vmatprep.mubr.bf16.mxu0 0
  %151 = vmatmul.mubr.bf16.gmra.mxu0 %v116
  %v152 = vpop.f32.mrf.mxu0
  %v153 = vadd.f32 %v95, %v152
  %v154 = vpop.f32.mrf.mxu0
  %v155 = vpop.f32.mrf.mxu0
  %v156 = vadd.f32 %v95, %v155
  %v157 = vpop.f32.mrf.mxu0
  %158 = vdwg.mxu0
  %v159 = vpack.c.bf16 %v156, %v153
  %v161 = vunpack.c.l.b16 %v159
  %v162 = vunpack.c.h.b16 %v159
  %v163 = vpack.c.b16 %v161, %v161
  %v164 = vpack.c.b16 %v162, %v162
  %vm167 = vcmask 257024
  %168 = vst.msk [vmem:[%s5] sm:$0xf] %vm167, %v163
  %169 = vst.msk [vmem:[%s5 + $0x4] sm:$0xf] %vm167, %v164
  // Predicated region
  $region26: #{text_decoder_forward.22} parent=0 // pred_check
    _
  $region27: #{text_decoder_forward.22} parent=0 // pred_check_branch
    %171 = sbr.rel (0) target = $region29
  $region28: #{text_decoder_forward.22} parent=0 // pred_region
    _
  $region29: #{text_decoder_forward.22} parent=0 // pred_fallthru
    _
  // Predicated region
  $region30: #{text_decoder_forward.22} parent=0 // pred_check
    _
  $region31: #{text_decoder_forward.22} parent=0 // pred_check_branch
    %173 = sbr.rel (0) target = $region33
  $region32: #{text_decoder_forward.22} parent=0 // pred_region
    _
  $region33: #{text_decoder_forward.22} parent=0 // pred_fallthru
    _

// kernel: text_decoder_forward.20
$region0: #{text_decoder_forward.20}
  #allocation0 [shape = 'u32[]', space=smem, size = 0x4, offset = 0x4, fixed_abs, tag = 'smem constant byte address 0x4 - core index']
  #allocation1 [shape = 'u32[144,128]{1,0:T(1,128)}', space=vmem, size = 0x12000, scoped, tag = 'internal scratch']
  %s0 = inlined_call_operand.vmem [shape: bf16[16,96], index: 0, kind: input, shape index: {}]
  %s1 = inlined_call_operand.vmem [shape: bf16[16,32], index: 1, kind: output, shape index: {}]
  %s2 = sld [smem:[#allocation0]]
  $region37: #{text_decoder_forward.20} parent=0
    _
  %s4 = ssub.s32 1, %s2
  %s5 = scalar_select 0, %s4, %s2
  loop: start=0, step=1, limit=4
  $region2: #{text_decoder_forward.20} parent=0 // loop_pre_header
    _
  $region3: #{text_decoder_forward.20} parent=0 // loop_header
    %s7 = sphi 0, %s11
    %p8 = scmp.ge.s32.totalorder %s7, 4
    %s17 = sphi 0, %s19
    %s20 = sphi 0, %s17
    %s21 = sphi 0, %s20
    %s37 = sphi 0, %s21
    %s43 = sphi 0, %s45
    %s46 = sphi 0, %s43
    %s47 = sphi 0, %s46
    %s63 = sphi 0, %s47
  $region4: #{text_decoder_forward.20} parent=0 // loop_header_branch
    %10 = sbr.rel (%p8) target = $region8
  $region5: #{text_decoder_forward.20} parent=0 // loop_body
    %s12 = ssub.s32 %s7, 1
    %s13 = ssub.s32 %s7, 2
    %s14 = sadd.s32 %s7, 1
    %s15 = ssub.s32 %s7, %s14
    %p16 = scmp.eq.s32.totalorder %s15, 0
    %s18 = sadd.s32 %s17, 1
    %s19 = scalar_select %p16, %s17, %s18
    %p22 = pneg %p16
    %p23 = scmp.eq.s32.totalorder %s7, 1
    %p24 = por %p22, %p23
    %p25 = scmp.ne.s32.totalorder %s17, %s20
    %p26 = scmp.eq.s32.totalorder %s7, 0
    %p27 = por %p25, %p26
    %p28 = scmp.ne.s32.totalorder %s17, %s20
    %p29 = scmp.eq.s32.totalorder %s12, 1
    %p30 = por %p28, %p29
    %p31 = scmp.ne.s32.totalorder %s20, %s21
    %p32 = scmp.eq.s32.totalorder %s12, 0
    %p33 = por %p31, %p32
    %p34 = scmp.ne.s32.totalorder %s20, %s21
    %p35 = scmp.eq.s32.totalorder %s13, 1
    %p36 = por %p34, %p35
    %p38 = scmp.ne.s32.totalorder %s21, %s37
    %p39 = scmp.eq.s32.totalorder %s13, 0
    %p40 = por %p38, %p39
    %s41 = ssub.s32 %s7, %s14
    %p42 = scmp.eq.s32.totalorder %s41, 0
    %s44 = sadd.s32 %s43, 1
    %s45 = scalar_select %p42, %s43, %s44
    %p48 = pneg %p42
    %p49 = scmp.eq.s32.totalorder %s7, 1
    %p50 = por %p48, %p49
    %p51 = scmp.ne.s32.totalorder %s43, %s46
    %p52 = scmp.eq.s32.totalorder %s7, 0
    %p53 = por %p51, %p52
    %p54 = scmp.ne.s32.totalorder %s43, %s46
    %p55 = scmp.eq.s32.totalorder %s12, 1
    %p56 = por %p54, %p55
    %p57 = scmp.ne.s32.totalorder %s46, %s47
    %p58 = scmp.eq.s32.totalorder %s12, 0
    %p59 = por %p57, %p58
    %p60 = scmp.ne.s32.totalorder %s46, %s47
    %p61 = scmp.eq.s32.totalorder %s13, 1
    %p62 = por %p60, %p61
    %p64 = scmp.ne.s32.totalorder %s47, %s63
    %p65 = scmp.eq.s32.totalorder %s13, 0
    %p66 = por %p64, %p65
    %p67 = scmp.le.s32.totalorder 1, %s7
    %p68 = scmp.lt.s32.totalorder %s7, 3
    %p69 = pnand %p67, %p68
    %p70 = pneg %p69
    // Predicated region
    $region9: #{text_decoder_forward.20} parent=5 // pred_check
      _
    $region10: #{text_decoder_forward.20} parent=5 // pred_check_branch
      %72 = sbr.rel (%p69) target = $region12
    $region11: #{text_decoder_forward.20} parent=5 // pred_region
      %s73 = ssub.s32 %s7, 1
    $region12: #{text_decoder_forward.20} parent=5 // pred_fallthru
      _
    %p74 = scmp.lt.s32.totalorder %s7, 2
    // Predicated region
    $region13: #{text_decoder_forward.20} parent=5 // pred_check
      %p75 = pneg %p74
    $region14: #{text_decoder_forward.20} parent=5 // pred_check_branch
      %77 = sbr.rel (%p75) target = $region16
    $region15: #{text_decoder_forward.20} parent=5 // pred_region
      // Predicated region
      $region17: #{text_decoder_forward.20} parent=15 // pred_check
        %p78 = pneg %p27
      $region18: #{text_decoder_forward.20} parent=15 // pred_check_branch
        %80 = sbr.rel (%p78) target = $region20
      $region19: #{text_decoder_forward.20} parent=15 // pred_region
        %p81 = scmp.lt.s32.totalorder %s7, 1
        %s82 = scalar_select %p81, %s7, 1
        %s83 = smul.addr %s82, 4
        %s84 = scalar_lea.vmem %s0, %s83
      $region20: #{text_decoder_forward.20} parent=15 // pred_fallthru
        _
    $region16: #{text_decoder_forward.20} parent=5 // pred_fallthru
      _
    %p85 = scmp.le.s32.totalorder 1, %s7
    %p86 = scmp.lt.s32.totalorder %s7, 3
    %p87 = pnand %p85, %p86
    %p88 = pneg %p87
    // Predicated region
    $region21: #{text_decoder_forward.20} parent=5 // pred_check
      _
    $region22: #{text_decoder_forward.20} parent=5 // pred_check_branch
      %90 = sbr.rel (%p87) target = $region24
    $region23: #{text_decoder_forward.20} parent=5 // pred_region
      %s91 = ssub.s32 %s7, 1
      %p92 = scmp.lt.s32.totalorder %s12, 1
      %s93 = scalar_select %p92, %s12, 1
      %s94 = smul.addr %s93, 4
      %s95 = scalar_lea.vmem %s0, %s94
      %p96 = pneg %p33
      %p97 = pneg %p30
      %p98 = pneg %p59
      %p99 = pneg %p56
      %p100 = scmp.lt.s32.totalorder %s12, 1
      %s101 = scalar_select %p100, %s12, 1
      %s102 = smul.addr %s101, 4
      %s103 = scalar_lea.vmem %s1, %s102
      %p104 = scmp.lt.s32.totalorder %s12, 1
      %s105 = scalar_select %p104, %s12, 1
      %s106 = smul.addr %s105, 4
      %s107 = scalar_lea.vmem %s0, %s106
      %p108 = scmp.lt.s32.totalorder %s12, 1
      %s109 = scalar_select %p108, %s12, 1
      %s110 = smul.addr %s109, 4
      %s111 = scalar_lea.vmem %s1, %s110
      %v113 = vld [vmem:[%s107] sm:$0xf]
      %v115 = vunpack.c.l.b16 %v113
      %v116 = vpack.c.b16 %v115, %v115
      %117 = vrot.lane.b32.xlu0 %v116, 96
      %v118 = vpop.permute.xlu0 %117
      %vm119 = vcmask 64512
      %v121 = vsel %vm119, %v113, 0
      %v124 = vsel %vm119, %v118, 0
      %126 = vmatprep.subr.bf16.mxu0 0
      %127 = vmatpush1.bf16.xpose.msra.mxu0 0
      %128 = vmatprep.subr.bf16.mxu0 0
      %129 = vmatpush1.bf16.xpose.msra.mxu0 0
      %130 = vmatprep.subr.bf16.mxu0 0
      %131 = vmatpush1.bf16.xpose.msra.mxu0 0
      %132 = vmatprep.subr.bf16.mxu0 0
      %133 = vmatpush1.bf16.xpose.msra.mxu0 0
      %134 = vmatprep.subr.bf16.mxu0 0
      %135 = vmatpush1.bf16.xpose.msra.mxu0 0
      %136 = vmatprep.subr.bf16.mxu0 0
      %137 = vmatpush1.bf16.xpose.msra.mxu0 0
      %138 = vmatprep.subr.bf16.mxu0 0
      %139 = vmatpush1.bf16.xpose.msra.mxu0 0
      %140 = vmatprep.subr.bf16.mxu0 0
      %141 = vmatpush1.bf16.xpose.msra.mxu0 %v124
      %142 = vmatprep.subr.bf16.mxu0 0
      %143 = vmatpush2.bf16.xpose.msra.mxu0 0
      %144 = vmatprep.subr.bf16.mxu0 0
      %145 = vmatpush2.bf16.xpose.msra.mxu0 0
      %146 = vmatprep.subr.bf16.mxu0 0
      %147 = vmatpush2.bf16.xpose.msra.mxu0 0
      %148 = vmatprep.subr.bf16.mxu0 0
      %149 = vmatpush2.bf16.xpose.msra.mxu0 0
      %150 = vmatprep.subr.bf16.mxu0 0
      %151 = vmatpush2.bf16.xpose.msra.mxu0 0
      %152 = vmatprep.subr.bf16.mxu0 0
      %153 = vmatpush2.bf16.xpose.msra.mxu0 0
      %154 = vmatprep.subr.bf16.mxu0 0
      %155 = vmatpush2.bf16.xpose.msra.mxu0 0
      %156 = vmatprep.subr.bf16.mxu0 0
      %157 = vmatpush2.bf16.xpose.msra.mxu0 0
      %158 = vmatprep.mubr.bf16.mxu0 0
      %159 = vmatmul.mubr.bf16.gmra.mxu0 %v121
      %v160 = vpop.f32.mrf.mxu0
      %v161 = vadd.f32 0.0, %v160
      %v162 = vpop.f32.mrf.mxu0
      %v163 = vpop.f32.mrf.mxu0
      %v164 = vpop.f32.mrf.mxu0
      %165 = vdwg.mxu0
      %v166 = vlaneseq
      %v167 = vshrl.u32 %v166, 7
      %v168 = vlaneseq
      %v169 = vand.u32 %v168, 127
      %vm170 = vcmp.le.s32.totalorder %v169, %v167
      %v171 = vsel %vm170, %v161, -inf
      %v172 = vsel %vm119, %v171, -inf
      %173 = vmax.xlane.f32.xlu0 %v172
      %v174 = vpop.xlane.xlu0 %173
      %v175 = vsub.f32 %v171, %v174
      %v176 = vmul.f32 %v175, 1.442695
      %v177 = vpow.pop %v176
      %v178 = vpack.c.bf16 %v177, %v177
      %179 = vrot.lane.b32.xlu0 %v116, 64
      %v180 = vpop.permute.xlu0 %179
      %v182 = vsel %vm119, %v178, 0
      %vm184 = vcmask 1043456
      %v186 = vsel %vm184, %v180, 0
      %188 = vmatprep.subr.bf16.mxu0 0
      %189 = vmatpush1.bf16.msra.mxu0 0
      %190 = vmatprep.subr.bf16.mxu0 0
      %191 = vmatpush1.bf16.msra.mxu0 0
      %192 = vmatprep.subr.bf16.mxu0 0
      %193 = vmatpush1.bf16.msra.mxu0 0
      %194 = vmatprep.subr.bf16.mxu0 0
      %195 = vmatpush1.bf16.msra.mxu0 0
      %196 = vmatprep.subr.bf16.mxu0 0
      %197 = vmatpush1.bf16.msra.mxu0 0
      %198 = vmatprep.subr.bf16.mxu0 0
      %199 = vmatpush1.bf16.msra.mxu0 0
      %200 = vmatprep.subr.bf16.mxu0 0
      %201 = vmatpush1.bf16.msra.mxu0 0
      %202 = vmatprep.subr.bf16.mxu0 0
      %203 = vmatpush1.bf16.msra.mxu0 %v186
      %204 = vmatprep.subr.bf16.mxu0 0
      %205 = vmatpush2.bf16.msra.mxu0 0
      %206 = vmatprep.subr.bf16.mxu0 0
      %207 = vmatpush2.bf16.msra.mxu0 0
      %208 = vmatprep.subr.bf16.mxu0 0
      %209 = vmatpush2.bf16.msra.mxu0 0
      %210 = vmatprep.subr.bf16.mxu0 0
      %211 = vmatpush2.bf16.msra.mxu0 0
      %212 = vmatprep.subr.bf16.mxu0 0
      %213 = vmatpush2.bf16.msra.mxu0 0
      %214 = vmatprep.subr.bf16.mxu0 0
      %215 = vmatpush2.bf16.msra.mxu0 0
      %216 = vmatprep.subr.bf16.mxu0 0
      %217 = vmatpush2.bf16.msra.mxu0 0
      %218 = vmatprep.subr.bf16.mxu0 0
      %219 = vmatpush2.bf16.msra.mxu0 0
      %220 = vmatprep.mubr.bf16.mxu0 0
      %221 = vmatmul.mubr.bf16.gmra.mxu0 %v182
      %v222 = vpop.f32.mrf.mxu0
      %v223 = vadd.f32 0.0, %v222
      %v224 = vpop.f32.mrf.mxu0
      %v225 = vpop.f32.mrf.mxu0
      %v226 = vpop.f32.mrf.mxu0
      %227 = vdwg.mxu0
      %v228 = vsel %vm119, %v177, 0.0
      %229 = vadd.xlane.f32.xlu0 %v228
      %v230 = vpop.xlane.xlu0 %229
      %v231 = vrcp.pop %v230
      %v232 = vmul.f32 %v223, %v231
      %v233 = vpack.c.bf16 %v232, %v232
      %vm234 = vcmask 60416
      %235 = vst.msk [vmem:[%s111] sm:$0xf] %vm234, %v233
      %236 = vrot.lane.b32.xlu0 %v116, 120
      %v237 = vpop.permute.xlu0 %236
      %238 = vrot.lane.b32.xlu0 %v116, 88
      %v239 = vpop.permute.xlu0 %238
      %v241 = vsel %vm119, %v237, 0
      %v244 = vsel %vm119, %v239, 0
      %246 = vmatprep.subr.bf16.mxu0 0
      %247 = vmatpush1.bf16.xpose.msra.mxu0 0
      %248 = vmatprep.subr.bf16.mxu0 0
      %249 = vmatpush1.bf16.xpose.msra.mxu0 0
      %250 = vmatprep.subr.bf16.mxu0 0
      %251 = vmatpush1.bf16.xpose.msra.mxu0 0
      %252 = vmatprep.subr.bf16.mxu0 0
      %253 = vmatpush1.bf16.xpose.msra.mxu0 0
      %254 = vmatprep.subr.bf16.mxu0 0
      %255 = vmatpush1.bf16.xpose.msra.mxu0 0
      %256 = vmatprep.subr.bf16.mxu0 0
      %257 = vmatpush1.bf16.xpose.msra.mxu0 0
      %258 = vmatprep.subr.bf16.mxu0 0
      %259 = vmatpush1.bf16.xpose.msra.mxu0 0
      %260 = vmatprep.subr.bf16.mxu0 0
      %261 = vmatpush1.bf16.xpose.msra.mxu0 %v244
      %262 = vmatprep.subr.bf16.mxu0 0
      %263 = vmatpush2.bf16.xpose.msra.mxu0 0
      %264 = vmatprep.subr.bf16.mxu0 0
      %265 = vmatpush2.bf16.xpose.msra.mxu0 0
      %266 = vmatprep.subr.bf16.mxu0 0
      %267 = vmatpush2.bf16.xpose.msra.mxu0 0
      %268 = vmatprep.subr.bf16.mxu0 0
      %269 = vmatpush2.bf16.xpose.msra.mxu0 0
      %270 = vmatprep.subr.bf16.mxu0 0
      %271 = vmatpush2.bf16.xpose.msra.mxu0 0
      %272 = vmatprep.subr.bf16.mxu0 0
      %273 = vmatpush2.bf16.xpose.msra.mxu0 0
      %274 = vmatprep.subr.bf16.mxu0 0
      %275 = vmatpush2.bf16.xpose.msra.mxu0 0
      %276 = vmatprep.subr.bf16.mxu0 0
      %277 = vmatpush2.bf16.xpose.msra.mxu0 0
      %278 = vmatprep.mubr.bf16.mxu0 0
      %279 = vmatmul.mubr.bf16.gmra.mxu0 %v241
      %v280 = vpop.f32.mrf.mxu0
      %v281 = vadd.f32 0.0, %v280
      %v282 = vpop.f32.mrf.mxu0
      %v283 = vpop.f32.mrf.mxu0
      %v284 = vpop.f32.mrf.mxu0
      %285 = vdwg.mxu0
      %v286 = vsel %vm170, %v281, -inf
      %v287 = vsel %vm119, %v286, -inf
      %288 = vmax.xlane.f32.xlu0 %v287
      %v289 = vpop.xlane.xlu0 %288
      %v290 = vsub.f32 %v286, %v289
      %v291 = vmul.f32 %v290, 1.442695
      %v292 = vpow.pop %v291
      %v293 = vpack.c.bf16 %v292, %v292
      %294 = vrot.lane.b32.xlu0 %v116, 56
      %v295 = vpop.permute.xlu0 %294
      %v297 = vsel %vm119, %v293, 0
      %v300 = vsel %vm184, %v295, 0
      %302 = vmatprep.subr.bf16.mxu0 0
      %303 = vmatpush1.bf16.msra.mxu0 0
      %304 = vmatprep.subr.bf16.mxu0 0
      %305 = vmatpush1.bf16.msra.mxu0 0
      %306 = vmatprep.subr.bf16.mxu0 0
      %307 = vmatpush1.bf16.msra.mxu0 0
      %308 = vmatprep.subr.bf16.mxu0 0
      %309 = vmatpush1.bf16.msra.mxu0 0
      %310 = vmatprep.subr.bf16.mxu0 0
      %311 = vmatpush1.bf16.msra.mxu0 0
      %312 = vmatprep.subr.bf16.mxu0 0
      %313 = vmatpush1.bf16.msra.mxu0 0
      %314 = vmatprep.subr.bf16.mxu0 0
      %315 = vmatpush1.bf16.msra.mxu0 0
      %316 = vmatprep.subr.bf16.mxu0 0
      %317 = vmatpush1.bf16.msra.mxu0 %v300
      %318 = vmatprep.subr.bf16.mxu0 0
      %319 = vmatpush2.bf16.msra.mxu0 0
      %320 = vmatprep.subr.bf16.mxu0 0
      %321 = vmatpush2.bf16.msra.mxu0 0
      %322 = vmatprep.subr.bf16.mxu0 0
      %323 = vmatpush2.bf16.msra.mxu0 0
      %324 = vmatprep.subr.bf16.mxu0 0
      %325 = vmatpush2.bf16.msra.mxu0 0
      %326 = vmatprep.subr.bf16.mxu0 0
      %327 = vmatpush2.bf16.msra.mxu0 0
      %328 = vmatprep.subr.bf16.mxu0 0
      %329 = vmatpush2.bf16.msra.mxu0 0
      %330 = vmatprep.subr.bf16.mxu0 0
      %331 = vmatpush2.bf16.msra.mxu0 0
      %332 = vmatprep.subr.bf16.mxu0 0
      %333 = vmatpush2.bf16.msra.mxu0 0
      %334 = vmatprep.mubr.bf16.mxu0 0
      %335 = vmatmul.mubr.bf16.gmra.mxu0 %v297
      %v336 = vpop.f32.mrf.mxu0
      %v337 = vadd.f32 0.0, %v336
      %v338 = vpop.f32.mrf.mxu0
      %v339 = vpop.f32.mrf.mxu0
      %v340 = vpop.f32.mrf.mxu0
      %341 = vdwg.mxu0
      %v342 = vsel %vm119, %v292, 0.0
      %343 = vadd.xlane.f32.xlu0 %v342
      %v344 = vpop.xlane.xlu0 %343
      %v345 = vrcp.pop %v344
      %v346 = vmul.f32 %v337, %v345
      %v347 = vpack.c.bf16 %v346, %v346
      %v349 = vunpack.c.l.b16 %v347
      %v350 = vpack.c.b16 %v349, %v349
      %351 = vrot.lane.b32.xlu0 %v350, 8
      %v352 = vpop.permute.xlu0 %351
      %vm354 = vcmask 126016
      %355 = vst.msk [vmem:[%s111] sm:$0xf] %vm354, %v352
      %356 = vrot.lane.b32.xlu0 %v116, 112
      %v357 = vpop.permute.xlu0 %356
      %358 = vrot.lane.b32.xlu0 %v116, 80
      %v359 = vpop.permute.xlu0 %358
      %v361 = vsel %vm119, %v357, 0
      %v364 = vsel %vm119, %v359, 0
      %366 = vmatprep.subr.bf16.mxu0 0
      %367 = vmatpush1.bf16.xpose.msra.mxu0 0
      %368 = vmatprep.subr.bf16.mxu0 0
      %369 = vmatpush1.bf16.xpose.msra.mxu0 0
      %370 = vmatprep.subr.bf16.mxu0 0
      %371 = vmatpush1.bf16.xpose.msra.mxu0 0
      %372 = vmatprep.subr.bf16.mxu0 0
      %373 = vmatpush1.bf16.xpose.msra.mxu0 0
      %374 = vmatprep.subr.bf16.mxu0 0
      %375 = vmatpush1.bf16.xpose.msra.mxu0 0
      %376 = vmatprep.subr.bf16.mxu0 0
      %377 = vmatpush1.bf16.xpose.msra.mxu0 0
      %378 = vmatprep.subr.bf16.mxu0 0
      %379 = vmatpush1.bf16.xpose.msra.mxu0 0
      %380 = vmatprep.subr.bf16.mxu0 0
      %381 = vmatpush1.bf16.xpose.msra.mxu0 %v364
      %382 = vmatprep.subr.bf16.mxu0 0
      %383 = vmatpush2.bf16.xpose.msra.mxu0 0
      %384 = vmatprep.subr.bf16.mxu0 0
      %385 = vmatpush2.bf16.xpose.msra.mxu0 0
      %386 = vmatprep.subr.bf16.mxu0 0
      %387 = vmatpush2.bf16.xpose.msra.mxu0 0
      %388 = vmatprep.subr.bf16.mxu0 0
      %389 = vmatpush2.bf16.xpose.msra.mxu0 0
      %390 = vmatprep.subr.bf16.mxu0 0
      %391 = vmatpush2.bf16.xpose.msra.mxu0 0
      %392 = vmatprep.subr.bf16.mxu0 0
      %393 = vmatpush2.bf16.xpose.msra.mxu0 0
      %394 = vmatprep.subr.bf16.mxu0 0
      %395 = vmatpush2.bf16.xpose.msra.mxu0 0
      %396 = vmatprep.subr.bf16.mxu0 0
      %397 = vmatpush2.bf16.xpose.msra.mxu0 0
      %398 = vmatprep.mubr.bf16.mxu0 0
      %399 = vmatmul.mubr.bf16.gmra.mxu0 %v361
      %v400 = vpop.f32.mrf.mxu0
      %v401 = vadd.f32 0.0, %v400
      %v402 = vpop.f32.mrf.mxu0
      %v403 = vpop.f32.mrf.mxu0
      %v404 = vpop.f32.mrf.mxu0
      %405 = vdwg.mxu0
      %v406 = vsel %vm170, %v401, -inf
      %v407 = vsel %vm119, %v406, -inf
      %408 = vmax.xlane.f32.xlu0 %v407
      %v409 = vpop.xlane.xlu0 %408
      %v410 = vsub.f32 %v406, %v409
      %v411 = vmul.f32 %v410, 1.442695
      %v412 = vpow.pop %v411
      %v413 = vpack.c.bf16 %v412, %v412
      %414 = vrot.lane.b32.xlu0 %v116, 48
      %v415 = vpop.permute.xlu0 %414
      %v417 = vsel %vm119, %v413, 0
      %v420 = vsel %vm184, %v415, 0
      %422 = vmatprep.subr.bf16.mxu0 0
      %423 = vmatpush1.bf16.msra.mxu0 0
      %424 = vmatprep.subr.bf16.mxu0 0
      %425 = vmatpush1.bf16.msra.mxu0 0
      %426 = vmatprep.subr.bf16.mxu0 0
      %427 = vmatpush1.bf16.msra.mxu0 0
      %428 = vmatprep.subr.bf16.mxu0 0
      %429 = vmatpush1.bf16.msra.mxu0 0
      %430 = vmatprep.subr.bf16.mxu0 0
      %431 = vmatpush1.bf16.msra.mxu0 0
      %432 = vmatprep.subr.bf16.mxu0 0
      %433 = vmatpush1.bf16.msra.mxu0 0
      %434 = vmatprep.subr.bf16.mxu0 0
      %435 = vmatpush1.bf16.msra.mxu0 0
      %436 = vmatprep.subr.bf16.mxu0 0
      %437 = vmatpush1.bf16.msra.mxu0 %v420
      %438 = vmatprep.subr.bf16.mxu0 0
      %439 = vmatpush2.bf16.msra.mxu0 0
      %440 = vmatprep.subr.bf16.mxu0 0
      %441 = vmatpush2.bf16.msra.mxu0 0
      %442 = vmatprep.subr.bf16.mxu0 0
      %443 = vmatpush2.bf16.msra.mxu0 0
      %444 = vmatprep.subr.bf16.mxu0 0
      %445 = vmatpush2.bf16.msra.mxu0 0
      %446 = vmatprep.subr.bf16.mxu0 0
      %447 = vmatpush2.bf16.msra.mxu0 0
      %448 = vmatprep.subr.bf16.mxu0 0
      %449 = vmatpush2.bf16.msra.mxu0 0
      %450 = vmatprep.subr.bf16.mxu0 0
      %451 = vmatpush2.bf16.msra.mxu0 0
      %452 = vmatprep.subr.bf16.mxu0 0
      %453 = vmatpush2.bf16.msra.mxu0 0
      %454 = vmatprep.mubr.bf16.mxu0 0
      %455 = vmatmul.mubr.bf16.gmra.mxu0 %v417
      %v456 = vpop.f32.mrf.mxu0
      %v457 = vadd.f32 0.0, %v456
      %v458 = vpop.f32.mrf.mxu0
      %v459 = vpop.f32.mrf.mxu0
      %v460 = vpop.f32.mrf.mxu0
      %461 = vdwg.mxu0
      %v462 = vsel %vm119, %v412, 0.0
      %463 = vadd.xlane.f32.xlu0 %v462
      %v464 = vpop.xlane.xlu0 %463
      %v465 = vrcp.pop %v464
      %v466 = vmul.f32 %v457, %v465
      %v467 = vpack.c.bf16 %v466, %v466
      %v469 = vunpack.c.l.b16 %v467
      %v470 = vpack.c.b16 %v469, %v469
      %471 = vrot.lane.b32.xlu0 %v470, 16
      %v472 = vpop.permute.xlu0 %471
      %vm474 = vcmask 191616
      %475 = vst.msk [vmem:[%s111] sm:$0xf] %vm474, %v472
      %476 = vrot.lane.b32.xlu0 %v116, 104
      %v477 = vpop.permute.xlu0 %476
      %478 = vrot.lane.b32.xlu0 %v116, 72
      %v479 = vpop.permute.xlu0 %478
      %v481 = vsel %vm119, %v477, 0
      %v484 = vsel %vm119, %v479, 0
      %486 = vmatprep.subr.bf16.mxu0 0
      %487 = vmatpush1.bf16.xpose.msra.mxu0 0
      %488 = vmatprep.subr.bf16.mxu0 0
      %489 = vmatpush1.bf16.xpose.msra.mxu0 0
      %490 = vmatprep.subr.bf16.mxu0 0
      %491 = vmatpush1.bf16.xpose.msra.mxu0 0
      %492 = vmatprep.subr.bf16.mxu0 0
      %493 = vmatpush1.bf16.xpose.msra.mxu0 0
      %494 = vmatprep.subr.bf16.mxu0 0
      %495 = vmatpush1.bf16.xpose.msra.mxu0 0
      %496 = vmatprep.subr.bf16.mxu0 0
      %497 = vmatpush1.bf16.xpose.msra.mxu0 0
      %498 = vmatprep.subr.bf16.mxu0 0
      %499 = vmatpush1.bf16.xpose.msra.mxu0 0
      %500 = vmatprep.subr.bf16.mxu0 0
      %501 = vmatpush1.bf16.xpose.msra.mxu0 %v484
      %502 = vmatprep.subr.bf16.mxu0 0
      %503 = vmatpush2.bf16.xpose.msra.mxu0 0
      %504 = vmatprep.subr.bf16.mxu0 0
      %505 = vmatpush2.bf16.xpose.msra.mxu0 0
      %506 = vmatprep.subr.bf16.mxu0 0
      %507 = vmatpush2.bf16.xpose.msra.mxu0 0
      %508 = vmatprep.subr.bf16.mxu0 0
      %509 = vmatpush2.bf16.xpose.msra.mxu0 0
      %510 = vmatprep.subr.bf16.mxu0 0
      %511 = vmatpush2.bf16.xpose.msra.mxu0 0
      %512 = vmatprep.subr.bf16.mxu0 0
      %513 = vmatpush2.bf16.xpose.msra.mxu0 0
      %514 = vmatprep.subr.bf16.mxu0 0
      %515 = vmatpush2.bf16.xpose.msra.mxu0 0
      %516 = vmatprep.subr.bf16.mxu0 0
      %517 = vmatpush2.bf16.xpose.msra.mxu0 0
      %518 = vmatprep.mubr.bf16.mxu0 0
      %519 = vmatmul.mubr.bf16.gmra.mxu0 %v481
      %v520 = vpop.f32.mrf.mxu0
      %v521 = vadd.f32 0.0, %v520
      %v522 = vpop.f32.mrf.mxu0
      %v523 = vpop.f32.mrf.mxu0
      %v524 = vpop.f32.mrf.mxu0
      %525 = vdwg.mxu0
      %v526 = vsel %vm170, %v521, -inf
      %v527 = vsel %vm119, %v526, -inf
      %528 = vmax.xlane.f32.xlu0 %v527
      %v529 = vpop.xlane.xlu0 %528
      %v530 = vsub.f32 %v526, %v529
      %v531 = vmul.f32 %v530, 1.442695
      %v532 = vpow.pop %v531
      %v533 = vpack.c.bf16 %v532, %v532
      %534 = vrot.lane.b32.xlu0 %v116, 40
      %v535 = vpop.permute.xlu0 %534
      %v537 = vsel %vm119, %v533, 0
      %v540 = vsel %vm184, %v535, 0
      %542 = vmatprep.subr.bf16.mxu0 0
      %543 = vmatpush1.bf16.msra.mxu0 0
      %544 = vmatprep.subr.bf16.mxu0 0
      %545 = vmatpush1.bf16.msra.mxu0 0
      %546 = vmatprep.subr.bf16.mxu0 0
      %547 = vmatpush1.bf16.msra.mxu0 0
      %548 = vmatprep.subr.bf16.mxu0 0
      %549 = vmatpush1.bf16.msra.mxu0 0
      %550 = vmatprep.subr.bf16.mxu0 0
      %551 = vmatpush1.bf16.msra.mxu0 0
      %552 = vmatprep.subr.bf16.mxu0 0
      %553 = vmatpush1.bf16.msra.mxu0 0
      %554 = vmatprep.subr.bf16.mxu0 0
      %555 = vmatpush1.bf16.msra.mxu0 0
      %556 = vmatprep.subr.bf16.mxu0 0
      %557 = vmatpush1.bf16.msra.mxu0 %v540
      %558 = vmatprep.subr.bf16.mxu0 0
      %559 = vmatpush2.bf16.msra.mxu0 0
      %560 = vmatprep.subr.bf16.mxu0 0
      %561 = vmatpush2.bf16.msra.mxu0 0
      %562 = vmatprep.subr.bf16.mxu0 0
      %563 = vmatpush2.bf16.msra.mxu0 0
      %564 = vmatprep.subr.bf16.mxu0 0
      %565 = vmatpush2.bf16.msra.mxu0 0
      %566 = vmatprep.subr.bf16.mxu0 0
      %567 = vmatpush2.bf16.msra.mxu0 0
      %568 = vmatprep.subr.bf16.mxu0 0
      %569 = vmatpush2.bf16.msra.mxu0 0
      %570 = vmatprep.subr.bf16.mxu0 0
      %571 = vmatpush2.bf16.msra.mxu0 0
      %572 = vmatprep.subr.bf16.mxu0 0
      %573 = vmatpush2.bf16.msra.mxu0 0
      %574 = vmatprep.mubr.bf16.mxu0 0
      %575 = vmatmul.mubr.bf16.gmra.mxu0 %v537
      %v576 = vpop.f32.mrf.mxu0
      %v577 = vadd.f32 0.0, %v576
      %v578 = vpop.f32.mrf.mxu0
      %v579 = vpop.f32.mrf.mxu0
      %v580 = vpop.f32.mrf.mxu0
      %581 = vdwg.mxu0
      %v582 = vsel %vm119, %v532, 0.0
      %583 = vadd.xlane.f32.xlu0 %v582
      %v584 = vpop.xlane.xlu0 %583
      %v585 = vrcp.pop %v584
      %v586 = vmul.f32 %v577, %v585
      %v587 = vpack.c.bf16 %v586, %v586
      %v589 = vunpack.c.l.b16 %v587
      %v590 = vpack.c.b16 %v589, %v589
      %591 = vrot.lane.b32.xlu0 %v590, 24
      %v592 = vpop.permute.xlu0 %591
      %vm594 = vcmask 257216
      %595 = vst.msk [vmem:[%s111] sm:$0xf] %vm594, %v592
      %p596 = scmp.lt.s32.totalorder %s12, 1
      %s597 = scalar_select %p596, %s12, 1
      %s598 = smul.addr %s597, 4
      %s599 = scalar_lea.vmem %s1, %s598
      // Predicated region
      $region25: #{text_decoder_forward.20} parent=23 // pred_check
        %p600 = pneg %p56
      $region26: #{text_decoder_forward.20} parent=23 // pred_check_branch
        %602 = sbr.rel (%p600) target = $region28
      $region27: #{text_decoder_forward.20} parent=23 // pred_region
        _
      $region28: #{text_decoder_forward.20} parent=23 // pred_fallthru
        _
    $region24: #{text_decoder_forward.20} parent=5 // pred_fallthru
      _
    %p603 = scmp.le.s32.totalorder 2, %s7
    // Predicated region
    $region29: #{text_decoder_forward.20} parent=5 // pred_check
      %p604 = pneg %p603
    $region30: #{text_decoder_forward.20} parent=5 // pred_check_branch
      %606 = sbr.rel (%p604) target = $region32
    $region31: #{text_decoder_forward.20} parent=5 // pred_region
      %s607 = ssub.s32 %s7, 2
      // Predicated region
      $region33: #{text_decoder_forward.20} parent=31 // pred_check
        %p608 = pneg %p62
      $region34: #{text_decoder_forward.20} parent=31 // pred_check_branch
        %610 = sbr.rel (%p608) target = $region36
      $region35: #{text_decoder_forward.20} parent=31 // pred_region
        %p611 = scmp.lt.s32.totalorder %s13, 1
        %s612 = scalar_select %p611, %s13, 1
        %s613 = smul.addr %s612, 4
        %s614 = scalar_lea.vmem %s1, %s613
      $region36: #{text_decoder_forward.20} parent=31 // pred_fallthru
        _
    $region32: #{text_decoder_forward.20} parent=5 // pred_fallthru
      _
  $region6: #{text_decoder_forward.20} parent=0 // loop_footer
    %s11 = sadd.s32 1, %s7
  $region7: #{text_decoder_forward.20} parent=0 // loop_footer_branch
    %6 = sbr.rel target = $region3
  $region8: #{text_decoder_forward.20} parent=0 // loop_exit
    _

// kernel: text_decoder_forward.23
$region0: #{text_decoder_forward.23}
  #allocation0 [shape = 'u32[]', space=smem, size = 0x4, offset = 0x4, fixed_abs, tag = 'smem constant byte address 0x4 - core index']
  #allocation1 [shape = 'u32[144,128]{1,0:T(1,128)}', space=vmem, size = 0x12000, scoped, tag = 'internal scratch']
  %s0 = inlined_call_operand.vmem [shape: f32[32,32], index: 0, kind: input, shape index: {}]
  %s1 = inlined_call_operand.vmem [shape: bf16[32,64], index: 1, kind: input, shape index: {}]
  %s2 = inlined_call_operand.vmem [shape: f32[1,64], index: 2, kind: input, shape index: {}]
  %s3 = inlined_call_operand.vmem [shape: bf16[32,64], index: 3, kind: output, shape index: {}]
  %s4 = sld [smem:[#allocation0]]
  $region22: #{text_decoder_forward.23} parent=0
    _
  %s6 = ssub.s32 1, %s4
  %s7 = scalar_select 0, %s6, %s4
  // Predicated region
  $region2: #{text_decoder_forward.23} parent=0 // pred_check
    _
  $region3: #{text_decoder_forward.23} parent=0 // pred_check_branch
    %9 = sbr.rel (0) target = $region5
  $region4: #{text_decoder_forward.23} parent=0 // pred_region
    _
  $region5: #{text_decoder_forward.23} parent=0 // pred_fallthru
    _
  // Predicated region
  $region6: #{text_decoder_forward.23} parent=0 // pred_check
    _
  $region7: #{text_decoder_forward.23} parent=0 // pred_check_branch
    %11 = sbr.rel (0) target = $region9
  $region8: #{text_decoder_forward.23} parent=0 // pred_region
    _
  $region9: #{text_decoder_forward.23} parent=0 // pred_fallthru
    _
  // Predicated region
  $region10: #{text_decoder_forward.23} parent=0 // pred_check
    _
  $region11: #{text_decoder_forward.23} parent=0 // pred_check_branch
    %13 = sbr.rel (0) target = $region13
  $region12: #{text_decoder_forward.23} parent=0 // pred_region
    _
  $region13: #{text_decoder_forward.23} parent=0 // pred_fallthru
    _
  %v15 = vld [vmem:[%s0] sm:$0xff]
  %v16 = vld [vmem:[%s0 + $0x8] sm:$0xff]
  %v17 = vld [vmem:[%s0 + $0x10] sm:$0xff]
  %v18 = vld [vmem:[%s0 + $0x18] sm:$0xff]
  %v19 = vpack.c.bf16 %v16, %v15
  %v20 = vpack.c.bf16 %v18, %v17
  %v21 = vld [vmem:[%s1] sm:$0xf]
  %v22 = vld [vmem:[%s1 + $0x4] sm:$0xf]
  %v23 = vld [vmem:[%s1 + $0x8] sm:$0xf]
  %v24 = vld [vmem:[%s1 + $0xc] sm:$0xf]
  %v25 = vld [vmem:[%s2] sm:$0x1]
  %v27 = vlaneseq
  %v28 = vshrl.u32 %v27, 7
  %v29 = vsub.s32 0, %v28
  %v30 = vrot.slane %v25, %v29
  %v36 = vunpack.c.l.b16 %v21
  %v37 = vunpack.c.l.b16 %v22
  %v38 = vunpack.c.l.b16 %v23
  %v39 = vunpack.c.l.b16 %v24
  %v40 = vpack.c.b16 %v37, %v36
  %v41 = vpack.c.b16 %v39, %v38
  %vm44 = vcmask 261120
  %v46 = vsel %vm44, %v19, 0
  %v49 = vsel %vm44, %v20, 0
  %51 = vmatprep.subr.bf16.mxu0 0
  %52 = vmatpush1.bf16.msra.mxu0 0
  %53 = vmatprep.subr.bf16.mxu0 0
  %54 = vmatpush1.bf16.msra.mxu0 0
  %55 = vmatprep.subr.bf16.mxu0 0
  %56 = vmatpush1.bf16.msra.mxu0 0
  %57 = vmatprep.subr.bf16.mxu0 0
  %58 = vmatpush1.bf16.msra.mxu0 0
  %59 = vmatprep.subr.bf16.mxu0 0
  %60 = vmatpush1.bf16.msra.mxu0 0
  %61 = vmatprep.subr.bf16.mxu0 0
  %62 = vmatpush1.bf16.msra.mxu0 0
  %63 = vmatprep.subr.bf16.mxu0 0
  %64 = vmatpush1.bf16.msra.mxu0 %v41
  %65 = vmatprep.subr.bf16.mxu0 0
  %66 = vmatpush1.bf16.msra.mxu0 %v40
  %67 = vmatprep.subr.bf16.mxu0 0
  %68 = vmatpush2.bf16.msra.mxu0 0
  %69 = vmatprep.subr.bf16.mxu0 0
  %70 = vmatpush2.bf16.msra.mxu0 0
  %71 = vmatprep.subr.bf16.mxu0 0
  %72 = vmatpush2.bf16.msra.mxu0 0
  %73 = vmatprep.subr.bf16.mxu0 0
  %74 = vmatpush2.bf16.msra.mxu0 0
  %75 = vmatprep.subr.bf16.mxu0 0
  %76 = vmatpush2.bf16.msra.mxu0 0
  %77 = vmatprep.subr.bf16.mxu0 0
  %78 = vmatpush2.bf16.msra.mxu0 0
  %79 = vmatprep.subr.bf16.mxu0 0
  %80 = vmatpush2.bf16.msra.mxu0 0
  %81 = vmatprep.subr.bf16.mxu0 0
  %82 = vmatpush2.bf16.msra.mxu0 0
  %83 = vmatprep.mubr.bf16.mxu0 0
  %84 = vmatmul.mubr.bf16.gmra.mxu0 %v46
  %v85 = vpop.f32.mrf.mxu0
  %v86 = vadd.f32 %v30, %v85
  %v87 = vpop.f32.mrf.mxu0
  %v88 = vpop.f32.mrf.mxu0
  %v89 = vadd.f32 %v30, %v88
  %v90 = vpop.f32.mrf.mxu0
  %91 = vmatprep.mubr.bf16.mxu0 0
  %92 = vmatmul.mubr.bf16.gmra.mxu0 %v49
  %v93 = vpop.f32.mrf.mxu0
  %v94 = vadd.f32 %v30, %v93
  %v95 = vpop.f32.mrf.mxu0
  %v96 = vpop.f32.mrf.mxu0
  %v97 = vadd.f32 %v30, %v96
  %v98 = vpop.f32.mrf.mxu0
  %99 = vdwg.mxu0
  %v100 = vpack.c.bf16 %v89, %v86
  %v101 = vpack.c.bf16 %v97, %v94
  %v104 = vunpack.c.l.b16 %v100
  %v105 = vunpack.c.h.b16 %v100
  %v106 = vunpack.c.l.b16 %v101
  %v107 = vunpack.c.h.b16 %v101
  %v108 = vpack.c.b16 %v104, %v104
  %v109 = vpack.c.b16 %v105, %v105
  %v110 = vpack.c.b16 %v106, %v106
  %v111 = vpack.c.b16 %v107, %v107
  %vm116 = vcmask 519168
  %117 = vst.msk [vmem:[%s3] sm:$0xf] %vm116, %v108
  %118 = vst.msk [vmem:[%s3 + $0x4] sm:$0xf] %vm116, %v109
  %119 = vst.msk [vmem:[%s3 + $0x8] sm:$0xf] %vm116, %v110
  %120 = vst.msk [vmem:[%s3 + $0xc] sm:$0xf] %vm116, %v111
  // Predicated region
  $region14: #{text_decoder_forward.23} parent=0 // pred_check
    _
  $region15: #{text_decoder_forward.23} parent=0 // pred_check_branch
    %122 = sbr.rel (0) target = $region17
  $region16: #{text_decoder_forward.23} parent=0 // pred_region
    _
  $region17: #{text_decoder_forward.23} parent=0 // pred_fallthru
    _
  // Predicated region
  $region18: #{text_decoder_forward.23} parent=0 // pred_check
    _
  $region19: #{text_decoder_forward.23} parent=0 // pred_check_branch
    %124 = sbr.rel (0) target = $region21
  $region20: #{text_decoder_forward.23} parent=0 // pred_region
    _
  $region21: #{text_decoder_forward.23} parent=0 // pred_fallthru
    _

// kernel: text_decoder_forward.26
$region0: #{text_decoder_forward.26}
  #allocation0 [shape = 'u32[]', space=smem, size = 0x4, offset = 0x4, fixed_abs, tag = 'smem constant byte address 0x4 - core index']
  #allocation1 [shape = 'u32[144,128]{1,0:T(1,128)}', space=vmem, size = 0x12000, scoped, tag = 'internal scratch']
  #allocation2 [shape = 'bf16[16,32]{1,0:T(8,128)(2,1)}', space=vmem, size = 0x1000, scoped, tag = 'scratch operand']
  %s0 = inlined_call_operand.vmem [shape: f32[16,32], index: 0, kind: input, shape index: {}]
  %s1 = inlined_call_operand.vmem [shape: f32[1,32], index: 1, kind: input, shape index: {}]
  %s2 = inlined_call_operand.vmem [shape: f32[1,32], index: 2, kind: input, shape index: {}]
  %s3 = inlined_call_operand.vmem [shape: bf16[32,128], index: 3, kind: input, shape index: {}]
  %s4 = inlined_call_operand.vmem [shape: f32[1,128], index: 4, kind: input, shape index: {}]
  %s5 = inlined_call_operand.vmem [shape: bf16[16,128], index: 5, kind: output, shape index: {}]
  %s6 = sld [smem:[#allocation0]]
  $region34: #{text_decoder_forward.26} parent=0
    _
  %s8 = ssub.s32 1, %s6
  %s9 = scalar_select 0, %s8, %s6
  // Predicated region
  $region2: #{text_decoder_forward.26} parent=0 // pred_check
    _
  $region3: #{text_decoder_forward.26} parent=0 // pred_check_branch
    %11 = sbr.rel (0) target = $region5
  $region4: #{text_decoder_forward.26} parent=0 // pred_region
    _
  $region5: #{text_decoder_forward.26} parent=0 // pred_fallthru
    _
  // Predicated region
  $region6: #{text_decoder_forward.26} parent=0 // pred_check
    _
  $region7: #{text_decoder_forward.26} parent=0 // pred_check_branch
    %13 = sbr.rel (0) target = $region9
  $region8: #{text_decoder_forward.26} parent=0 // pred_region
    _
  $region9: #{text_decoder_forward.26} parent=0 // pred_fallthru
    _
  // Predicated region
  $region10: #{text_decoder_forward.26} parent=0 // pred_check
    _
  $region11: #{text_decoder_forward.26} parent=0 // pred_check_branch
    %15 = sbr.rel (0) target = $region13
  $region12: #{text_decoder_forward.26} parent=0 // pred_region
    _
  $region13: #{text_decoder_forward.26} parent=0 // pred_fallthru
    _
  // Predicated region
  $region14: #{text_decoder_forward.26} parent=0 // pred_check
    _
  $region15: #{text_decoder_forward.26} parent=0 // pred_check_branch
    %17 = sbr.rel (0) target = $region17
  $region16: #{text_decoder_forward.26} parent=0 // pred_region
    _
  $region17: #{text_decoder_forward.26} parent=0 // pred_fallthru
    _
  // Predicated region
  $region18: #{text_decoder_forward.26} parent=0 // pred_check
    _
  $region19: #{text_decoder_forward.26} parent=0 // pred_check_branch
    %19 = sbr.rel (0) target = $region21
  $region20: #{text_decoder_forward.26} parent=0 // pred_region
    _
  $region21: #{text_decoder_forward.26} parent=0 // pred_fallthru
    _
  %p21 = scmp.eq.s32.totalorder 0, 0
  // Predicated region
  $region22: #{text_decoder_forward.26} parent=0 // pred_check
    %p22 = pneg %p21
  $region23: #{text_decoder_forward.26} parent=0 // pred_check_branch
    %24 = sbr.rel (%p22) target = $region25
  $region24: #{text_decoder_forward.26} parent=0 // pred_region
    %v25 = vld [vmem:[%s0] sm:$0xff]
    %v26 = vld [vmem:[%s0 + $0x8] sm:$0xff]
    %vm27 = vcmask 261120
    %v28 = vsel %vm27, %v25, 0.0
    %29 = vadd.xlane.f32.xlu0 %v28
    %v30 = vpop.xlane.xlu0 %29
    %v31 = vsel %vm27, %v26, 0.0
    %32 = vadd.xlane.f32.xlu0 %v31
    %v33 = vpop.xlane.xlu0 %32
    %v34 = vrcp.pop 32.0
    %v35 = vmul.f32 %v30, %v34
    %v36 = vmul.f32 %v33, %v34
    %v37 = vsub.f32 %v25, %v35
    %v38 = vsub.f32 %v26, %v36
    %v39 = vmul.f32 %v37, %v37
    %v40 = vmul.f32 %v38, %v38
    %v41 = vsel %vm27, %v39, 0.0
    %42 = vadd.xlane.f32.xlu0 %v41
    %v43 = vpop.xlane.xlu0 %42
    %v44 = vsel %vm27, %v40, 0.0
    %45 = vadd.xlane.f32.xlu0 %v44
    %v46 = vpop.xlane.xlu0 %45
    %v47 = vmul.f32 %v43, %v34
    %v48 = vmul.f32 %v46, %v34
    %v49 = vadd.f32 %v47, 1e-05
    %v50 = vadd.f32 %v48, 1e-05
    %v51 = vrsqrt.pop %v49
    %v52 = vrsqrt.pop %v50
    %v53 = vmul.f32 %v37, %v51
    %v54 = vmul.f32 %v38, %v52
    %v55 = vld [vmem:[%s1] sm:$0x1]
    %v57 = vlaneseq
    %v58 = vshrl.u32 %v57, 7
    %v59 = vsub.s32 0, %v58
    %v60 = vrot.slane %v55, %v59
    %v62 = vmul.f32 %v53, %v60
    %v63 = vmul.f32 %v54, %v60
    %v64 = vld [vmem:[%s2] sm:$0x1]
    %v66 = vlaneseq
    %v67 = vshrl.u32 %v66, 7
    %v68 = vsub.s32 0, %v67
    %v69 = vrot.slane %v64, %v68
    %v71 = vadd.f32 %v62, %v69
    %v72 = vadd.f32 %v63, %v69
    %v73 = vpack.c.bf16 %v72, %v71
    %v75 = vunpack.c.l.b16 %v73
    %v76 = vunpack.c.h.b16 %v73
    %v77 = vpack.c.b16 %v75, %v75
    %v78 = vpack.c.b16 %v76, %v76
    %vm81 = vcmask 257024
    %82 = vst.msk [vmem:[#allocation2] sm:$0xf] %vm81, %v77
    %83 = vst.msk [vmem:[#allocation2 + $0x4] sm:$0xf] %vm81, %v78
  $region25: #{text_decoder_forward.26} parent=0 // pred_fallthru
    _
  %v84 = vld [vmem:[#allocation2] sm:$0xf]
  %v85 = vld [vmem:[#allocation2 + $0x4] sm:$0xf]
  %v86 = vld [vmem:[%s3] sm:$0xf]
  %v87 = vld [vmem:[%s3 + $0x4] sm:$0xf]
  %v88 = vld [vmem:[%s3 + $0x8] sm:$0xf]
  %v89 = vld [vmem:[%s3 + $0xc] sm:$0xf]
  %v90 = vld [vmem:[%s4] sm:$0x1]
  %v92 = vlaneseq
  %v93 = vshrl.u32 %v92, 7
  %v94 = vsub.s32 0, %v93
  %v95 = vrot.slane %v90, %v94
  %v99 = vunpack.c.l.b16 %v84
  %v100 = vunpack.c.l.b16 %v85
  %v101 = vpack.c.b16 %v100, %v99
  %v106 = vunpack.c.l.b16 %v86
  %v107 = vunpack.c.l.b16 %v87
  %v108 = vunpack.c.l.b16 %v88
  %v109 = vunpack.c.l.b16 %v89
  %v110 = vpack.c.b16 %v107, %v106
  %v111 = vpack.c.b16 %v109, %v108
  %vm114 = vcmask 261120
  %v116 = vsel %vm114, %v101, 0
  %118 = vmatprep.subr.bf16.mxu0 0
  %119 = vmatpush1.bf16.msra.mxu0 0
  %120 = vmatprep.subr.bf16.mxu0 0
  %121 = vmatpush1.bf16.msra.mxu0 0
  %122 = vmatprep.subr.bf16.mxu0 0
  %123 = vmatpush1.bf16.msra.mxu0 0
  %124 = vmatprep.subr.bf16.mxu0 0
  %125 = vmatpush1.bf16.msra.mxu0 0
  %126 = vmatprep.subr.bf16.mxu0 0
  %127 = vmatpush1.bf16.msra.mxu0 0
  %128 = vmatprep.subr.bf16.mxu0 0
  %129 = vmatpush1.bf16.msra.mxu0 0
  %130 = vmatprep.subr.bf16.mxu0 0
  %131 = vmatpush1.bf16.msra.mxu0 %v111
  %132 = vmatprep.subr.bf16.mxu0 0
  %133 = vmatpush1.bf16.msra.mxu0 %v110
  %134 = vmatprep.subr.bf16.mxu0 0
  %135 = vmatpush2.bf16.msra.mxu0 0
  %136 = vmatprep.subr.bf16.mxu0 0
  %137 = vmatpush2.bf16.msra.mxu0 0
  %138 = vmatprep.subr.bf16.mxu0 0
  %139 = vmatpush2.bf16.msra.mxu0 0
  %140 = vmatprep.subr.bf16.mxu0 0
  %141 = vmatpush2.bf16.msra.mxu0 0
  %142 = vmatprep.subr.bf16.mxu0 0
  %143 = vmatpush2.bf16.msra.mxu0 0
  %144 = vmatprep.subr.bf16.mxu0 0
  %145 = vmatpush2.bf16.msra.mxu0 0
  %146 = vmatprep.subr.bf16.mxu0 0
  %147 = vmatpush2.bf16.msra.mxu0 0
  %148 = vmatprep.subr.bf16.mxu0 0
  %149 = vmatpush2.bf16.msra.mxu0 0
  %150 = vmatprep.mubr.bf16.mxu0 0
  %151 = vmatmul.mubr.bf16.gmra.mxu0 %v116
  %v152 = vpop.f32.mrf.mxu0
  %v153 = vadd.f32 %v95, %v152
  %v154 = vpop.f32.mrf.mxu0
  %v155 = vpop.f32.mrf.mxu0
  %v156 = vadd.f32 %v95, %v155
  %v157 = vpop.f32.mrf.mxu0
  %158 = vdwg.mxu0
  %v159 = vmul.f32 %v153, 0.5
  %v160 = vmul.f32 %v156, 0.5
  %v161 = vmul.f32 %v153, 0.70710677
  %v162 = vmul.f32 %v156, 0.70710677
  %v163 = verf.f32.pop %v161
  %v164 = verf.f32.pop %v162
  %v165 = vadd.f32 %v163, 1.0
  %v166 = vadd.f32 %v164, 1.0
  %v167 = vmul.f32 %v159, %v165
  %v168 = vmul.f32 %v160, %v166
  %v169 = vpack.c.bf16 %v168, %v167
  %v171 = vunpack.c.l.b16 %v169
  %v172 = vunpack.c.h.b16 %v169
  %v173 = vpack.c.b16 %v171, %v171
  %v174 = vpack.c.b16 %v172, %v172
  %177 = vst [vmem:[%s5] sm:$0xf] %v173
  %178 = vst [vmem:[%s5 + $0x4] sm:$0xf] %v174
  // Predicated region
  $region26: #{text_decoder_forward.26} parent=0 // pred_check
    _
  $region27: #{text_decoder_forward.26} parent=0 // pred_check_branch
    %180 = sbr.rel (0) target = $region29
  $region28: #{text_decoder_forward.26} parent=0 // pred_region
    _
  $region29: #{text_decoder_forward.26} parent=0 // pred_fallthru
    _
  // Predicated region
  $region30: #{text_decoder_forward.26} parent=0 // pred_check
    _
  $region31: #{text_decoder_forward.26} parent=0 // pred_check_branch
    %182 = sbr.rel (0) target = $region33
  $region32: #{text_decoder_forward.26} parent=0 // pred_region
    _
  $region33: #{text_decoder_forward.26} parent=0 // pred_fallthru
    _

// kernel: text_decoder_forward.24
$region0: #{text_decoder_forward.24}
  #allocation0 [shape = 'u32[]', space=smem, size = 0x4, offset = 0x4, fixed_abs, tag = 'smem constant byte address 0x4 - core index']
  #allocation1 [shape = 'u32[144,128]{1,0:T(1,128)}', space=vmem, size = 0x12000, scoped, tag = 'internal scratch']
  %s0 = inlined_call_operand.vmem [shape: bf16[16,32], index: 0, kind: input, shape index: {}]
  %s1 = inlined_call_operand.vmem [shape: bf16[32,64], index: 1, kind: input, shape index: {}]
  %s2 = inlined_call_operand.vmem [shape: bf16[16,32], index: 2, kind: output, shape index: {}]
  %s3 = sld [smem:[#allocation0]]
  $region41: #{text_decoder_forward.24} parent=0
    _
  %s5 = ssub.s32 1, %s3
  %s6 = scalar_select 0, %s5, %s3
  loop: start=0, step=1, limit=4
  $region2: #{text_decoder_forward.24} parent=0 // loop_pre_header
    _
  $region3: #{text_decoder_forward.24} parent=0 // loop_header
    %s8 = sphi 0, %s12
    %p9 = scmp.ge.s32.totalorder %s8, 4
    %s18 = sphi 0, %s20
    %s21 = sphi 0, %s18
    %s22 = sphi 0, %s21
    %s38 = sphi 0, %s22
    %s44 = sphi 0, %s46
    %s47 = sphi 0, %s44
    %s48 = sphi 0, %s47
    %s64 = sphi 0, %s48
    %s70 = sphi 0, %s72
    %s73 = sphi 0, %s70
    %s74 = sphi 0, %s73
    %s90 = sphi 0, %s74
  $region4: #{text_decoder_forward.24} parent=0 // loop_header_branch
    %11 = sbr.rel (%p9) target = $region8
  $region5: #{text_decoder_forward.24} parent=0 // loop_body
    %s13 = ssub.s32 %s8, 1
    %s14 = ssub.s32 %s8, 2
    %s15 = sadd.s32 %s8, 1
    %s16 = ssub.s32 %s8, %s15
    %p17 = scmp.eq.s32.totalorder %s16, 0
    %s19 = sadd.s32 %s18, 1
    %s20 = scalar_select %p17, %s18, %s19
    %p23 = pneg %p17
    %p24 = scmp.eq.s32.totalorder %s8, 1
    %p25 = por %p23, %p24
    %p26 = scmp.ne.s32.totalorder %s18, %s21
    %p27 = scmp.eq.s32.totalorder %s8, 0
    %p28 = por %p26, %p27
    %p29 = scmp.ne.s32.totalorder %s18, %s21
    %p30 = scmp.eq.s32.totalorder %s13, 1
    %p31 = por %p29, %p30
    %p32 = scmp.ne.s32.totalorder %s21, %s22
    %p33 = scmp.eq.s32.totalorder %s13, 0
    %p34 = por %p32, %p33
    %p35 = scmp.ne.s32.totalorder %s21, %s22
    %p36 = scmp.eq.s32.totalorder %s14, 1
    %p37 = por %p35, %p36
    %p39 = scmp.ne.s32.totalorder %s22, %s38
    %p40 = scmp.eq.s32.totalorder %s14, 0
    %p41 = por %p39, %p40
    %s42 = ssub.s32 %s8, %s15
    %p43 = scmp.eq.s32.totalorder %s42, 0
    %s45 = sadd.s32 %s44, 1
    %s46 = scalar_select %p43, %s44, %s45
    %p49 = pneg %p43
    %p50 = scmp.eq.s32.totalorder %s8, 1
    %p51 = por %p49, %p50
    %p52 = scmp.ne.s32.totalorder %s44, %s47
    %p53 = scmp.eq.s32.totalorder %s8, 0
    %p54 = por %p52, %p53
    %p55 = scmp.ne.s32.totalorder %s44, %s47
    %p56 = scmp.eq.s32.totalorder %s13, 1
    %p57 = por %p55, %p56
    %p58 = scmp.ne.s32.totalorder %s47, %s48
    %p59 = scmp.eq.s32.totalorder %s13, 0
    %p60 = por %p58, %p59
    %p61 = scmp.ne.s32.totalorder %s47, %s48
    %p62 = scmp.eq.s32.totalorder %s14, 1
    %p63 = por %p61, %p62
    %p65 = scmp.ne.s32.totalorder %s48, %s64
    %p66 = scmp.eq.s32.totalorder %s14, 0
    %p67 = por %p65, %p66
    %s68 = ssub.s32 %s8, %s15
    %p69 = scmp.eq.s32.totalorder %s68, 0
    %s71 = sadd.s32 %s70, 1
    %s72 = scalar_select %p69, %s70, %s71
    %p75 = pneg %p69
    %p76 = scmp.eq.s32.totalorder %s8, 1
    %p77 = por %p75, %p76
    %p78 = scmp.ne.s32.totalorder %s70, %s73
    %p79 = scmp.eq.s32.totalorder %s8, 0
    %p80 = por %p78, %p79
    %p81 = scmp.ne.s32.totalorder %s70, %s73
    %p82 = scmp.eq.s32.totalorder %s13, 1
    %p83 = por %p81, %p82
    %p84 = scmp.ne.s32.totalorder %s73, %s74
    %p85 = scmp.eq.s32.totalorder %s13, 0
    %p86 = por %p84, %p85
    %p87 = scmp.ne.s32.totalorder %s73, %s74
    %p88 = scmp.eq.s32.totalorder %s14, 1
    %p89 = por %p87, %p88
    %p91 = scmp.ne.s32.totalorder %s74, %s90
    %p92 = scmp.eq.s32.totalorder %s14, 0
    %p93 = por %p91, %p92
    %p94 = scmp.le.s32.totalorder 1, %s8
    %p95 = scmp.lt.s32.totalorder %s8, 3
    %p96 = pnand %p94, %p95
    %p97 = pneg %p96
    // Predicated region
    $region9: #{text_decoder_forward.24} parent=5 // pred_check
      _
    $region10: #{text_decoder_forward.24} parent=5 // pred_check_branch
      %99 = sbr.rel (%p96) target = $region12
    $region11: #{text_decoder_forward.24} parent=5 // pred_region
      %s100 = ssub.s32 %s8, 1
    $region12: #{text_decoder_forward.24} parent=5 // pred_fallthru
      _
    %p101 = scmp.lt.s32.totalorder %s8, 2
    // Predicated region
    $region13: #{text_decoder_forward.24} parent=5 // pred_check
      %p102 = pneg %p101
    $region14: #{text_decoder_forward.24} parent=5 // pred_check_branch
      %104 = sbr.rel (%p102) target = $region16
    $region15: #{text_decoder_forward.24} parent=5 // pred_region
      // Predicated region
      $region17: #{text_decoder_forward.24} parent=15 // pred_check
        %p105 = pneg %p28
      $region18: #{text_decoder_forward.24} parent=15 // pred_check_branch
        %107 = sbr.rel (%p105) target = $region20
      $region19: #{text_decoder_forward.24} parent=15 // pred_region
        %p108 = scmp.lt.s32.totalorder %s8, 1
        %s109 = scalar_select %p108, %s8, 1
        %s110 = smul.addr %s109, 4
        %s111 = scalar_lea.vmem %s0, %s110
      $region20: #{text_decoder_forward.24} parent=15 // pred_fallthru
        _
      // Predicated region
      $region21: #{text_decoder_forward.24} parent=15 // pred_check
        %p112 = pneg %p54
      $region22: #{text_decoder_forward.24} parent=15 // pred_check_branch
        %114 = sbr.rel (%p112) target = $region24
      $region23: #{text_decoder_forward.24} parent=15 // pred_region
        %s115 = smul.u32 2, %s8
        %p116 = scmp.lt.s32.totalorder %s115, 3
        %s117 = scalar_select %p116, %s115, 3
        %s118 = smul.addr %s117, 4
        %s119 = scalar_lea.vmem %s1, %s118
        %s120 = smul.u32 2, %s8
      $region24: #{text_decoder_forward.24} parent=15 // pred_fallthru
        _
    $region16: #{text_decoder_forward.24} parent=5 // pred_fallthru
      _
    %p121 = scmp.le.s32.totalorder 1, %s8
    %p122 = scmp.lt.s32.totalorder %s8, 3
    %p123 = pnand %p121, %p122
    %p124 = pneg %p123
    // Predicated region
    $region25: #{text_decoder_forward.24} parent=5 // pred_check
      _
    $region26: #{text_decoder_forward.24} parent=5 // pred_check_branch
      %126 = sbr.rel (%p123) target = $region28
    $region27: #{text_decoder_forward.24} parent=5 // pred_region
      %s127 = ssub.s32 %s8, 1
      %p128 = scmp.lt.s32.totalorder %s13, 1
      %s129 = scalar_select %p128, %s13, 1
      %s130 = smul.addr %s129, 4
      %s131 = scalar_lea.vmem %s0, %s130
      %p132 = pneg %p34
      %p133 = pneg %p31
      %s134 = smul.u32 2, %s13
      %p135 = scmp.lt.s32.totalorder %s134, 3
      %s136 = scalar_select %p135, %s134, 3
      %s137 = smul.addr %s136, 4
      %s138 = scalar_lea.vmem %s1, %s137
      %p139 = pneg %p60
      %p140 = pneg %p57
      %p141 = pneg %p86
      %p142 = pneg %p83
      %p143 = scmp.lt.s32.totalorder %s13, 1
      %s144 = scalar_select %p143, %s13, 1
      %s145 = smul.addr %s144, 4
      %s146 = scalar_lea.vmem %s2, %s145
      %p147 = scmp.lt.s32.totalorder %s13, 1
      %s148 = scalar_select %p147, %s13, 1
      %s149 = smul.addr %s148, 4
      %s150 = scalar_lea.vmem %s0, %s149
      %s151 = smul.u32 2, %s13
      %p152 = scmp.lt.s32.totalorder %s151, 3
      %s153 = scalar_select %p152, %s151, 3
      %s154 = smul.addr %s153, 4
      %s155 = scalar_lea.vmem %s1, %s154
      %s156 = smul.u32 2, %s13
      %p157 = scmp.lt.s32.totalorder %s13, 1
      %s158 = scalar_select %p157, %s13, 1
      %s159 = smul.addr %s158, 4
      %s160 = scalar_lea.vmem %s2, %s159
      %v162 = vld [vmem:[%s150] sm:$0xf]
      %v163 = vld [vmem:[%s155] sm:$0xf]
      %v164 = vld [vmem:[%s155 + $0x4] sm:$0xf]
      %v167 = vunpack.c.l.b16 %v163
      %v168 = vunpack.c.l.b16 %v164
      %v169 = vpack.c.b16 %v168, %v167
      %vm170 = vcmask 64512
      %v172 = vsel %vm170, %v162, 0
      %v175 = vsel %vm170, %v169, 0
      %177 = vmatprep.subr.bf16.mxu0 0
      %178 = vmatpush1.bf16.xpose.msra.mxu0 0
      %179 = vmatprep.subr.bf16.mxu0 0
      %180 = vmatpush1.bf16.xpose.msra.mxu0 0
      %181 = vmatprep.subr.bf16.mxu0 0
      %182 = vmatpush1.bf16.xpose.msra.mxu0 0
      %183 = vmatprep.subr.bf16.mxu0 0
      %184 = vmatpush1.bf16.xpose.msra.mxu0 0
      %185 = vmatprep.subr.bf16.mxu0 0
      %186 = vmatpush1.bf16.xpose.msra.mxu0 0
      %187 = vmatprep.subr.bf16.mxu0 0
      %188 = vmatpush1.bf16.xpose.msra.mxu0 0
      %189 = vmatprep.subr.bf16.mxu0 0
      %190 = vmatpush1.bf16.xpose.msra.mxu0 0
      %191 = vmatprep.subr.bf16.mxu0 0
      %192 = vmatpush1.bf16.xpose.msra.mxu0 %v175
      %193 = vmatprep.subr.bf16.mxu0 0
      %194 = vmatpush2.bf16.xpose.msra.mxu0 0
      %195 = vmatprep.subr.bf16.mxu0 0
      %196 = vmatpush2.bf16.xpose.msra.mxu0 0
      %197 = vmatprep.subr.bf16.mxu0 0
      %198 = vmatpush2.bf16.xpose.msra.mxu0 0
      %199 = vmatprep.subr.bf16.mxu0 0
      %200 = vmatpush2.bf16.xpose.msra.mxu0 0
      %201 = vmatprep.subr.bf16.mxu0 0
      %202 = vmatpush2.bf16.xpose.msra.mxu0 0
      %203 = vmatprep.subr.bf16.mxu0 0
      %204 = vmatpush2.bf16.xpose.msra.mxu0 0
      %205 = vmatprep.subr.bf16.mxu0 0
      %206 = vmatpush2.bf16.xpose.msra.mxu0 0
      %207 = vmatprep.subr.bf16.mxu0 0
      %208 = vmatpush2.bf16.xpose.msra.mxu0 0
      %209 = vmatprep.mubr.bf16.mxu0 0
      %210 = vmatmul.mubr.bf16.gmra.mxu0 %v172
      %v211 = vpop.f32.mrf.mxu0
      %v212 = vadd.f32 0.0, %v211
      %v213 = vpop.f32.mrf.mxu0
      %v214 = vpop.f32.mrf.mxu0
      %v215 = vpop.f32.mrf.mxu0
      %216 = vdwg.mxu0
      %vm217 = vcmask 130048
      %v218 = vsel %vm217, %v212, -inf
      %219 = vmax.xlane.f32.xlu0 %v218
      %v220 = vpop.xlane.xlu0 %219
      %v221 = vsub.f32 %v212, %v220
      %v222 = vmul.f32 %v221, 1.442695
      %v223 = vpow.pop %v222
      %v224 = vpack.c.bf16 %v223, %v223
      %225 = vrot.lane.b32.xlu0 %v169, 96
      %v226 = vpop.permute.xlu0 %225
      %v229 = vsel %vm217, %v224, 0
      %231 = vmatprep.subr.bf16.mxu0 0
      %232 = vmatpush1.bf16.msra.mxu0 0
      %233 = vmatprep.subr.bf16.mxu0 0
      %234 = vmatpush1.bf16.msra.mxu0 0
      %235 = vmatprep.subr.bf16.mxu0 0
      %236 = vmatpush1.bf16.msra.mxu0 0
      %237 = vmatprep.subr.bf16.mxu0 0
      %238 = vmatpush1.bf16.msra.mxu0 0
      %239 = vmatprep.subr.bf16.mxu0 0
      %240 = vmatpush1.bf16.msra.mxu0 0
      %241 = vmatprep.subr.bf16.mxu0 0
      %242 = vmatpush1.bf16.msra.mxu0 0
      %243 = vmatprep.subr.bf16.mxu0 0
      %244 = vmatpush1.bf16.msra.mxu0 0
      %245 = vmatprep.subr.bf16.mxu0 0
      %246 = vmatpush1.bf16.msra.mxu0 %v226
      %247 = vmatprep.subr.bf16.mxu0 0
      %248 = vmatpush2.bf16.msra.mxu0 0
      %249 = vmatprep.subr.bf16.mxu0 0
      %250 = vmatpush2.bf16.msra.mxu0 0
      %251 = vmatprep.subr.bf16.mxu0 0
      %252 = vmatpush2.bf16.msra.mxu0 0
      %253 = vmatprep.subr.bf16.mxu0 0
      %254 = vmatpush2.bf16.msra.mxu0 0
      %255 = vmatprep.subr.bf16.mxu0 0
      %256 = vmatpush2.bf16.msra.mxu0 0
      %257 = vmatprep.subr.bf16.mxu0 0
      %258 = vmatpush2.bf16.msra.mxu0 0
      %259 = vmatprep.subr.bf16.mxu0 0
      %260 = vmatpush2.bf16.msra.mxu0 0
      %261 = vmatprep.subr.bf16.mxu0 0
      %262 = vmatpush2.bf16.msra.mxu0 0
      %263 = vmatprep.mubr.bf16.mxu0 0
      %264 = vmatmul.mubr.bf16.gmra.mxu0 %v229
      %v265 = vpop.f32.mrf.mxu0
      %v266 = vadd.f32 0.0, %v265
      %v267 = vpop.f32.mrf.mxu0
      %v268 = vpop.f32.mrf.mxu0
      %v269 = vpop.f32.mrf.mxu0
      %270 = vdwg.mxu0
      %v271 = vsel %vm217, %v223, 0.0
      %272 = vadd.xlane.f32.xlu0 %v271
      %v273 = vpop.xlane.xlu0 %272
      %v274 = vrcp.pop %v273
      %v275 = vmul.f32 %v266, %v274
      %v276 = vpack.c.bf16 %v275, %v275
      %vm277 = vcmask 60416
      %278 = vst.msk [vmem:[%s160] sm:$0xf] %vm277, %v276
      %v280 = vunpack.c.l.b16 %v162
      %v281 = vpack.c.b16 %v280, %v280
      %282 = vrot.lane.b32.xlu0 %v281, 120
      %v283 = vpop.permute.xlu0 %282
      %284 = vrot.lane.b32.xlu0 %v169, 120
      %v285 = vpop.permute.xlu0 %284
      %v287 = vsel %vm170, %v283, 0
      %v290 = vsel %vm170, %v285, 0
      %292 = vmatprep.subr.bf16.mxu0 0
      %293 = vmatpush1.bf16.xpose.msra.mxu0 0
      %294 = vmatprep.subr.bf16.mxu0 0
      %295 = vmatpush1.bf16.xpose.msra.mxu0 0
      %296 = vmatprep.subr.bf16.mxu0 0
      %297 = vmatpush1.bf16.xpose.msra.mxu0 0
      %298 = vmatprep.subr.bf16.mxu0 0
      %299 = vmatpush1.bf16.xpose.msra.mxu0 0
      %300 = vmatprep.subr.bf16.mxu0 0
      %301 = vmatpush1.bf16.xpose.msra.mxu0 0
      %302 = vmatprep.subr.bf16.mxu0 0
      %303 = vmatpush1.bf16.xpose.msra.mxu0 0
      %304 = vmatprep.subr.bf16.mxu0 0
      %305 = vmatpush1.bf16.xpose.msra.mxu0 0
      %306 = vmatprep.subr.bf16.mxu0 0
      %307 = vmatpush1.bf16.xpose.msra.mxu0 %v290
      %308 = vmatprep.subr.bf16.mxu0 0
      %309 = vmatpush2.bf16.xpose.msra.mxu0 0
      %310 = vmatprep.subr.bf16.mxu0 0
      %311 = vmatpush2.bf16.xpose.msra.mxu0 0
      %312 = vmatprep.subr.bf16.mxu0 0
      %313 = vmatpush2.bf16.xpose.msra.mxu0 0
      %314 = vmatprep.subr.bf16.mxu0 0
      %315 = vmatpush2.bf16.xpose.msra.mxu0 0
      %316 = vmatprep.subr.bf16.mxu0 0
      %317 = vmatpush2.bf16.xpose.msra.mxu0 0
      %318 = vmatprep.subr.bf16.mxu0 0
      %319 = vmatpush2.bf16.xpose.msra.mxu0 0
      %320 = vmatprep.subr.bf16.mxu0 0
      %321 = vmatpush2.bf16.xpose.msra.mxu0 0
      %322 = vmatprep.subr.bf16.mxu0 0
      %323 = vmatpush2.bf16.xpose.msra.mxu0 0
      %324 = vmatprep.mubr.bf16.mxu0 0
      %325 = vmatmul.mubr.bf16.gmra.mxu0 %v287
      %v326 = vpop.f32.mrf.mxu0
      %v327 = vadd.f32 0.0, %v326
      %v328 = vpop.f32.mrf.mxu0
      %v329 = vpop.f32.mrf.mxu0
      %v330 = vpop.f32.mrf.mxu0
      %331 = vdwg.mxu0
      %v332 = vsel %vm217, %v327, -inf
      %333 = vmax.xlane.f32.xlu0 %v332
      %v334 = vpop.xlane.xlu0 %333
      %v335 = vsub.f32 %v327, %v334
      %v336 = vmul.f32 %v335, 1.442695
      %v337 = vpow.pop %v336
      %v338 = vpack.c.bf16 %v337, %v337
      %339 = vrot.lane.b32.xlu0 %v169, 88
      %v340 = vpop.permute.xlu0 %339
      %v343 = vsel %vm217, %v338, 0
      %345 = vmatprep.subr.bf16.mxu0 0
      %346 = vmatpush1.bf16.msra.mxu0 0
      %347 = vmatprep.subr.bf16.mxu0 0
      %348 = vmatpush1.bf16.msra.mxu0 0
      %349 = vmatprep.subr.bf16.mxu0 0
      %350 = vmatpush1.bf16.msra.mxu0 0
      %351 = vmatprep.subr.bf16.mxu0 0
      %352 = vmatpush1.bf16.msra.mxu0 0
      %353 = vmatprep.subr.bf16.mxu0 0
      %354 = vmatpush1.bf16.msra.mxu0 0
      %355 = vmatprep.subr.bf16.mxu0 0
      %356 = vmatpush1.bf16.msra.mxu0 0
      %357 = vmatprep.subr.bf16.mxu0 0
      %358 = vmatpush1.bf16.msra.mxu0 0
      %359 = vmatprep.subr.bf16.mxu0 0
      %360 = vmatpush1.bf16.msra.mxu0 %v340
      %361 = vmatprep.subr.bf16.mxu0 0
      %362 = vmatpush2.bf16.msra.mxu0 0
      %363 = vmatprep.subr.bf16.mxu0 0
      %364 = vmatpush2.bf16.msra.mxu0 0
      %365 = vmatprep.subr.bf16.mxu0 0
      %366 = vmatpush2.bf16.msra.mxu0 0
      %367 = vmatprep.subr.bf16.mxu0 0
      %368 = vmatpush2.bf16.msra.mxu0 0
      %369 = vmatprep.subr.bf16.mxu0 0
      %370 = vmatpush2.bf16.msra.mxu0 0
      %371 = vmatprep.subr.bf16.mxu0 0
      %372 = vmatpush2.bf16.msra.mxu0 0
      %373 = vmatprep.subr.bf16.mxu0 0
      %374 = vmatpush2.bf16.msra.mxu0 0
      %375 = vmatprep.subr.bf16.mxu0 0
      %376 = vmatpush2.bf16.msra.mxu0 0
      %377 = vmatprep.mubr.bf16.mxu0 0
      %378 = vmatmul.mubr.bf16.gmra.mxu0 %v343
      %v379 = vpop.f32.mrf.mxu0
      %v380 = vadd.f32 0.0, %v379
      %v381 = vpop.f32.mrf.mxu0
      %v382 = vpop.f32.mrf.mxu0
      %v383 = vpop.f32.mrf.mxu0
      %384 = vdwg.mxu0
      %v385 = vsel %vm217, %v337, 0.0
      %386 = vadd.xlane.f32.xlu0 %v385
      %v387 = vpop.xlane.xlu0 %386
      %v388 = vrcp.pop %v387
      %v389 = vmul.f32 %v380, %v388
      %v390 = vpack.c.bf16 %v389, %v389
      %v392 = vunpack.c.l.b16 %v390
      %v393 = vpack.c.b16 %v392, %v392
      %394 = vrot.lane.b32.xlu0 %v393, 8
      %v395 = vpop.permute.xlu0 %394
      %vm397 = vcmask 126016
      %398 = vst.msk [vmem:[%s160] sm:$0xf] %vm397, %v395
      %399 = vrot.lane.b32.xlu0 %v281, 112
      %v400 = vpop.permute.xlu0 %399
      %401 = vrot.lane.b32.xlu0 %v169, 112
      %v402 = vpop.permute.xlu0 %401
      %v404 = vsel %vm170, %v400, 0
      %v407 = vsel %vm170, %v402, 0
      %409 = vmatprep.subr.bf16.mxu0 0
      %410 = vmatpush1.bf16.xpose.msra.mxu0 0
      %411 = vmatprep.subr.bf16.mxu0 0
      %412 = vmatpush1.bf16.xpose.msra.mxu0 0
      %413 = vmatprep.subr.bf16.mxu0 0
      %414 = vmatpush1.bf16.xpose.msra.mxu0 0
      %415 = vmatprep.subr.bf16.mxu0 0
      %416 = vmatpush1.bf16.xpose.msra.mxu0 0
      %417 = vmatprep.subr.bf16.mxu0 0
      %418 = vmatpush1.bf16.xpose.msra.mxu0 0
      %419 = vmatprep.subr.bf16.mxu0 0
      %420 = vmatpush1.bf16.xpose.msra.mxu0 0
      %421 = vmatprep.subr.bf16.mxu0 0
      %422 = vmatpush1.bf16.xpose.msra.mxu0 0
      %423 = vmatprep.subr.bf16.mxu0 0
      %424 = vmatpush1.bf16.xpose.msra.mxu0 %v407
      %425 = vmatprep.subr.bf16.mxu0 0
      %426 = vmatpush2.bf16.xpose.msra.mxu0 0
      %427 = vmatprep.subr.bf16.mxu0 0
      %428 = vmatpush2.bf16.xpose.msra.mxu0 0
      %429 = vmatprep.subr.bf16.mxu0 0
      %430 = vmatpush2.bf16.xpose.msra.mxu0 0
      %431 = vmatprep.subr.bf16.mxu0 0
      %432 = vmatpush2.bf16.xpose.msra.mxu0 0
      %433 = vmatprep.subr.bf16.mxu0 0
      %434 = vmatpush2.bf16.xpose.msra.mxu0 0
      %435 = vmatprep.subr.bf16.mxu0 0
      %436 = vmatpush2.bf16.xpose.msra.mxu0 0
      %437 = vmatprep.subr.bf16.mxu0 0
      %438 = vmatpush2.bf16.xpose.msra.mxu0 0
      %439 = vmatprep.subr.bf16.mxu0 0
      %440 = vmatpush2.bf16.xpose.msra.mxu0 0
      %441 = vmatprep.mubr.bf16.mxu0 0
      %442 = vmatmul.mubr.bf16.gmra.mxu0 %v404
      %v443 = vpop.f32.mrf.mxu0
      %v444 = vadd.f32 0.0, %v443
      %v445 = vpop.f32.mrf.mxu0
      %v446 = vpop.f32.mrf.mxu0
      %v447 = vpop.f32.mrf.mxu0
      %448 = vdwg.mxu0
      %v449 = vsel %vm217, %v444, -inf
      %450 = vmax.xlane.f32.xlu0 %v449
      %v451 = vpop.xlane.xlu0 %450
      %v452 = vsub.f32 %v444, %v451
      %v453 = vmul.f32 %v452, 1.442695
      %v454 = vpow.pop %v453
      %v455 = vpack.c.bf16 %v454, %v454
      %456 = vrot.lane.b32.xlu0 %v169, 80
      %v457 = vpop.permute.xlu0 %456
      %v460 = vsel %vm217, %v455, 0
      %462 = vmatprep.subr.bf16.mxu0 0
      %463 = vmatpush1.bf16.msra.mxu0 0
      %464 = vmatprep.subr.bf16.mxu0 0
      %465 = vmatpush1.bf16.msra.mxu0 0
      %466 = vmatprep.subr.bf16.mxu0 0
      %467 = vmatpush1.bf16.msra.mxu0 0
      %468 = vmatprep.subr.bf16.mxu0 0
      %469 = vmatpush1.bf16.msra.mxu0 0
      %470 = vmatprep.subr.bf16.mxu0 0
      %471 = vmatpush1.bf16.msra.mxu0 0
      %472 = vmatprep.subr.bf16.mxu0 0
      %473 = vmatpush1.bf16.msra.mxu0 0
      %474 = vmatprep.subr.bf16.mxu0 0
      %475 = vmatpush1.bf16.msra.mxu0 0
      %476 = vmatprep.subr.bf16.mxu0 0
      %477 = vmatpush1.bf16.msra.mxu0 %v457
      %478 = vmatprep.subr.bf16.mxu0 0
      %479 = vmatpush2.bf16.msra.mxu0 0
      %480 = vmatprep.subr.bf16.mxu0 0
      %481 = vmatpush2.bf16.msra.mxu0 0
      %482 = vmatprep.subr.bf16.mxu0 0
      %483 = vmatpush2.bf16.msra.mxu0 0
      %484 = vmatprep.subr.bf16.mxu0 0
      %485 = vmatpush2.bf16.msra.mxu0 0
      %486 = vmatprep.subr.bf16.mxu0 0
      %487 = vmatpush2.bf16.msra.mxu0 0
      %488 = vmatprep.subr.bf16.mxu0 0
      %489 = vmatpush2.bf16.msra.mxu0 0
      %490 = vmatprep.subr.bf16.mxu0 0
      %491 = vmatpush2.bf16.msra.mxu0 0
      %492 = vmatprep.subr.bf16.mxu0 0
      %493 = vmatpush2.bf16.msra.mxu0 0
      %494 = vmatprep.mubr.bf16.mxu0 0
      %495 = vmatmul.mubr.bf16.gmra.mxu0 %v460
      %v496 = vpop.f32.mrf.mxu0
      %v497 = vadd.f32 0.0, %v496
      %v498 = vpop.f32.mrf.mxu0
      %v499 = vpop.f32.mrf.mxu0
      %v500 = vpop.f32.mrf.mxu0
      %501 = vdwg.mxu0
      %v502 = vsel %vm217, %v454, 0.0
      %503 = vadd.xlane.f32.xlu0 %v502
      %v504 = vpop.xlane.xlu0 %503
      %v505 = vrcp.pop %v504
      %v506 = vmul.f32 %v497, %v505
      %v507 = vpack.c.bf16 %v506, %v506
      %v509 = vunpack.c.l.b16 %v507
      %v510 = vpack.c.b16 %v509, %v509
      %511 = vrot.lane.b32.xlu0 %v510, 16
      %v512 = vpop.permute.xlu0 %511
      %vm514 = vcmask 191616
      %515 = vst.msk [vmem:[%s160] sm:$0xf] %vm514, %v512
      %516 = vrot.lane.b32.xlu0 %v281, 104
      %v517 = vpop.permute.xlu0 %516
      %518 = vrot.lane.b32.xlu0 %v169, 104
      %v519 = vpop.permute.xlu0 %518
      %v521 = vsel %vm170, %v517, 0
      %v524 = vsel %vm170, %v519, 0
      %526 = vmatprep.subr.bf16.mxu0 0
      %527 = vmatpush1.bf16.xpose.msra.mxu0 0
      %528 = vmatprep.subr.bf16.mxu0 0
      %529 = vmatpush1.bf16.xpose.msra.mxu0 0
      %530 = vmatprep.subr.bf16.mxu0 0
      %531 = vmatpush1.bf16.xpose.msra.mxu0 0
      %532 = vmatprep.subr.bf16.mxu0 0
      %533 = vmatpush1.bf16.xpose.msra.mxu0 0
      %534 = vmatprep.subr.bf16.mxu0 0
      %535 = vmatpush1.bf16.xpose.msra.mxu0 0
      %536 = vmatprep.subr.bf16.mxu0 0
      %537 = vmatpush1.bf16.xpose.msra.mxu0 0
      %538 = vmatprep.subr.bf16.mxu0 0
      %539 = vmatpush1.bf16.xpose.msra.mxu0 0
      %540 = vmatprep.subr.bf16.mxu0 0
      %541 = vmatpush1.bf16.xpose.msra.mxu0 %v524
      %542 = vmatprep.subr.bf16.mxu0 0
      %543 = vmatpush2.bf16.xpose.msra.mxu0 0
      %544 = vmatprep.subr.bf16.mxu0 0
      %545 = vmatpush2.bf16.xpose.msra.mxu0 0
      %546 = vmatprep.subr.bf16.mxu0 0
      %547 = vmatpush2.bf16.xpose.msra.mxu0 0
      %548 = vmatprep.subr.bf16.mxu0 0
      %549 = vmatpush2.bf16.xpose.msra.mxu0 0
      %550 = vmatprep.subr.bf16.mxu0 0
      %551 = vmatpush2.bf16.xpose.msra.mxu0 0
      %552 = vmatprep.subr.bf16.mxu0 0
      %553 = vmatpush2.bf16.xpose.msra.mxu0 0
      %554 = vmatprep.subr.bf16.mxu0 0
      %555 = vmatpush2.bf16.xpose.msra.mxu0 0
      %556 = vmatprep.subr.bf16.mxu0 0
      %557 = vmatpush2.bf16.xpose.msra.mxu0 0
      %558 = vmatprep.mubr.bf16.mxu0 0
      %559 = vmatmul.mubr.bf16.gmra.mxu0 %v521
      %v560 = vpop.f32.mrf.mxu0
      %v561 = vadd.f32 0.0, %v560
      %v562 = vpop.f32.mrf.mxu0
      %v563 = vpop.f32.mrf.mxu0
      %v564 = vpop.f32.mrf.mxu0
      %565 = vdwg.mxu0
      %v566 = vsel %vm217, %v561, -inf
      %567 = vmax.xlane.f32.xlu0 %v566
      %v568 = vpop.xlane.xlu0 %567
      %v569 = vsub.f32 %v561, %v568
      %v570 = vmul.f32 %v569, 1.442695
      %v571 = vpow.pop %v570
      %v572 = vpack.c.bf16 %v571, %v571
      %573 = vrot.lane.b32.xlu0 %v169, 72
      %v574 = vpop.permute.xlu0 %573
      %v577 = vsel %vm217, %v572, 0
      %579 = vmatprep.subr.bf16.mxu0 0
      %580 = vmatpush1.bf16.msra.mxu0 0
      %581 = vmatprep.subr.bf16.mxu0 0
      %582 = vmatpush1.bf16.msra.mxu0 0
      %583 = vmatprep.subr.bf16.mxu0 0
      %584 = vmatpush1.bf16.msra.mxu0 0
      %585 = vmatprep.subr.bf16.mxu0 0
      %586 = vmatpush1.bf16.msra.mxu0 0
      %587 = vmatprep.subr.bf16.mxu0 0
      %588 = vmatpush1.bf16.msra.mxu0 0
      %589 = vmatprep.subr.bf16.mxu0 0
      %590 = vmatpush1.bf16.msra.mxu0 0
      %591 = vmatprep.subr.bf16.mxu0 0
      %592 = vmatpush1.bf16.msra.mxu0 0
      %593 = vmatprep.subr.bf16.mxu0 0
      %594 = vmatpush1.bf16.msra.mxu0 %v574
      %595 = vmatprep.subr.bf16.mxu0 0
      %596 = vmatpush2.bf16.msra.mxu0 0
      %597 = vmatprep.subr.bf16.mxu0 0
      %598 = vmatpush2.bf16.msra.mxu0 0
      %599 = vmatprep.subr.bf16.mxu0 0
      %600 = vmatpush2.bf16.msra.mxu0 0
      %601 = vmatprep.subr.bf16.mxu0 0
      %602 = vmatpush2.bf16.msra.mxu0 0
      %603 = vmatprep.subr.bf16.mxu0 0
      %604 = vmatpush2.bf16.msra.mxu0 0
      %605 = vmatprep.subr.bf16.mxu0 0
      %606 = vmatpush2.bf16.msra.mxu0 0
      %607 = vmatprep.subr.bf16.mxu0 0
      %608 = vmatpush2.bf16.msra.mxu0 0
      %609 = vmatprep.subr.bf16.mxu0 0
      %610 = vmatpush2.bf16.msra.mxu0 0
      %611 = vmatprep.mubr.bf16.mxu0 0
      %612 = vmatmul.mubr.bf16.gmra.mxu0 %v577
      %v613 = vpop.f32.mrf.mxu0
      %v614 = vadd.f32 0.0, %v613
      %v615 = vpop.f32.mrf.mxu0
      %v616 = vpop.f32.mrf.mxu0
      %v617 = vpop.f32.mrf.mxu0
      %618 = vdwg.mxu0
      %v619 = vsel %vm217, %v571, 0.0
      %620 = vadd.xlane.f32.xlu0 %v619
      %v621 = vpop.xlane.xlu0 %620
      %v622 = vrcp.pop %v621
      %v623 = vmul.f32 %v614, %v622
      %v624 = vpack.c.bf16 %v623, %v623
      %v626 = vunpack.c.l.b16 %v624
      %v627 = vpack.c.b16 %v626, %v626
      %628 = vrot.lane.b32.xlu0 %v627, 24
      %v629 = vpop.permute.xlu0 %628
      %vm631 = vcmask 257216
      %632 = vst.msk [vmem:[%s160] sm:$0xf] %vm631, %v629
      %p633 = scmp.lt.s32.totalorder %s13, 1
      %s634 = scalar_select %p633, %s13, 1
      %s635 = smul.addr %s634, 4
      %s636 = scalar_lea.vmem %s2, %s635
      // Predicated region
      $region29: #{text_decoder_forward.24} parent=27 // pred_check
        %p637 = pneg %p83
      $region30: #{text_decoder_forward.24} parent=27 // pred_check_branch
        %639 = sbr.rel (%p637) target = $region32
      $region31: #{text_decoder_forward.24} parent=27 // pred_region
        _
      $region32: #{text_decoder_forward.24} parent=27 // pred_fallthru
        _
    $region28: #{text_decoder_forward.24} parent=5 // pred_fallthru
      _
    %p640 = scmp.le.s32.totalorder 2, %s8
    // Predicated region
    $region33: #{text_decoder_forward.24} parent=5 // pred_check
      %p641 = pneg %p640
    $region34: #{text_decoder_forward.24} parent=5 // pred_check_branch
      %643 = sbr.rel (%p641) target = $region36
    $region35: #{text_decoder_forward.24} parent=5 // pred_region
      %s644 = ssub.s32 %s8, 2
      // Predicated region
      $region37: #{text_decoder_forward.24} parent=35 // pred_check
        %p645 = pneg %p89
      $region38: #{text_decoder_forward.24} parent=35 // pred_check_branch
        %647 = sbr.rel (%p645) target = $region40
      $region39: #{text_decoder_forward.24} parent=35 // pred_region
        %p648 = scmp.lt.s32.totalorder %s14, 1
        %s649 = scalar_select %p648, %s14, 1
        %s650 = smul.addr %s649, 4
        %s651 = scalar_lea.vmem %s2, %s650
      $region40: #{text_decoder_forward.24} parent=35 // pred_fallthru
        _
    $region36: #{text_decoder_forward.24} parent=5 // pred_fallthru
      _
  $region6: #{text_decoder_forward.24} parent=0 // loop_footer
    %s12 = sadd.s32 1, %s8
  $region7: #{text_decoder_forward.24} parent=0 // loop_footer_branch
    %7 = sbr.rel target = $region3
  $region8: #{text_decoder_forward.24} parent=0 // loop_exit
    _

// kernel: text_decoder_forward.27
$region0: #{text_decoder_forward.27}
  #allocation0 [shape = 'u32[]', space=smem, size = 0x4, offset = 0x4, fixed_abs, tag = 'smem constant byte address 0x4 - core index']
  #allocation1 [shape = 'u32[144,128]{1,0:T(1,128)}', space=vmem, size = 0x12000, scoped, tag = 'internal scratch']
  %s0 = inlined_call_operand.vmem [shape: bf16[16,128], index: 0, kind: input, shape index: {}]
  %s1 = inlined_call_operand.vmem [shape: bf16[128,32], index: 1, kind: input, shape index: {}]
  %s2 = inlined_call_operand.vmem [shape: f32[1,32], index: 2, kind: input, shape index: {}]
  %s3 = inlined_call_operand.vmem [shape: f32[16,32], index: 3, kind: input, shape index: {}]
  %s4 = inlined_call_operand.vmem [shape: f32[16,32], index: 4, kind: output, shape index: {}]
  %s5 = sld [smem:[#allocation0]]
  $region26: #{text_decoder_forward.27} parent=0
    _
  %s7 = ssub.s32 1, %s5
  %s8 = scalar_select 0, %s7, %s5
  // Predicated region
  $region2: #{text_decoder_forward.27} parent=0 // pred_check
    _
  $region3: #{text_decoder_forward.27} parent=0 // pred_check_branch
    %10 = sbr.rel (0) target = $region5
  $region4: #{text_decoder_forward.27} parent=0 // pred_region
    _
  $region5: #{text_decoder_forward.27} parent=0 // pred_fallthru
    _
  // Predicated region
  $region6: #{text_decoder_forward.27} parent=0 // pred_check
    _
  $region7: #{text_decoder_forward.27} parent=0 // pred_check_branch
    %12 = sbr.rel (0) target = $region9
  $region8: #{text_decoder_forward.27} parent=0 // pred_region
    _
  $region9: #{text_decoder_forward.27} parent=0 // pred_fallthru
    _
  // Predicated region
  $region10: #{text_decoder_forward.27} parent=0 // pred_check
    _
  $region11: #{text_decoder_forward.27} parent=0 // pred_check_branch
    %14 = sbr.rel (0) target = $region13
  $region12: #{text_decoder_forward.27} parent=0 // pred_region
    _
  $region13: #{text_decoder_forward.27} parent=0 // pred_fallthru
    _
  // Predicated region
  $region14: #{text_decoder_forward.27} parent=0 // pred_check
    _
  $region15: #{text_decoder_forward.27} parent=0 // pred_check_branch
    %16 = sbr.rel (0) target = $region17
  $region16: #{text_decoder_forward.27} parent=0 // pred_region
    _
  $region17: #{text_decoder_forward.27} parent=0 // pred_fallthru
    _
  %v18 = vld [vmem:[%s0] sm:$0xf]
  %v19 = vld [vmem:[%s0 + $0x4] sm:$0xf]
  %v20 = vld [vmem:[%s1] sm:$0xf]
  %v21 = vld [vmem:[%s1 + $0x4] sm:$0xf]
  %v22 = vld [vmem:[%s1 + $0x8] sm:$0xf]
  %v23 = vld [vmem:[%s1 + $0xc] sm:$0xf]
  %v24 = vld [vmem:[%s1 + $0x10] sm:$0xf]
  %v25 = vld [vmem:[%s1 + $0x14] sm:$0xf]
  %v26 = vld [vmem:[%s1 + $0x18] sm:$0xf]
  %v27 = vld [vmem:[%s1 + $0x1c] sm:$0xf]
  %v28 = vld [vmem:[%s1 + $0x20] sm:$0xf]
  %v29 = vld [vmem:[%s1 + $0x24] sm:$0xf]
  %v30 = vld [vmem:[%s1 + $0x28] sm:$0xf]
  %v31 = vld [vmem:[%s1 + $0x2c] sm:$0xf]
  %v32 = vld [vmem:[%s1 + $0x30] sm:$0xf]
  %v33 = vld [vmem:[%s1 + $0x34] sm:$0xf]
  %v34 = vld [vmem:[%s1 + $0x38] sm:$0xf]
  %v35 = vld [vmem:[%s1 + $0x3c] sm:$0xf]
  %v36 = vld [vmem:[%s2] sm:$0x1]
  %v38 = vlaneseq
  %v39 = vshrl.u32 %v38, 7
  %v40 = vsub.s32 0, %v39
  %v41 = vrot.slane %v36, %v40
  %v45 = vunpack.c.l.b16 %v18
  %v46 = vunpack.c.l.b16 %v19
  %v47 = vpack.c.b16 %v46, %v45
  %v65 = vunpack.c.l.b16 %v20
  %v66 = vunpack.c.l.b16 %v21
  %v67 = vunpack.c.l.b16 %v22
  %v68 = vunpack.c.l.b16 %v23
  %v69 = vunpack.c.l.b16 %v24
  %v70 = vunpack.c.l.b16 %v25
  %v71 = vunpack.c.l.b16 %v26
  %v72 = vunpack.c.l.b16 %v27
  %v73 = vunpack.c.l.b16 %v28
  %v74 = vunpack.c.l.b16 %v29
  %v75 = vunpack.c.l.b16 %v30
  %v76 = vunpack.c.l.b16 %v31
  %v77 = vunpack.c.l.b16 %v32
  %v78 = vunpack.c.l.b16 %v33
  %v79 = vunpack.c.l.b16 %v34
  %v80 = vunpack.c.l.b16 %v35
  %v81 = vpack.c.b16 %v66, %v65
  %v82 = vpack.c.b16 %v68, %v67
  %v83 = vpack.c.b16 %v70, %v69
  %v84 = vpack.c.b16 %v72, %v71
  %v85 = vpack.c.b16 %v74, %v73
  %v86 = vpack.c.b16 %v76, %v75
  %v87 = vpack.c.b16 %v78, %v77
  %v88 = vpack.c.b16 %v80, %v79
  %97 = vmatprep.subr.bf16.mxu0 0
  %98 = vmatpush1.bf16.msra.mxu0 %v88
  %99 = vmatprep.subr.bf16.mxu0 0
  %100 = vmatpush1.bf16.msra.mxu0 %v87
  %101 = vmatprep.subr.bf16.mxu0 0
  %102 = vmatpush1.bf16.msra.mxu0 %v86
  %103 = vmatprep.subr.bf16.mxu0 0
  %104 = vmatpush1.bf16.msra.mxu0 %v85
  %105 = vmatprep.subr.bf16.mxu0 0
  %106 = vmatpush1.bf16.msra.mxu0 %v84
  %107 = vmatprep.subr.bf16.mxu0 0
  %108 = vmatpush1.bf16.msra.mxu0 %v83
  %109 = vmatprep.subr.bf16.mxu0 0
  %110 = vmatpush1.bf16.msra.mxu0 %v82
  %111 = vmatprep.subr.bf16.mxu0 0
  %112 = vmatpush1.bf16.msra.mxu0 %v81
  %113 = vmatprep.subr.bf16.mxu0 0
  %114 = vmatpush2.bf16.msra.mxu0 0
  %115 = vmatprep.subr.bf16.mxu0 0
  %116 = vmatpush2.bf16.msra.mxu0 0
  %117 = vmatprep.subr.bf16.mxu0 0
  %118 = vmatpush2.bf16.msra.mxu0 0
  %119 = vmatprep.subr.bf16.mxu0 0
  %120 = vmatpush2.bf16.msra.mxu0 0
  %121 = vmatprep.subr.bf16.mxu0 0
  %122 = vmatpush2.bf16.msra.mxu0 0
  %123 = vmatprep.subr.bf16.mxu0 0
  %124 = vmatpush2.bf16.msra.mxu0 0
  %125 = vmatprep.subr.bf16.mxu0 0
  %126 = vmatpush2.bf16.msra.mxu0 0
  %127 = vmatprep.subr.bf16.mxu0 0
  %128 = vmatpush2.bf16.msra.mxu0 0
  %129 = vmatprep.mubr.bf16.mxu0 0
  %130 = vmatmul.mubr.bf16.gmra.mxu0 %v47
  %v131 = vpop.f32.mrf.mxu0
  %v132 = vadd.f32 %v41, %v131
  %v133 = vpop.f32.mrf.mxu0
  %v134 = vpop.f32.mrf.mxu0
  %v135 = vadd.f32 %v41, %v134
  %v136 = vpop.f32.mrf.mxu0
  %137 = vdwg.mxu0
  %v138 = vld [vmem:[%s3] sm:$0xff]
  %v139 = vld [vmem:[%s3 + $0x8] sm:$0xff]
  %v140 = vadd.f32 %v132, %v138
  %v141 = vadd.f32 %v135, %v139
  %vm142 = vcmask 261120
  %143 = vst.msk [vmem:[%s4] sm:$0xff] %vm142, %v140
  %144 = vst.msk [vmem:[%s4 + $0x8] sm:$0xff] %vm142, %v141
  // Predicated region
  $region18: #{text_decoder_forward.27} parent=0 // pred_check
    _
  $region19: #{text_decoder_forward.27} parent=0 // pred_check_branch
    %146 = sbr.rel (0) target = $region21
  $region20: #{text_decoder_forward.27} parent=0 // pred_region
    _
  $region21: #{text_decoder_forward.27} parent=0 // pred_fallthru
    _
  // Predicated region
  $region22: #{text_decoder_forward.27} parent=0 // pred_check
    _
  $region23: #{text_decoder_forward.27} parent=0 // pred_check_branch
    %148 = sbr.rel (0) target = $region25
  $region24: #{text_decoder_forward.27} parent=0 // pred_region
    _
  $region25: #{text_decoder_forward.27} parent=0 // pred_fallthru
    _

// kernel: text_decoder_forward.37
$region0: #{text_decoder_forward.37}
  #allocation0 [shape = 'u32[]', space=smem, size = 0x4, offset = 0x4, fixed_abs, tag = 'smem constant byte address 0x4 - core index']
  #allocation1 [shape = 'u32[144,128]{1,0:T(1,128)}', space=vmem, size = 0x12000, scoped, tag = 'internal scratch']
  #allocation2 [shape = 'bf16[16,32]{1,0:T(8,128)(2,1)}', space=vmem, size = 0x1000, scoped, tag = 'scratch operand']
  %s0 = inlined_call_operand.vmem [shape: f32[16,32], index: 0, kind: input, shape index: {}]
  %s1 = inlined_call_operand.vmem [shape: f32[1,32], index: 1, kind: input, shape index: {}]
  %s2 = inlined_call_operand.vmem [shape: f32[1,32], index: 2, kind: input, shape index: {}]
  %s3 = inlined_call_operand.vmem [shape: bf16[32,128], index: 3, kind: input, shape index: {}]
  %s4 = inlined_call_operand.vmem [shape: f32[16,128], index: 4, kind: output, shape index: {}]
  %s5 = sld [smem:[#allocation0]]
  $region30: #{text_decoder_forward.37} parent=0
    _
  %s7 = ssub.s32 1, %s5
  %s8 = scalar_select 0, %s7, %s5
  // Predicated region
  $region2: #{text_decoder_forward.37} parent=0 // pred_check
    _
  $region3: #{text_decoder_forward.37} parent=0 // pred_check_branch
    %10 = sbr.rel (0) target = $region5
  $region4: #{text_decoder_forward.37} parent=0 // pred_region
    _
  $region5: #{text_decoder_forward.37} parent=0 // pred_fallthru
    _
  // Predicated region
  $region6: #{text_decoder_forward.37} parent=0 // pred_check
    _
  $region7: #{text_decoder_forward.37} parent=0 // pred_check_branch
    %12 = sbr.rel (0) target = $region9
  $region8: #{text_decoder_forward.37} parent=0 // pred_region
    _
  $region9: #{text_decoder_forward.37} parent=0 // pred_fallthru
    _
  // Predicated region
  $region10: #{text_decoder_forward.37} parent=0 // pred_check
    _
  $region11: #{text_decoder_forward.37} parent=0 // pred_check_branch
    %14 = sbr.rel (0) target = $region13
  $region12: #{text_decoder_forward.37} parent=0 // pred_region
    _
  $region13: #{text_decoder_forward.37} parent=0 // pred_fallthru
    _
  // Predicated region
  $region14: #{text_decoder_forward.37} parent=0 // pred_check
    _
  $region15: #{text_decoder_forward.37} parent=0 // pred_check_branch
    %16 = sbr.rel (0) target = $region17
  $region16: #{text_decoder_forward.37} parent=0 // pred_region
    _
  $region17: #{text_decoder_forward.37} parent=0 // pred_fallthru
    _
  %p18 = scmp.eq.s32.totalorder 0, 0
  // Predicated region
  $region18: #{text_decoder_forward.37} parent=0 // pred_check
    %p19 = pneg %p18
  $region19: #{text_decoder_forward.37} parent=0 // pred_check_branch
    %21 = sbr.rel (%p19) target = $region21
  $region20: #{text_decoder_forward.37} parent=0 // pred_region
    %v22 = vld [vmem:[%s0] sm:$0xff]
    %v23 = vld [vmem:[%s0 + $0x8] sm:$0xff]
    %vm24 = vcmask 261120
    %v25 = vsel %vm24, %v22, 0.0
    %26 = vadd.xlane.f32.xlu0 %v25
    %v27 = vpop.xlane.xlu0 %26
    %v28 = vsel %vm24, %v23, 0.0
    %29 = vadd.xlane.f32.xlu0 %v28
    %v30 = vpop.xlane.xlu0 %29
    %v31 = vrcp.pop 32.0
    %v32 = vmul.f32 %v27, %v31
    %v33 = vmul.f32 %v30, %v31
    %v34 = vsub.f32 %v22, %v32
    %v35 = vsub.f32 %v23, %v33
    %v36 = vmul.f32 %v34, %v34
    %v37 = vmul.f32 %v35, %v35
    %v38 = vsel %vm24, %v36, 0.0
    %39 = vadd.xlane.f32.xlu0 %v38
    %v40 = vpop.xlane.xlu0 %39
    %v41 = vsel %vm24, %v37, 0.0
    %42 = vadd.xlane.f32.xlu0 %v41
    %v43 = vpop.xlane.xlu0 %42
    %v44 = vmul.f32 %v40, %v31
    %v45 = vmul.f32 %v43, %v31
    %v46 = vadd.f32 %v44, 1e-05
    %v47 = vadd.f32 %v45, 1e-05
    %v48 = vrsqrt.pop %v46
    %v49 = vrsqrt.pop %v47
    %v50 = vmul.f32 %v34, %v48
    %v51 = vmul.f32 %v35, %v49
    %v52 = vld [vmem:[%s1] sm:$0x1]
    %v54 = vlaneseq
    %v55 = vshrl.u32 %v54, 7
    %v56 = vsub.s32 0, %v55
    %v57 = vrot.slane %v52, %v56
    %v59 = vmul.f32 %v50, %v57
    %v60 = vmul.f32 %v51, %v57
    %v61 = vld [vmem:[%s2] sm:$0x1]
    %v63 = vlaneseq
    %v64 = vshrl.u32 %v63, 7
    %v65 = vsub.s32 0, %v64
    %v66 = vrot.slane %v61, %v65
    %v68 = vadd.f32 %v59, %v66
    %v69 = vadd.f32 %v60, %v66
    %v70 = vpack.c.bf16 %v69, %v68
    %v72 = vunpack.c.l.b16 %v70
    %v73 = vunpack.c.h.b16 %v70
    %v74 = vpack.c.b16 %v72, %v72
    %v75 = vpack.c.b16 %v73, %v73
    %vm78 = vcmask 257024
    %79 = vst.msk [vmem:[#allocation2] sm:$0xf] %vm78, %v74
    %80 = vst.msk [vmem:[#allocation2 + $0x4] sm:$0xf] %vm78, %v75
  $region21: #{text_decoder_forward.37} parent=0 // pred_fallthru
    _
  %v81 = vld [vmem:[#allocation2] sm:$0xf]
  %v82 = vld [vmem:[#allocation2 + $0x4] sm:$0xf]
  %v83 = vld [vmem:[%s3] sm:$0xf]
  %v84 = vld [vmem:[%s3 + $0x4] sm:$0xf]
  %v85 = vld [vmem:[%s3 + $0x8] sm:$0xf]
  %v86 = vld [vmem:[%s3 + $0xc] sm:$0xf]
  %v89 = vunpack.c.l.b16 %v81
  %v90 = vunpack.c.l.b16 %v82
  %v91 = vpack.c.b16 %v90, %v89
  %v96 = vunpack.c.l.b16 %v83
  %v97 = vunpack.c.l.b16 %v84
  %v98 = vunpack.c.l.b16 %v85
  %v99 = vunpack.c.l.b16 %v86
  %v100 = vpack.c.b16 %v97, %v96
  %v101 = vpack.c.b16 %v99, %v98
  %vm104 = vcmask 261120
  %v106 = vsel %vm104, %v91, 0
  %108 = vmatprep.subr.bf16.mxu0 0
  %109 = vmatpush1.bf16.msra.mxu0 0
  %110 = vmatprep.subr.bf16.mxu0 0
  %111 = vmatpush1.bf16.msra.mxu0 0
  %112 = vmatprep.subr.bf16.mxu0 0
  %113 = vmatpush1.bf16.msra.mxu0 0
  %114 = vmatprep.subr.bf16.mxu0 0
  %115 = vmatpush1.bf16.msra.mxu0 0
  %116 = vmatprep.subr.bf16.mxu0 0
  %117 = vmatpush1.bf16.msra.mxu0 0
  %118 = vmatprep.subr.bf16.mxu0 0
  %119 = vmatpush1.bf16.msra.mxu0 0
  %120 = vmatprep.subr.bf16.mxu0 0
  %121 = vmatpush1.bf16.msra.mxu0 %v101
  %122 = vmatprep.subr.bf16.mxu0 0
  %123 = vmatpush1.bf16.msra.mxu0 %v100
  %124 = vmatprep.subr.bf16.mxu0 0
  %125 = vmatpush2.bf16.msra.mxu0 0
  %126 = vmatprep.subr.bf16.mxu0 0
  %127 = vmatpush2.bf16.msra.mxu0 0
  %128 = vmatprep.subr.bf16.mxu0 0
  %129 = vmatpush2.bf16.msra.mxu0 0
  %130 = vmatprep.subr.bf16.mxu0 0
  %131 = vmatpush2.bf16.msra.mxu0 0
  %132 = vmatprep.subr.bf16.mxu0 0
  %133 = vmatpush2.bf16.msra.mxu0 0
  %134 = vmatprep.subr.bf16.mxu0 0
  %135 = vmatpush2.bf16.msra.mxu0 0
  %136 = vmatprep.subr.bf16.mxu0 0
  %137 = vmatpush2.bf16.msra.mxu0 0
  %138 = vmatprep.subr.bf16.mxu0 0
  %139 = vmatpush2.bf16.msra.mxu0 0
  %140 = vmatprep.mubr.bf16.mxu0 0
  %141 = vmatmul.mubr.bf16.gmra.mxu0 %v106
  %v142 = vpop.f32.mrf.mxu0
  %v143 = vadd.f32 0.0, %v142
  %v144 = vpop.f32.mrf.mxu0
  %v145 = vpop.f32.mrf.mxu0
  %v146 = vadd.f32 0.0, %v145
  %v147 = vpop.f32.mrf.mxu0
  %148 = vdwg.mxu0
  %149 = vst [vmem:[%s4] sm:$0xff] %v143
  %150 = vst [vmem:[%s4 + $0x8] sm:$0xff] %v146
  // Predicated region
  $region22: #{text_decoder_forward.37} parent=0 // pred_check
    _
  $region23: #{text_decoder_forward.37} parent=0 // pred_check_branch
    %152 = sbr.rel (0) target = $region25
  $region24: #{text_decoder_forward.37} parent=0 // pred_region
    _
  $region25: #{text_decoder_forward.37} parent=0 // pred_fallthru
    _
  // Predicated region
  $region26: #{text_decoder_forward.37} parent=0 // pred_check
    _
  $region27: #{text_decoder_forward.37} parent=0 // pred_check_branch
    %154 = sbr.rel (0) target = $region29
  $region28: #{text_decoder_forward.37} parent=0 // pred_region
    _
  $region29: #{text_decoder_forward.37} parent=0 // pred_fallthru
    _

</llo_original>
